<compile_context>
chip_gen: v7x
topology: tpu7x:2x2x1
jax: 0.10.0
libtpu: 0.0.40
codegen_flags: <defaults>
</compile_context>

<pallas_src>
import functools

import jax
import jax.numpy as jnp
from jax.experimental import pallas as pl
from jax.experimental.pallas import tpu as pltpu


def _round_up(x, m):
    return ((x + m - 1) // m) * m


def _pick_tile(dim, candidates=(512, 256, 128)):
    """Largest lane-aligned tile that divides `dim` (falls back to full dim)."""
    for c in candidates:
        if dim % c == 0:
            return c
    return dim


def _linear_act_kernel(x_ref, w_ref, b_ref, o_ref, acc_ref, *, apply_relu):
    # Zero the f32 accumulator on the first K step.
    @pl.when(pl.program_id(2) == 0)
    def _():
        acc_ref[...] = jnp.zeros_like(acc_ref)

    # MXU matmul, f32 accumulation regardless of input dtype.
    acc_ref[...] += jnp.dot(
        x_ref[...], w_ref[...], preferred_element_type=jnp.float32
    )

    # Finalize on the last K step: bias + ReLU, cast, store (lane-dense tile).
    @pl.when(pl.program_id(2) == pl.num_programs(2) - 1)
    def _():
        y = acc_ref[...] + b_ref[...].astype(jnp.float32)
        if apply_relu:
            y = jnp.maximum(y, 0.0)
        o_ref[...] = y.astype(o_ref.dtype)


def linear_act(x, w, b, *, apply_relu=True):
    """y = act(x @ w + b) with a tiled Pallas matmul kernel.

    x: (M, K), w: (K, N), b: (N,)
    """
    M, K = x.shape
    Kw, N = w.shape
    assert K == Kw and b.shape == (N,)

    tn = _pick_tile(N)
    tk = _pick_tile(K)
    # Row tile: big when the batch is big, otherwise pad to a sublane multiple.
    tm = 256 if M >= 256 else _round_up(M, 8)
    Mp = _round_up(M, tm)
    if Mp != M:
        x = jnp.pad(x, ((0, Mp - M), (0, 0)))

    b2 = b.reshape(1, N)

    kernel = functools.partial(_linear_act_kernel, apply_relu=apply_relu)

    out = pl.pallas_call(
        kernel,
        out_shape=jax.ShapeDtypeStruct((Mp, N), x.dtype),
        grid_spec=pltpu.PrefetchScalarGridSpec(
            num_scalar_prefetch=0,
            grid=(Mp // tm, N // tn, K // tk),  # reduction axis (K) last
            in_specs=[
                pl.BlockSpec((tm, tk), lambda i, j, k: (i, k)),   # x tile
                pl.BlockSpec((tk, tn), lambda i, j, k: (k, j)),   # w tile
                pl.BlockSpec((1, tn), lambda i, j, k: (0, j)),    # bias tile
            ],
            out_specs=pl.BlockSpec((tm, tn), lambda i, j, k: (i, j)),
            scratch_shapes=[pltpu.VMEM((tm, tn), jnp.float32)],
        ),
        compiler_params=pltpu.CompilerParams(
            dimension_semantics=("parallel", "parallel", "arbitrary"),
            vmem_limit_bytes=64 * 1024 * 1024,
        ),
    )(x, w, b2)

    return out[:M] if Mp != M else out


# --------------------------------------------------------------------------
# ImgDecoder: parameters + forward (matches the PyTorch module structure:
# ReLU after EVERY Linear, including the last one).
# --------------------------------------------------------------------------
def convert_dim(input_dim, hidden_dim, output_dim):
    return [input_dim] + list(hidden_dim) + [output_dim]


def init_img_decoder_params(key, input_dim=1024, hidden_dim=(1024, 512),
                            output_dim=4096, dtype=jnp.float32):
    # TODO(synk): PyTorch's kaiming-uniform init is not reproduced; forward
    # semantics are identical for any weight values.
    dims = convert_dim(input_dim, hidden_dim, output_dim)
    params = []
    for in_dim, out_dim in zip(dims[:-1], dims[1:]):
        key, kw, kb = jax.random.split(key, 3)
        w = (jax.random.normal(kw, (in_dim, out_dim), dtype=jnp.float32)
             / jnp.sqrt(float(in_dim))).astype(dtype)
        b = (0.01 * jax.random.normal(kb, (out_dim,), dtype=jnp.float32)).astype(dtype)
        params.append((w, b))
    return params


def img_decoder_forward(x, params):
    h = x
    for w, b in params:
        h = linear_act(h, w, b, apply_relu=True)
    return h


def img_decoder_ref(x, params):
    h = x
    for w, b in params:
        h = jnp.maximum(jnp.dot(h, w.astype(jnp.float32),
                                preferred_element_type=jnp.float32)
                        + b.astype(jnp.float32), 0.0)
    return h


if __name__ == "__main__":
    key = jax.random.PRNGKey(0)
    k_params, k_x = jax.random.split(key)

    # Module-defined dims: 1024 -> 1024 -> 512 -> 4096; small batch.
    batch, input_dim = 8, 1024
    params = init_img_decoder_params(k_params, input_dim=input_dim,
                                     hidden_dim=(1024, 512), output_dim=4096)
    x = jax.random.normal(k_x, (batch, input_dim), dtype=jnp.float32)

    fwd = jax.jit(lambda xx: img_decoder_forward(xx, params))
    y = jax.block_until_ready(fwd(x))

    # Pure-JAX reference check.
    y_ref = jax.block_until_ready(img_decoder_ref(x, params))
    assert y.shape == (batch, 4096), y.shape
    assert jnp.allclose(y, y_ref, rtol=2e-2, atol=2e-2), (
        float(jnp.max(jnp.abs(y - y_ref))))

    print("KERNEL_OK")
</pallas_src>

<mosaic_0001>
module attributes {stable_mosaic.version = 11 : i64} {
  func.func @_linear_act_kernel(%arg0: i32, %arg1: i32, %arg2: i32, %arg3: memref<8x512xf32, #tpu.memory_space<vmem>>, %arg4: memref<512x512xf32, #tpu.memory_space<vmem>>, %arg5: memref<1x512xf32, #tpu.memory_space<vmem>>, %arg6: memref<8x512xf32, #tpu.memory_space<vmem>>, %arg7: memref<8x512xf32, #tpu.memory_space<vmem>>) attributes {dimension_semantics = [#tpu.dimension_semantics<parallel>, #tpu.dimension_semantics<parallel>, #tpu.dimension_semantics<arbitrary>], iteration_bounds = array<i64: 1, 8, 1>, scalar_prefetch = 0 : i64, scratch_operands = 1 : i64, tpu.core_type = #tpu.core_type<tc>, window_params = [{transform_indices = @transform_0, window_bounds = array<i64: 8, 512>}, {transform_indices = @transform_1, window_bounds = array<i64: 512, 512>}, {transform_indices = @transform_2, window_bounds = array<i64: 1, 512>}, {transform_indices = @transform_3, window_bounds = array<i64: 8, 512>}]} {
    %c0_i32 = arith.constant 0 : i32
    %0 = arith.cmpi eq, %arg2, %c0_i32 : i32
    %1 = arith.extui %0 : i1 to i32
    %c0_i32_0 = arith.constant 0 : i32
    %2 = arith.cmpi ne, %1, %c0_i32_0 : i32
    scf.if %2 {
      %cst_10 = arith.constant 0.000000e+00 : f32
      %12 = vector.broadcast %cst_10 : f32 to vector<8x512xf32>
      %c0_11 = arith.constant 0 : index
      %c0_12 = arith.constant 0 : index
      %13 = vector.load %arg7[%c0_11, %c0_12] : memref<8x512xf32, #tpu.memory_space<vmem>>, vector<8x512xf32>
      tpu.vector_store %arg7[%c0_11, %c0_12], %12 {strides = array<i32>} : memref<8x512xf32, #tpu.memory_space<vmem>>, vector<8x512xf32>,
    } else {
    }
    %c0 = arith.constant 0 : index
    %c0_1 = arith.constant 0 : index
    %3 = vector.load %arg7[%c0, %c0_1] : memref<8x512xf32, #tpu.memory_space<vmem>>, vector<8x512xf32>
    %c0_2 = arith.constant 0 : index
    %c0_3 = arith.constant 0 : index
    %4 = vector.load %arg3[%c0_2, %c0_3] : memref<8x512xf32, #tpu.memory_space<vmem>>, vector<8x512xf32>
    %c0_4 = arith.constant 0 : index
    %c0_5 = arith.constant 0 : index
    %5 = vector.load %arg4[%c0_4, %c0_5] : memref<512x512xf32, #tpu.memory_space<vmem>>, vector<512x512xf32>
    %cst = arith.constant dense<0.000000e+00> : vector<8x512xf32>
    %6 = tpu.matmul %4, %5, %cst {dimension_numbers = #tpu.dot_dimension_numbers<[1], [0], [0], [1], [0, 0, 1, 1], [], []>} : vector<8x512xf32>, vector<512x512xf32>, vector<8x512xf32> -> vector<8x512xf32>
    %7 = arith.addf %3, %6 : vector<8x512xf32>
    %c0_6 = arith.constant 0 : index
    %c0_7 = arith.constant 0 : index
    %8 = vector.load %arg7[%c0_6, %c0_7] : memref<8x512xf32, #tpu.memory_space<vmem>>, vector<8x512xf32>
    tpu.vector_store %arg7[%c0_6, %c0_7], %7 {strides = array<i32>} : memref<8x512xf32, #tpu.memory_space<vmem>>, vector<8x512xf32>,
    %c0_i32_8 = arith.constant 0 : i32
    %9 = arith.cmpi eq, %arg2, %c0_i32_8 : i32
    %10 = arith.extui %9 : i1 to i32
    %c0_i32_9 = arith.constant 0 : i32
    %11 = arith.cmpi ne, %10, %c0_i32_9 : i32
    scf.if %11 {
      %c0_10 = arith.constant 0 : index
      %c0_11 = arith.constant 0 : index
      %12 = vector.load %arg7[%c0_10, %c0_11] : memref<8x512xf32, #tpu.memory_space<vmem>>, vector<8x512xf32>
      %c0_12 = arith.constant 0 : index
      %c0_13 = arith.constant 0 : index
      %13 = vector.load %arg5[%c0_12, %c0_13] : memref<1x512xf32, #tpu.memory_space<vmem>>, vector<1x512xf32>
      %14 = vector.broadcast %13 : vector<1x512xf32> to vector<8x512xf32>
      %15 = arith.addf %12, %14 : vector<8x512xf32>
      %cst_14 = arith.constant 0.000000e+00 : f32
      %16 = vector.broadcast %cst_14 : f32 to vector<8x512xf32>
      %17 = arith.maximumf %15, %16 : vector<8x512xf32>
      %c0_15 = arith.constant 0 : index
      %c0_16 = arith.constant 0 : index
      %18 = vector.load %arg6[%c0_15, %c0_16] : memref<8x512xf32, #tpu.memory_space<vmem>>, vector<8x512xf32>
      tpu.vector_store %arg6[%c0_15, %c0_16], %17 {strides = array<i32>} : memref<8x512xf32, #tpu.memory_space<vmem>>, vector<8x512xf32>,
    } else {
    }
    return
  }
  func.func @transform_0(%arg0: i32, %arg1: i32, %arg2: i32) -> (i32, i32) {
    %c0_i32 = arith.constant 0 : i32
    return %arg0, %arg2 : i32, i32
  }
  func.func @transform_1(%arg0: i32, %arg1: i32, %arg2: i32) -> (i32, i32) {
    %c0_i32 = arith.constant 0 : i32
    return %arg2, %arg1 : i32, i32
  }
  func.func @transform_2(%arg0: i32, %arg1: i32, %arg2: i32) -> (i32, i32) {
    %c0_i32 = arith.constant 0 : i32
    %c0_i32_0 = arith.constant 0 : i32
    return %c0_i32, %arg1 : i32, i32
  }
  func.func @transform_3(%arg0: i32, %arg1: i32, %arg2: i32) -> (i32, i32) {
    %c0_i32 = arith.constant 0 : i32
    return %arg0, %arg1 : i32, i32
  }
}

module attributes {stable_mosaic.version = 11 : i64} {
  func.func @_linear_act_kernel(%arg0: i32, %arg1: i32, %arg2: i32, %arg3: memref<8x512xf32, #tpu.memory_space<vmem>>, %arg4: memref<512x512xf32, #tpu.memory_space<vmem>>, %arg5: memref<1x512xf32, #tpu.memory_space<vmem>>, %arg6: memref<8x512xf32, #tpu.memory_space<vmem>>, %arg7: memref<8x512xf32, #tpu.memory_space<vmem>>) attributes {dimension_semantics = [#tpu.dimension_semantics<parallel>, #tpu.dimension_semantics<parallel>, #tpu.dimension_semantics<arbitrary>], iteration_bounds = array<i64: 1, 2, 2>, scalar_prefetch = 0 : i64, scratch_operands = 1 : i64, tpu.core_type = #tpu.core_type<tc>, window_params = [{transform_indices = @transform_0, window_bounds = array<i64: 8, 512>}, {transform_indices = @transform_1, window_bounds = array<i64: 512, 512>}, {transform_indices = @transform_2, window_bounds = array<i64: 1, 512>}, {transform_indices = @transform_3, window_bounds = array<i64: 8, 512>}]} {
    %c0_i32 = arith.constant 0 : i32
    %0 = arith.cmpi eq, %arg2, %c0_i32 : i32
    %1 = arith.extui %0 : i1 to i32
    %c0_i32_0 = arith.constant 0 : i32
    %2 = arith.cmpi ne, %1, %c0_i32_0 : i32
    scf.if %2 {
      %cst_9 = arith.constant 0.000000e+00 : f32
      %12 = vector.broadcast %cst_9 : f32 to vector<8x512xf32>
      %c0_10 = arith.constant 0 : index
      %c0_11 = arith.constant 0 : index
      %13 = vector.load %arg7[%c0_10, %c0_11] : memref<8x512xf32, #tpu.memory_space<vmem>>, vector<8x512xf32>
      tpu.vector_store %arg7[%c0_10, %c0_11], %12 {strides = array<i32>} : memref<8x512xf32, #tpu.memory_space<vmem>>, vector<8x512xf32>,
    } else {
    }
    %c0 = arith.constant 0 : index
    %c0_1 = arith.constant 0 : index
    %3 = vector.load %arg7[%c0, %c0_1] : memref<8x512xf32, #tpu.memory_space<vmem>>, vector<8x512xf32>
    %c0_2 = arith.constant 0 : index
    %c0_3 = arith.constant 0 : index
    %4 = vector.load %arg3[%c0_2, %c0_3] : memref<8x512xf32, #tpu.memory_space<vmem>>, vector<8x512xf32>
    %c0_4 = arith.constant 0 : index
    %c0_5 = arith.constant 0 : index
    %5 = vector.load %arg4[%c0_4, %c0_5] : memref<512x512xf32, #tpu.memory_space<vmem>>, vector<512x512xf32>
    %cst = arith.constant dense<0.000000e+00> : vector<8x512xf32>
    %6 = tpu.matmul %4, %5, %cst {dimension_numbers = #tpu.dot_dimension_numbers<[1], [0], [0], [1], [0, 0, 1, 1], [], []>} : vector<8x512xf32>, vector<512x512xf32>, vector<8x512xf32> -> vector<8x512xf32>
    %7 = arith.addf %3, %6 : vector<8x512xf32>
    %c0_6 = arith.constant 0 : index
    %c0_7 = arith.constant 0 : index
    %8 = vector.load %arg7[%c0_6, %c0_7] : memref<8x512xf32, #tpu.memory_space<vmem>>, vector<8x512xf32>
    tpu.vector_store %arg7[%c0_6, %c0_7], %7 {strides = array<i32>} : memref<8x512xf32, #tpu.memory_space<vmem>>, vector<8x512xf32>,
    %c1_i32 = arith.constant 1 : i32
    %9 = arith.cmpi eq, %arg2, %c1_i32 : i32
    %10 = arith.extui %9 : i1 to i32
    %c0_i32_8 = arith.constant 0 : i32
    %11 = arith.cmpi ne, %10, %c0_i32_8 : i32
    scf.if %11 {
      %c0_9 = arith.constant 0 : index
      %c0_10 = arith.constant 0 : index
      %12 = vector.load %arg7[%c0_9, %c0_10] : memref<8x512xf32, #tpu.memory_space<vmem>>, vector<8x512xf32>
      %c0_11 = arith.constant 0 : index
      %c0_12 = arith.constant 0 : index
      %13 = vector.load %arg5[%c0_11, %c0_12] : memref<1x512xf32, #tpu.memory_space<vmem>>, vector<1x512xf32>
      %14 = vector.broadcast %13 : vector<1x512xf32> to vector<8x512xf32>
      %15 = arith.addf %12, %14 : vector<8x512xf32>
      %cst_13 = arith.constant 0.000000e+00 : f32
      %16 = vector.broadcast %cst_13 : f32 to vector<8x512xf32>
      %17 = arith.maximumf %15, %16 : vector<8x512xf32>
      %c0_14 = arith.constant 0 : index
      %c0_15 = arith.constant 0 : index
      %18 = vector.load %arg6[%c0_14, %c0_15] : memref<8x512xf32, #tpu.memory_space<vmem>>, vector<8x512xf32>
      tpu.vector_store %arg6[%c0_14, %c0_15], %17 {strides = array<i32>} : memref<8x512xf32, #tpu.memory_space<vmem>>, vector<8x512xf32>,
    } else {
    }
    return
  }
  func.func @transform_0(%arg0: i32, %arg1: i32, %arg2: i32) -> (i32, i32) {
    %c0_i32 = arith.constant 0 : i32
    return %arg0, %arg2 : i32, i32
  }
  func.func @transform_1(%arg0: i32, %arg1: i32, %arg2: i32) -> (i32, i32) {
    %c0_i32 = arith.constant 0 : i32
    return %arg2, %arg1 : i32, i32
  }
  func.func @transform_2(%arg0: i32, %arg1: i32, %arg2: i32) -> (i32, i32) {
    %c0_i32 = arith.constant 0 : i32
    %c0_i32_0 = arith.constant 0 : i32
    return %c0_i32, %arg1 : i32, i32
  }
  func.func @transform_3(%arg0: i32, %arg1: i32, %arg2: i32) -> (i32, i32) {
    %c0_i32 = arith.constant 0 : i32
    return %arg0, %arg1 : i32, i32
  }
}

module attributes {stable_mosaic.version = 11 : i64} {
  func.func @_linear_act_kernel(%arg0: i32, %arg1: i32, %arg2: i32, %arg3: memref<8x512xf32, #tpu.memory_space<vmem>>, %arg4: memref<512x512xf32, #tpu.memory_space<vmem>>, %arg5: memref<1x512xf32, #tpu.memory_space<vmem>>, %arg6: memref<8x512xf32, #tpu.memory_space<vmem>>, %arg7: memref<8x512xf32, #tpu.memory_space<vmem>>) attributes {dimension_semantics = [#tpu.dimension_semantics<parallel>, #tpu.dimension_semantics<parallel>, #tpu.dimension_semantics<arbitrary>], iteration_bounds = array<i64: 1, 1, 2>, scalar_prefetch = 0 : i64, scratch_operands = 1 : i64, tpu.core_type = #tpu.core_type<tc>, window_params = [{transform_indices = @transform_0, window_bounds = array<i64: 8, 512>}, {transform_indices = @transform_1, window_bounds = array<i64: 512, 512>}, {transform_indices = @transform_2, window_bounds = array<i64: 1, 512>}, {transform_indices = @transform_3, window_bounds = array<i64: 8, 512>}]} {
    %c0_i32 = arith.constant 0 : i32
    %0 = arith.cmpi eq, %arg2, %c0_i32 : i32
    %1 = arith.extui %0 : i1 to i32
    %c0_i32_0 = arith.constant 0 : i32
    %2 = arith.cmpi ne, %1, %c0_i32_0 : i32
    scf.if %2 {
      %cst_9 = arith.constant 0.000000e+00 : f32
      %12 = vector.broadcast %cst_9 : f32 to vector<8x512xf32>
      %c0_10 = arith.constant 0 : index
      %c0_11 = arith.constant 0 : index
      %13 = vector.load %arg7[%c0_10, %c0_11] : memref<8x512xf32, #tpu.memory_space<vmem>>, vector<8x512xf32>
      tpu.vector_store %arg7[%c0_10, %c0_11], %12 {strides = array<i32>} : memref<8x512xf32, #tpu.memory_space<vmem>>, vector<8x512xf32>,
    } else {
    }
    %c0 = arith.constant 0 : index
    %c0_1 = arith.constant 0 : index
    %3 = vector.load %arg7[%c0, %c0_1] : memref<8x512xf32, #tpu.memory_space<vmem>>, vector<8x512xf32>
    %c0_2 = arith.constant 0 : index
    %c0_3 = arith.constant 0 : index
    %4 = vector.load %arg3[%c0_2, %c0_3] : memref<8x512xf32, #tpu.memory_space<vmem>>, vector<8x512xf32>
    %c0_4 = arith.constant 0 : index
    %c0_5 = arith.constant 0 : index
    %5 = vector.load %arg4[%c0_4, %c0_5] : memref<512x512xf32, #tpu.memory_space<vmem>>, vector<512x512xf32>
    %cst = arith.constant dense<0.000000e+00> : vector<8x512xf32>
    %6 = tpu.matmul %4, %5, %cst {dimension_numbers = #tpu.dot_dimension_numbers<[1], [0], [0], [1], [0, 0, 1, 1], [], []>} : vector<8x512xf32>, vector<512x512xf32>, vector<8x512xf32> -> vector<8x512xf32>
    %7 = arith.addf %3, %6 : vector<8x512xf32>
    %c0_6 = arith.constant 0 : index
    %c0_7 = arith.constant 0 : index
    %8 = vector.load %arg7[%c0_6, %c0_7] : memref<8x512xf32, #tpu.memory_space<vmem>>, vector<8x512xf32>
    tpu.vector_store %arg7[%c0_6, %c0_7], %7 {strides = array<i32>} : memref<8x512xf32, #tpu.memory_space<vmem>>, vector<8x512xf32>,
    %c1_i32 = arith.constant 1 : i32
    %9 = arith.cmpi eq, %arg2, %c1_i32 : i32
    %10 = arith.extui %9 : i1 to i32
    %c0_i32_8 = arith.constant 0 : i32
    %11 = arith.cmpi ne, %10, %c0_i32_8 : i32
    scf.if %11 {
      %c0_9 = arith.constant 0 : index
      %c0_10 = arith.constant 0 : index
      %12 = vector.load %arg7[%c0_9, %c0_10] : memref<8x512xf32, #tpu.memory_space<vmem>>, vector<8x512xf32>
      %c0_11 = arith.constant 0 : index
      %c0_12 = arith.constant 0 : index
      %13 = vector.load %arg5[%c0_11, %c0_12] : memref<1x512xf32, #tpu.memory_space<vmem>>, vector<1x512xf32>
      %14 = vector.broadcast %13 : vector<1x512xf32> to vector<8x512xf32>
      %15 = arith.addf %12, %14 : vector<8x512xf32>
      %cst_13 = arith.constant 0.000000e+00 : f32
      %16 = vector.broadcast %cst_13 : f32 to vector<8x512xf32>
      %17 = arith.maximumf %15, %16 : vector<8x512xf32>
      %c0_14 = arith.constant 0 : index
      %c0_15 = arith.constant 0 : index
      %18 = vector.load %arg6[%c0_14, %c0_15] : memref<8x512xf32, #tpu.memory_space<vmem>>, vector<8x512xf32>
      tpu.vector_store %arg6[%c0_14, %c0_15], %17 {strides = array<i32>} : memref<8x512xf32, #tpu.memory_space<vmem>>, vector<8x512xf32>,
    } else {
    }
    return
  }
  func.func @transform_0(%arg0: i32, %arg1: i32, %arg2: i32) -> (i32, i32) {
    %c0_i32 = arith.constant 0 : i32
    return %arg0, %arg2 : i32, i32
  }
  func.func @transform_1(%arg0: i32, %arg1: i32, %arg2: i32) -> (i32, i32) {
    %c0_i32 = arith.constant 0 : i32
    return %arg2, %arg1 : i32, i32
  }
  func.func @transform_2(%arg0: i32, %arg1: i32, %arg2: i32) -> (i32, i32) {
    %c0_i32 = arith.constant 0 : i32
    %c0_i32_0 = arith.constant 0 : i32
    return %c0_i32, %arg1 : i32, i32
  }
  func.func @transform_3(%arg0: i32, %arg1: i32, %arg2: i32) -> (i32, i32) {
    %c0_i32 = arith.constant 0 : i32
    return %arg0, %arg1 : i32, i32
  }
}

</mosaic_0001>

<llo_original>
// kernel: _lambda_.3
$region0: #{_lambda_.3}
  #allocation0 [shape = 'u32[]', space=smem, size = 0x4, offset = 0x4, fixed_abs, tag = 'smem constant byte address 0x4 - core index']
  #allocation1 [shape = 'u32[144,128]{1,0:T(1,128)}', space=vmem, size = 0x12000, scoped, tag = 'internal scratch']
  #allocation2 [shape = 'f32[8,512]{1,0:T(8,128)}', space=vmem, size = 0x4000, scoped, tag = 'scratch operand']
  %s0 = inlined_call_operand.hbm [shape: f32[8,1024], index: 0, kind: input, shape index: {}]
  %s1 = inlined_call_operand.hbm [shape: f32[1024,1024], index: 1, kind: input, shape index: {}]
  %s2 = inlined_call_operand.hbm [shape: f32[1,1024], index: 2, kind: input, shape index: {}]
  %s3 = inlined_call_operand.hbm [shape: f32[8,1024], index: 3, kind: output, shape index: {}]
  %s4 = sld [smem:[#allocation0]]
  $region65: #{_lambda_.3} parent=0
    _
  %s6 = ssub.s32 1, %s4
  %s7 = scalar_select 0, %s6, %s4
  $region1: #{_lambda_.3} parent=0
    #allocation3 [shape = 'u8[32768]{0}', space=vmem, size = 0x8000, scoped, tag = 'input window, operand 0']
    #allocation4 [shape = 's32[2]{0}', space=sflag, size = 0x8, scoped, tag = 'scoped memory for _lambda_.3']
    #allocation5 [shape = 's32[2]{0}', space=sflag, size = 0x8, scoped, tag = 'scoped memory for _lambda_.3']
    #allocation6 [shape = 'u8[2097152]{0}', space=vmem, size = 0x200000, scoped, tag = 'input window, operand 1']
    #allocation7 [shape = 's32[2]{0}', space=sflag, size = 0x8, scoped, tag = 'scoped memory for _lambda_.3']
    #allocation8 [shape = 'u8[4096]{0}', space=vmem, size = 0x1000, scoped, tag = 'input window, operand 2']
    #allocation9 [shape = 'u8[32768]{0}', space=vmem, size = 0x8000, scoped, tag = 'output window, operand 0']
    %8 = vsyncpa [#allocation4], 0
    %s9 = scalar_lea.sflag [#allocation4], 1
    %10 = vsyncpa %s9, 0
    %11 = vsyncpa [#allocation7], 0
    %s12 = scalar_lea.sflag [#allocation7], 1
    %13 = vsyncpa %s12, 0
    %14 = vsyncpa [#allocation5], 0
    %s15 = scalar_lea.sflag [#allocation5], 1
    %16 = vsyncpa %s15, 0
    loop: start=0, step=1, limit=6
    $region2: #{_lambda_.3} parent=1 // loop_pre_header
      _
    $region3: #{_lambda_.3} parent=1 // loop_header
      %s18 = sphi 0, %s22
      %p19 = scmp.ge.s32.totalorder %s18, 6
      %s25 = sphi 0, %s44
      %s26 = sphi 0, %s40
      %s27 = sphi 0, %s36
      %s28 = sphi 0, %s25
      %s29 = sphi 0, %s26
      %s30 = sphi 0, %s27
      %s31 = sphi 0, %s28
      %s32 = sphi 0, %s29
      %s33 = sphi 0, %s30
      %s49 = sphi 0, %s51
      %s52 = sphi 0, %s49
      %s53 = sphi 0, %s52
      %s69 = sphi 0, %s53
      %s77 = sphi 0, %s79
      %s80 = sphi 0, %s77
      %s81 = sphi 0, %s80
      %s97 = sphi 0, %s81
      %s103 = sphi 0, %s105
      %s106 = sphi 0, %s103
      %s107 = sphi 0, %s106
      %s123 = sphi 0, %s107
      %s131 = sphi 0, %s133
      %s134 = sphi 0, %s131
      %s135 = sphi 0, %s134
      %s151 = sphi 0, %s135
    $region4: #{_lambda_.3} parent=1 // loop_header_branch
      %21 = sbr.rel (%p19) target = $region8
    $region5: #{_lambda_.3} parent=1 // loop_body
      %s23 = ssub.s32 %s18, 1
      %s24 = ssub.s32 %s18, 2
      %s34 = sadd.s32 1, %s27
      %p35 = scmp.ge.s32.totalorder %s34, 2
      %s36 = scalar_select %p35, 0, %s34
      %s37 = sadd.s32 1, %s26
      %s38 = scalar_select %p35, %s37, %s26
      %p39 = scmp.ge.s32.totalorder %s38, 2
      %s40 = scalar_select %p39, 0, %s38
      %s41 = sadd.s32 1, %s25
      %s42 = scalar_select %p39, %s41, %s25
      %p43 = scmp.ge.s32.totalorder %s42, 1
      %s44 = scalar_select %p43, 0, %s42
      %s45 = ssub.s32 %s25, %s44
      %s46 = ssub.s32 %s27, %s36
      %s47 = sor.u32 %s45, %s46
      %p48 = scmp.eq.s32.totalorder %s47, 0
      %s50 = sadd.s32 %s49, 1
      %s51 = scalar_select %p48, %s49, %s50
      %p54 = pneg %p48
      %p55 = scmp.eq.s32.totalorder %s18, 3
      %p56 = por %p54, %p55
      %p57 = scmp.ne.s32.totalorder %s49, %s52
      %p58 = scmp.eq.s32.totalorder %s18, 0
      %p59 = por %p57, %p58
      %p60 = scmp.ne.s32.totalorder %s49, %s52
      %p61 = scmp.eq.s32.totalorder %s23, 3
      %p62 = por %p60, %p61
      %p63 = scmp.ne.s32.totalorder %s52, %s53
      %p64 = scmp.eq.s32.totalorder %s23, 0
      %p65 = por %p63, %p64
      %p66 = scmp.ne.s32.totalorder %s52, %s53
      %p67 = scmp.eq.s32.totalorder %s24, 3
      %p68 = por %p66, %p67
      %p70 = scmp.ne.s32.totalorder %s53, %s69
      %p71 = scmp.eq.s32.totalorder %s24, 0
      %p72 = por %p70, %p71
      %s73 = ssub.s32 %s27, %s36
      %s74 = ssub.s32 %s26, %s40
      %s75 = sor.u32 %s73, %s74
      %p76 = scmp.eq.s32.totalorder %s75, 0
      %s78 = sadd.s32 %s77, 1
      %s79 = scalar_select %p76, %s77, %s78
      %p82 = pneg %p76
      %p83 = scmp.eq.s32.totalorder %s18, 3
      %p84 = por %p82, %p83
      %p85 = scmp.ne.s32.totalorder %s77, %s80
      %p86 = scmp.eq.s32.totalorder %s18, 0
      %p87 = por %p85, %p86
      %p88 = scmp.ne.s32.totalorder %s77, %s80
      %p89 = scmp.eq.s32.totalorder %s23, 3
      %p90 = por %p88, %p89
      %p91 = scmp.ne.s32.totalorder %s80, %s81
      %p92 = scmp.eq.s32.totalorder %s23, 0
      %p93 = por %p91, %p92
      %p94 = scmp.ne.s32.totalorder %s80, %s81
      %p95 = scmp.eq.s32.totalorder %s24, 3
      %p96 = por %p94, %p95
      %p98 = scmp.ne.s32.totalorder %s81, %s97
      %p99 = scmp.eq.s32.totalorder %s24, 0
      %p100 = por %p98, %p99
      %s101 = ssub.s32 %s26, %s40
      %p102 = scmp.eq.s32.totalorder %s101, 0
      %s104 = sadd.s32 %s103, 1
      %s105 = scalar_select %p102, %s103, %s104
      %p108 = pneg %p102
      %p109 = scmp.eq.s32.totalorder %s18, 3
      %p110 = por %p108, %p109
      %p111 = scmp.ne.s32.totalorder %s103, %s106
      %p112 = scmp.eq.s32.totalorder %s18, 0
      %p113 = por %p111, %p112
      %p114 = scmp.ne.s32.totalorder %s103, %s106
      %p115 = scmp.eq.s32.totalorder %s23, 3
      %p116 = por %p114, %p115
      %p117 = scmp.ne.s32.totalorder %s106, %s107
      %p118 = scmp.eq.s32.totalorder %s23, 0
      %p119 = por %p117, %p118
      %p120 = scmp.ne.s32.totalorder %s106, %s107
      %p121 = scmp.eq.s32.totalorder %s24, 3
      %p122 = por %p120, %p121
      %p124 = scmp.ne.s32.totalorder %s107, %s123
      %p125 = scmp.eq.s32.totalorder %s24, 0
      %p126 = por %p124, %p125
      %s127 = ssub.s32 %s25, %s44
      %s128 = ssub.s32 %s26, %s40
      %s129 = sor.u32 %s127, %s128
      %p130 = scmp.eq.s32.totalorder %s129, 0
      %s132 = sadd.s32 %s131, 1
      %s133 = scalar_select %p130, %s131, %s132
      %p136 = pneg %p130
      %p137 = scmp.eq.s32.totalorder %s18, 3
      %p138 = por %p136, %p137
      %p139 = scmp.ne.s32.totalorder %s131, %s134
      %p140 = scmp.eq.s32.totalorder %s18, 0
      %p141 = por %p139, %p140
      %p142 = scmp.ne.s32.totalorder %s131, %s134
      %p143 = scmp.eq.s32.totalorder %s23, 3
      %p144 = por %p142, %p143
      %p145 = scmp.ne.s32.totalorder %s134, %s135
      %p146 = scmp.eq.s32.totalorder %s23, 0
      %p147 = por %p145, %p146
      %p148 = scmp.ne.s32.totalorder %s134, %s135
      %p149 = scmp.eq.s32.totalorder %s24, 3
      %p150 = por %p148, %p149
      %p152 = scmp.ne.s32.totalorder %s135, %s151
      %p153 = scmp.eq.s32.totalorder %s24, 0
      %p154 = por %p152, %p153
      %p155 = scmp.le.s32.totalorder 1, %s18
      %p156 = scmp.lt.s32.totalorder %s18, 5
      %p157 = pnand %p155, %p156
      %p158 = pneg %p157
      // Predicated region
      $region9: #{_lambda_.3} parent=5 // pred_check
        _
      $region10: #{_lambda_.3} parent=5 // pred_check_branch
        %160 = sbr.rel (%p157) target = $region12
      $region11: #{_lambda_.3} parent=5 // pred_region
        %s161 = ssub.s32 %s18, 1
      $region12: #{_lambda_.3} parent=5 // pred_fallthru
        _
      %p162 = scmp.lt.s32.totalorder %s18, 4
      // Predicated region
      $region13: #{_lambda_.3} parent=5 // pred_check
        %p163 = pneg %p162
      $region14: #{_lambda_.3} parent=5 // pred_check_branch
        %165 = sbr.rel (%p163) target = $region16
      $region15: #{_lambda_.3} parent=5 // pred_region
        // Predicated region
        $region17: #{_lambda_.3} parent=15 // pred_check
          %p166 = pneg %p59
        $region18: #{_lambda_.3} parent=15 // pred_check_branch
          %168 = sbr.rel (%p166) target = $region20
        $region19: #{_lambda_.3} parent=15 // pred_region
          %s169 = sand.u32 %s49, 1
          %s170 = scalar_lea.sflag [#allocation4], %s169
          %s171 = sand.u32 %s49, 1
          %s172 = smul.addr %s171, 32
          %s173 = scalar_lea.vmem [#allocation3], %s172
          %s174 = smul.u32 4, %s27
          %s176 = ssub.s32 512, 512
          %177 = vsyncadd %s170, %s176
          %s178 = smul.addr %s25, 8
          %s179 = sadd.s32 %s174, %s178
          %s180 = smul.addr %s179, 128
          %s181 = scalar_lea.hbm %s0, %s180
          %s183 = sshll.u32 %s173, 4
          %s184 = int_to_ptr.vmem [resolvable:$true] %s183
          %186 = dma.hbm_to_vmem [thread:$0]  %s181, 512, %s184, %s170
        $region20: #{_lambda_.3} parent=15 // pred_fallthru
          _
        // Predicated region
        $region21: #{_lambda_.3} parent=15 // pred_check
          %p187 = pneg %p87
        $region22: #{_lambda_.3} parent=15 // pred_check_branch
          %189 = sbr.rel (%p187) target = $region24
        $region23: #{_lambda_.3} parent=15 // pred_region
          %s190 = sand.u32 %s18, 1
          %s191 = scalar_lea.sflag [#allocation7], %s190
          %s192 = sand.u32 %s77, 1
          %s193 = smul.addr %s192, 2048
          %s194 = scalar_lea.vmem [#allocation6], %s193
          %s195 = smul.u32 64, %s27
          %s196 = smul.u32 4, %s26
          %s198 = ssub.s32 32768, 32768
          %199 = vsyncadd %s191, %s198
          %s200 = smul.addr %s195, 8
          %s201 = sadd.s32 %s196, %s200
          %s202 = smul.addr %s201, 128
          %s203 = scalar_lea.hbm %s1, %s202
          %s204 = sshll.u32 %s194, 4
          %s205 = int_to_ptr.vmem [resolvable:$true] %s204
          %210 = dma.hbm_to_vmem [thread:$0]  %s203, 32768, %s205, %s191, 1024, 512, 32
        $region24: #{_lambda_.3} parent=15 // pred_fallthru
          _
        // Predicated region
        $region25: #{_lambda_.3} parent=15 // pred_check
          %p211 = pneg %p113
        $region26: #{_lambda_.3} parent=15 // pred_check_branch
          %213 = sbr.rel (%p211) target = $region28
        $region27: #{_lambda_.3} parent=15 // pred_region
          %s214 = sand.u32 %s18, 1
          %s215 = scalar_lea.sflag [#allocation7], %s214
          %s216 = sand.u32 %s103, 1
          %s217 = smul.addr %s216, 4
          %s218 = scalar_lea.vmem [#allocation8], %s217
          %s219 = smul.u32 4, %s26
          %s221 = ssub.s32 64, 64
          %222 = vsyncadd %s215, %s221
          %s223 = smul.addr %s219, 16
          %s224 = scalar_lea.hbm %s2, %s223
          %s226 = sshll.u32 %s218, 4
          %s227 = int_to_ptr.vmem [resolvable:$true] %s226
          %229 = dma.hbm_to_vmem [thread:$0]  %s224, 64, %s227, %s215
        $region28: #{_lambda_.3} parent=15 // pred_fallthru
          _
      $region16: #{_lambda_.3} parent=5 // pred_fallthru
        _
      %p230 = scmp.le.s32.totalorder 1, %s18
      %p231 = scmp.lt.s32.totalorder %s18, 5
      %p232 = pnand %p230, %p231
      %p233 = pneg %p232
      // Predicated region
      $region29: #{_lambda_.3} parent=5 // pred_check
        _
      $region30: #{_lambda_.3} parent=5 // pred_check_branch
        %235 = sbr.rel (%p232) target = $region32
      $region31: #{_lambda_.3} parent=5 // pred_region
        %s236 = ssub.s32 %s18, 1
        %s237 = sand.u32 %s52, 1
        %s238 = scalar_lea.sflag [#allocation4], %s237
        %s239 = sand.u32 %s52, 1
        %s240 = smul.addr %s239, 32
        %s241 = scalar_lea.vmem [#allocation3], %s240
        // Predicated region
        $region33: #{_lambda_.3} parent=31 // pred_check
          %p242 = pneg %p65
        $region34: #{_lambda_.3} parent=31 // pred_check_branch
          %244 = sbr.rel (%p242) target = $region36
        $region35: #{_lambda_.3} parent=31 // pred_region
          %245 = dma.done %s238, 512
        $region36: #{_lambda_.3} parent=31 // pred_fallthru
          _
        %s246 = sand.u32 %s23, 1
        %s247 = scalar_lea.sflag [#allocation7], %s246
        %s248 = sand.u32 %s80, 1
        %s249 = smul.addr %s248, 2048
        %s250 = scalar_lea.vmem [#allocation6], %s249
        // Predicated region
        $region37: #{_lambda_.3} parent=31 // pred_check
          %p251 = pneg %p93
        $region38: #{_lambda_.3} parent=31 // pred_check_branch
          %253 = sbr.rel (%p251) target = $region40
        $region39: #{_lambda_.3} parent=31 // pred_region
          %254 = dma.done %s247, 32768
        $region40: #{_lambda_.3} parent=31 // pred_fallthru
          _
        %s255 = sand.u32 %s23, 1
        %s256 = scalar_lea.sflag [#allocation7], %s255
        %s257 = sand.u32 %s106, 1
        %s258 = smul.addr %s257, 4
        %s259 = scalar_lea.vmem [#allocation8], %s258
        // Predicated region
        $region41: #{_lambda_.3} parent=31 // pred_check
          %p260 = pneg %p119
        $region42: #{_lambda_.3} parent=31 // pred_check_branch
          %262 = sbr.rel (%p260) target = $region44
        $region43: #{_lambda_.3} parent=31 // pred_region
          %263 = dma.done %s256, 64
        $region44: #{_lambda_.3} parent=31 // pred_fallthru
          _
        %s264 = sand.u32 %s52, 1
        %s265 = scalar_lea.sflag [#allocation4], %s264
        %s266 = sand.u32 %s52, 1
        %s267 = smul.addr %s266, 32
        %s268 = scalar_lea.vmem [#allocation3], %s267
        %p269 = pneg %p65
        %p270 = pneg %p62
        %s271 = sand.u32 %s23, 1
        %s272 = scalar_lea.sflag [#allocation7], %s271
        %s273 = sand.u32 %s80, 1
        %s274 = smul.addr %s273, 2048
        %s275 = scalar_lea.vmem [#allocation6], %s274
        %p276 = pneg %p93
        %p277 = pneg %p90
        %s278 = sand.u32 %s23, 1
        %s279 = scalar_lea.sflag [#allocation7], %s278
        %s280 = sand.u32 %s106, 1
        %s281 = smul.addr %s280, 4
        %s282 = scalar_lea.vmem [#allocation8], %s281
        %p283 = pneg %p119
        %p284 = pneg %p116
        %p285 = pneg %p147
        %p286 = pneg %p144
        %s287 = sand.u32 %s134, 1
        %s288 = scalar_lea.sflag [#allocation5], %s287
        %s289 = sand.u32 %s134, 1
        %s290 = smul.addr %s289, 32
        %s291 = scalar_lea.vmem [#allocation9], %s290
        %s292 = smul.u32 4, %s30
        %s293 = smul.u32 64, %s30
        %s294 = smul.u32 4, %s29
        %s295 = smul.u32 4, %s29
        %s296 = smul.u32 4, %s29
        %p297 = scmp.eq.s32.totalorder %s30, 0
        // Predicated region
        $region45: #{_lambda_.3} parent=31 // pred_check
          %p298 = pneg %p297
        $region46: #{_lambda_.3} parent=31 // pred_check_branch
          %300 = sbr.rel (%p298) target = $region48
        $region47: #{_lambda_.3} parent=31 // pred_region
          %301 = vst [vmem:[#allocation2] sm:$0xff] 0.0
          %302 = vst [vmem:[#allocation2 + $0x8] sm:$0xff] 0.0
          %303 = vst [vmem:[#allocation2 + $0x10] sm:$0xff] 0.0
          %304 = vst [vmem:[#allocation2 + $0x18] sm:$0xff] 0.0
        $region48: #{_lambda_.3} parent=31 // pred_fallthru
          _
        %v305 = vld [vmem:[#allocation2] sm:$0xff]
        %v306 = vld [vmem:[#allocation2 + $0x8] sm:$0xff]
        %v307 = vld [vmem:[#allocation2 + $0x10] sm:$0xff]
        %v308 = vld [vmem:[#allocation2 + $0x18] sm:$0xff]
        %v309 = vld [vmem:[%s241] sm:$0xff]
        %v310 = vld [vmem:[%s241 + $0x8] sm:$0xff]
        %v311 = vld [vmem:[%s241 + $0x10] sm:$0xff]
        %v312 = vld [vmem:[%s241 + $0x18] sm:$0xff]
        %v313 = vld [vmem:[%s250] sm:$0xff]
        %v314 = vld [vmem:[%s250 + $0x8] sm:$0xff]
        %v315 = vld [vmem:[%s250 + $0x10] sm:$0xff]
        %v316 = vld [vmem:[%s250 + $0x18] sm:$0xff]
        %v317 = vld [vmem:[%s250 + $0x20] sm:$0xff]
        %v318 = vld [vmem:[%s250 + $0x28] sm:$0xff]
        %v319 = vld [vmem:[%s250 + $0x30] sm:$0xff]
        %v320 = vld [vmem:[%s250 + $0x38] sm:$0xff]
        %v321 = vld [vmem:[%s250 + $0x40] sm:$0xff]
        %v322 = vld [vmem:[%s250 + $0x48] sm:$0xff]
        %v323 = vld [vmem:[%s250 + $0x50] sm:$0xff]
        %v324 = vld [vmem:[%s250 + $0x58] sm:$0xff]
        %v325 = vld [vmem:[%s250 + $0x60] sm:$0xff]
        %v326 = vld [vmem:[%s250 + $0x68] sm:$0xff]
        %v327 = vld [vmem:[%s250 + $0x70] sm:$0xff]
        %v328 = vld [vmem:[%s250 + $0x78] sm:$0xff]
        %v329 = vld [vmem:[%s250 + $0x80] sm:$0xff]
        %v330 = vld [vmem:[%s250 + $0x88] sm:$0xff]
        %v331 = vld [vmem:[%s250 + $0x90] sm:$0xff]
        %v332 = vld [vmem:[%s250 + $0x98] sm:$0xff]
        %v333 = vld [vmem:[%s250 + $0xa0] sm:$0xff]
        %v334 = vld [vmem:[%s250 + $0xa8] sm:$0xff]
        %v335 = vld [vmem:[%s250 + $0xb0] sm:$0xff]
        %v336 = vld [vmem:[%s250 + $0xb8] sm:$0xff]
        %v337 = vld [vmem:[%s250 + $0xc0] sm:$0xff]
        %v338 = vld [vmem:[%s250 + $0xc8] sm:$0xff]
        %v339 = vld [vmem:[%s250 + $0xd0] sm:$0xff]
        %v340 = vld [vmem:[%s250 + $0xd8] sm:$0xff]
        %v341 = vld [vmem:[%s250 + $0xe0] sm:$0xff]
        %v342 = vld [vmem:[%s250 + $0xe8] sm:$0xff]
        %v343 = vld [vmem:[%s250 + $0xf0] sm:$0xff]
        %v344 = vld [vmem:[%s250 + $0xf8] sm:$0xff]
        %v345 = vld [vmem:[%s250 + $0x100] sm:$0xff]
        %v346 = vld [vmem:[%s250 + $0x108] sm:$0xff]
        %v347 = vld [vmem:[%s250 + $0x110] sm:$0xff]
        %v348 = vld [vmem:[%s250 + $0x118] sm:$0xff]
        %v349 = vld [vmem:[%s250 + $0x120] sm:$0xff]
        %v350 = vld [vmem:[%s250 + $0x128] sm:$0xff]
        %v351 = vld [vmem:[%s250 + $0x130] sm:$0xff]
        %v352 = vld [vmem:[%s250 + $0x138] sm:$0xff]
        %v353 = vld [vmem:[%s250 + $0x140] sm:$0xff]
        %v354 = vld [vmem:[%s250 + $0x148] sm:$0xff]
        %v355 = vld [vmem:[%s250 + $0x150] sm:$0xff]
        %v356 = vld [vmem:[%s250 + $0x158] sm:$0xff]
        %v357 = vld [vmem:[%s250 + $0x160] sm:$0xff]
        %v358 = vld [vmem:[%s250 + $0x168] sm:$0xff]
        %v359 = vld [vmem:[%s250 + $0x170] sm:$0xff]
        %v360 = vld [vmem:[%s250 + $0x178] sm:$0xff]
        %v361 = vld [vmem:[%s250 + $0x180] sm:$0xff]
        %v362 = vld [vmem:[%s250 + $0x188] sm:$0xff]
        %v363 = vld [vmem:[%s250 + $0x190] sm:$0xff]
        %v364 = vld [vmem:[%s250 + $0x198] sm:$0xff]
        %v365 = vld [vmem:[%s250 + $0x1a0] sm:$0xff]
        %v366 = vld [vmem:[%s250 + $0x1a8] sm:$0xff]
        %v367 = vld [vmem:[%s250 + $0x1b0] sm:$0xff]
        %v368 = vld [vmem:[%s250 + $0x1b8] sm:$0xff]
        %v369 = vld [vmem:[%s250 + $0x1c0] sm:$0xff]
        %v370 = vld [vmem:[%s250 + $0x1c8] sm:$0xff]
        %v371 = vld [vmem:[%s250 + $0x1d0] sm:$0xff]
        %v372 = vld [vmem:[%s250 + $0x1d8] sm:$0xff]
        %v373 = vld [vmem:[%s250 + $0x1e0] sm:$0xff]
        %v374 = vld [vmem:[%s250 + $0x1e8] sm:$0xff]
        %v375 = vld [vmem:[%s250 + $0x1f0] sm:$0xff]
        %v376 = vld [vmem:[%s250 + $0x1f8] sm:$0xff]
        %v377 = vld [vmem:[%s250 + $0x200] sm:$0xff]
        %v378 = vld [vmem:[%s250 + $0x208] sm:$0xff]
        %v379 = vld [vmem:[%s250 + $0x210] sm:$0xff]
        %v380 = vld [vmem:[%s250 + $0x218] sm:$0xff]
        %v381 = vld [vmem:[%s250 + $0x220] sm:$0xff]
        %v382 = vld [vmem:[%s250 + $0x228] sm:$0xff]
        %v383 = vld [vmem:[%s250 + $0x230] sm:$0xff]
        %v384 = vld [vmem:[%s250 + $0x238] sm:$0xff]
        %v385 = vld [vmem:[%s250 + $0x240] sm:$0xff]
        %v386 = vld [vmem:[%s250 + $0x248] sm:$0xff]
        %v387 = vld [vmem:[%s250 + $0x250] sm:$0xff]
        %v388 = vld [vmem:[%s250 + $0x258] sm:$0xff]
        %v389 = vld [vmem:[%s250 + $0x260] sm:$0xff]
        %v390 = vld [vmem:[%s250 + $0x268] sm:$0xff]
        %v391 = vld [vmem:[%s250 + $0x270] sm:$0xff]
        %v392 = vld [vmem:[%s250 + $0x278] sm:$0xff]
        %v393 = vld [vmem:[%s250 + $0x280] sm:$0xff]
        %v394 = vld [vmem:[%s250 + $0x288] sm:$0xff]
        %v395 = vld [vmem:[%s250 + $0x290] sm:$0xff]
        %v396 = vld [vmem:[%s250 + $0x298] sm:$0xff]
        %v397 = vld [vmem:[%s250 + $0x2a0] sm:$0xff]
        %v398 = vld [vmem:[%s250 + $0x2a8] sm:$0xff]
        %v399 = vld [vmem:[%s250 + $0x2b0] sm:$0xff]
        %v400 = vld [vmem:[%s250 + $0x2b8] sm:$0xff]
        %v401 = vld [vmem:[%s250 + $0x2c0] sm:$0xff]
        %v402 = vld [vmem:[%s250 + $0x2c8] sm:$0xff]
        %v403 = vld [vmem:[%s250 + $0x2d0] sm:$0xff]
        %v404 = vld [vmem:[%s250 + $0x2d8] sm:$0xff]
        %v405 = vld [vmem:[%s250 + $0x2e0] sm:$0xff]
        %v406 = vld [vmem:[%s250 + $0x2e8] sm:$0xff]
        %v407 = vld [vmem:[%s250 + $0x2f0] sm:$0xff]
        %v408 = vld [vmem:[%s250 + $0x2f8] sm:$0xff]
        %v409 = vld [vmem:[%s250 + $0x300] sm:$0xff]
        %v410 = vld [vmem:[%s250 + $0x308] sm:$0xff]
        %v411 = vld [vmem:[%s250 + $0x310] sm:$0xff]
        %v412 = vld [vmem:[%s250 + $0x318] sm:$0xff]
        %v413 = vld [vmem:[%s250 + $0x320] sm:$0xff]
        %v414 = vld [vmem:[%s250 + $0x328] sm:$0xff]
        %v415 = vld [vmem:[%s250 + $0x330] sm:$0xff]
        %v416 = vld [vmem:[%s250 + $0x338] sm:$0xff]
        %v417 = vld [vmem:[%s250 + $0x340] sm:$0xff]
        %v418 = vld [vmem:[%s250 + $0x348] sm:$0xff]
        %v419 = vld [vmem:[%s250 + $0x350] sm:$0xff]
        %v420 = vld [vmem:[%s250 + $0x358] sm:$0xff]
        %v421 = vld [vmem:[%s250 + $0x360] sm:$0xff]
        %v422 = vld [vmem:[%s250 + $0x368] sm:$0xff]
        %v423 = vld [vmem:[%s250 + $0x370] sm:$0xff]
        %v424 = vld [vmem:[%s250 + $0x378] sm:$0xff]
        %v425 = vld [vmem:[%s250 + $0x380] sm:$0xff]
        %v426 = vld [vmem:[%s250 + $0x388] sm:$0xff]
        %v427 = vld [vmem:[%s250 + $0x390] sm:$0xff]
        %v428 = vld [vmem:[%s250 + $0x398] sm:$0xff]
        %v429 = vld [vmem:[%s250 + $0x3a0] sm:$0xff]
        %v430 = vld [vmem:[%s250 + $0x3a8] sm:$0xff]
        %v431 = vld [vmem:[%s250 + $0x3b0] sm:$0xff]
        %v432 = vld [vmem:[%s250 + $0x3b8] sm:$0xff]
        %v433 = vld [vmem:[%s250 + $0x3c0] sm:$0xff]
        %v434 = vld [vmem:[%s250 + $0x3c8] sm:$0xff]
        %v435 = vld [vmem:[%s250 + $0x3d0] sm:$0xff]
        %v436 = vld [vmem:[%s250 + $0x3d8] sm:$0xff]
        %v437 = vld [vmem:[%s250 + $0x3e0] sm:$0xff]
        %v438 = vld [vmem:[%s250 + $0x3e8] sm:$0xff]
        %v439 = vld [vmem:[%s250 + $0x3f0] sm:$0xff]
        %v440 = vld [vmem:[%s250 + $0x3f8] sm:$0xff]
        %v441 = vld [vmem:[%s250 + $0x400] sm:$0xff]
        %v442 = vld [vmem:[%s250 + $0x408] sm:$0xff]
        %v443 = vld [vmem:[%s250 + $0x410] sm:$0xff]
        %v444 = vld [vmem:[%s250 + $0x418] sm:$0xff]
        %v445 = vld [vmem:[%s250 + $0x420] sm:$0xff]
        %v446 = vld [vmem:[%s250 + $0x428] sm:$0xff]
        %v447 = vld [vmem:[%s250 + $0x430] sm:$0xff]
        %v448 = vld [vmem:[%s250 + $0x438] sm:$0xff]
        %v449 = vld [vmem:[%s250 + $0x440] sm:$0xff]
        %v450 = vld [vmem:[%s250 + $0x448] sm:$0xff]
        %v451 = vld [vmem:[%s250 + $0x450] sm:$0xff]
        %v452 = vld [vmem:[%s250 + $0x458] sm:$0xff]
        %v453 = vld [vmem:[%s250 + $0x460] sm:$0xff]
        %v454 = vld [vmem:[%s250 + $0x468] sm:$0xff]
        %v455 = vld [vmem:[%s250 + $0x470] sm:$0xff]
        %v456 = vld [vmem:[%s250 + $0x478] sm:$0xff]
        %v457 = vld [vmem:[%s250 + $0x480] sm:$0xff]
        %v458 = vld [vmem:[%s250 + $0x488] sm:$0xff]
        %v459 = vld [vmem:[%s250 + $0x490] sm:$0xff]
        %v460 = vld [vmem:[%s250 + $0x498] sm:$0xff]
        %v461 = vld [vmem:[%s250 + $0x4a0] sm:$0xff]
        %v462 = vld [vmem:[%s250 + $0x4a8] sm:$0xff]
        %v463 = vld [vmem:[%s250 + $0x4b0] sm:$0xff]
        %v464 = vld [vmem:[%s250 + $0x4b8] sm:$0xff]
        %v465 = vld [vmem:[%s250 + $0x4c0] sm:$0xff]
        %v466 = vld [vmem:[%s250 + $0x4c8] sm:$0xff]
        %v467 = vld [vmem:[%s250 + $0x4d0] sm:$0xff]
        %v468 = vld [vmem:[%s250 + $0x4d8] sm:$0xff]
        %v469 = vld [vmem:[%s250 + $0x4e0] sm:$0xff]
        %v470 = vld [vmem:[%s250 + $0x4e8] sm:$0xff]
        %v471 = vld [vmem:[%s250 + $0x4f0] sm:$0xff]
        %v472 = vld [vmem:[%s250 + $0x4f8] sm:$0xff]
        %v473 = vld [vmem:[%s250 + $0x500] sm:$0xff]
        %v474 = vld [vmem:[%s250 + $0x508] sm:$0xff]
        %v475 = vld [vmem:[%s250 + $0x510] sm:$0xff]
        %v476 = vld [vmem:[%s250 + $0x518] sm:$0xff]
        %v477 = vld [vmem:[%s250 + $0x520] sm:$0xff]
        %v478 = vld [vmem:[%s250 + $0x528] sm:$0xff]
        %v479 = vld [vmem:[%s250 + $0x530] sm:$0xff]
        %v480 = vld [vmem:[%s250 + $0x538] sm:$0xff]
        %v481 = vld [vmem:[%s250 + $0x540] sm:$0xff]
        %v482 = vld [vmem:[%s250 + $0x548] sm:$0xff]
        %v483 = vld [vmem:[%s250 + $0x550] sm:$0xff]
        %v484 = vld [vmem:[%s250 + $0x558] sm:$0xff]
        %v485 = vld [vmem:[%s250 + $0x560] sm:$0xff]
        %v486 = vld [vmem:[%s250 + $0x568] sm:$0xff]
        %v487 = vld [vmem:[%s250 + $0x570] sm:$0xff]
        %v488 = vld [vmem:[%s250 + $0x578] sm:$0xff]
        %v489 = vld [vmem:[%s250 + $0x580] sm:$0xff]
        %v490 = vld [vmem:[%s250 + $0x588] sm:$0xff]
        %v491 = vld [vmem:[%s250 + $0x590] sm:$0xff]
        %v492 = vld [vmem:[%s250 + $0x598] sm:$0xff]
        %v493 = vld [vmem:[%s250 + $0x5a0] sm:$0xff]
        %v494 = vld [vmem:[%s250 + $0x5a8] sm:$0xff]
        %v495 = vld [vmem:[%s250 + $0x5b0] sm:$0xff]
        %v496 = vld [vmem:[%s250 + $0x5b8] sm:$0xff]
        %v497 = vld [vmem:[%s250 + $0x5c0] sm:$0xff]
        %v498 = vld [vmem:[%s250 + $0x5c8] sm:$0xff]
        %v499 = vld [vmem:[%s250 + $0x5d0] sm:$0xff]
        %v500 = vld [vmem:[%s250 + $0x5d8] sm:$0xff]
        %v501 = vld [vmem:[%s250 + $0x5e0] sm:$0xff]
        %v502 = vld [vmem:[%s250 + $0x5e8] sm:$0xff]
        %v503 = vld [vmem:[%s250 + $0x5f0] sm:$0xff]
        %v504 = vld [vmem:[%s250 + $0x5f8] sm:$0xff]
        %v505 = vld [vmem:[%s250 + $0x600] sm:$0xff]
        %v506 = vld [vmem:[%s250 + $0x608] sm:$0xff]
        %v507 = vld [vmem:[%s250 + $0x610] sm:$0xff]
        %v508 = vld [vmem:[%s250 + $0x618] sm:$0xff]
        %v509 = vld [vmem:[%s250 + $0x620] sm:$0xff]
        %v510 = vld [vmem:[%s250 + $0x628] sm:$0xff]
        %v511 = vld [vmem:[%s250 + $0x630] sm:$0xff]
        %v512 = vld [vmem:[%s250 + $0x638] sm:$0xff]
        %v513 = vld [vmem:[%s250 + $0x640] sm:$0xff]
        %v514 = vld [vmem:[%s250 + $0x648] sm:$0xff]
        %v515 = vld [vmem:[%s250 + $0x650] sm:$0xff]
        %v516 = vld [vmem:[%s250 + $0x658] sm:$0xff]
        %v517 = vld [vmem:[%s250 + $0x660] sm:$0xff]
        %v518 = vld [vmem:[%s250 + $0x668] sm:$0xff]
        %v519 = vld [vmem:[%s250 + $0x670] sm:$0xff]
        %v520 = vld [vmem:[%s250 + $0x678] sm:$0xff]
        %v521 = vld [vmem:[%s250 + $0x680] sm:$0xff]
        %v522 = vld [vmem:[%s250 + $0x688] sm:$0xff]
        %v523 = vld [vmem:[%s250 + $0x690] sm:$0xff]
        %v524 = vld [vmem:[%s250 + $0x698] sm:$0xff]
        %v525 = vld [vmem:[%s250 + $0x6a0] sm:$0xff]
        %v526 = vld [vmem:[%s250 + $0x6a8] sm:$0xff]
        %v527 = vld [vmem:[%s250 + $0x6b0] sm:$0xff]
        %v528 = vld [vmem:[%s250 + $0x6b8] sm:$0xff]
        %v529 = vld [vmem:[%s250 + $0x6c0] sm:$0xff]
        %v530 = vld [vmem:[%s250 + $0x6c8] sm:$0xff]
        %v531 = vld [vmem:[%s250 + $0x6d0] sm:$0xff]
        %v532 = vld [vmem:[%s250 + $0x6d8] sm:$0xff]
        %v533 = vld [vmem:[%s250 + $0x6e0] sm:$0xff]
        %v534 = vld [vmem:[%s250 + $0x6e8] sm:$0xff]
        %v535 = vld [vmem:[%s250 + $0x6f0] sm:$0xff]
        %v536 = vld [vmem:[%s250 + $0x6f8] sm:$0xff]
        %v537 = vld [vmem:[%s250 + $0x700] sm:$0xff]
        %v538 = vld [vmem:[%s250 + $0x708] sm:$0xff]
        %v539 = vld [vmem:[%s250 + $0x710] sm:$0xff]
        %v540 = vld [vmem:[%s250 + $0x718] sm:$0xff]
        %v541 = vld [vmem:[%s250 + $0x720] sm:$0xff]
        %v542 = vld [vmem:[%s250 + $0x728] sm:$0xff]
        %v543 = vld [vmem:[%s250 + $0x730] sm:$0xff]
        %v544 = vld [vmem:[%s250 + $0x738] sm:$0xff]
        %v545 = vld [vmem:[%s250 + $0x740] sm:$0xff]
        %v546 = vld [vmem:[%s250 + $0x748] sm:$0xff]
        %v547 = vld [vmem:[%s250 + $0x750] sm:$0xff]
        %v548 = vld [vmem:[%s250 + $0x758] sm:$0xff]
        %v549 = vld [vmem:[%s250 + $0x760] sm:$0xff]
        %v550 = vld [vmem:[%s250 + $0x768] sm:$0xff]
        %v551 = vld [vmem:[%s250 + $0x770] sm:$0xff]
        %v552 = vld [vmem:[%s250 + $0x778] sm:$0xff]
        %v553 = vld [vmem:[%s250 + $0x780] sm:$0xff]
        %v554 = vld [vmem:[%s250 + $0x788] sm:$0xff]
        %v555 = vld [vmem:[%s250 + $0x790] sm:$0xff]
        %v556 = vld [vmem:[%s250 + $0x798] sm:$0xff]
        %v557 = vld [vmem:[%s250 + $0x7a0] sm:$0xff]
        %v558 = vld [vmem:[%s250 + $0x7a8] sm:$0xff]
        %v559 = vld [vmem:[%s250 + $0x7b0] sm:$0xff]
        %v560 = vld [vmem:[%s250 + $0x7b8] sm:$0xff]
        %v561 = vld [vmem:[%s250 + $0x7c0] sm:$0xff]
        %v562 = vld [vmem:[%s250 + $0x7c8] sm:$0xff]
        %v563 = vld [vmem:[%s250 + $0x7d0] sm:$0xff]
        %v564 = vld [vmem:[%s250 + $0x7d8] sm:$0xff]
        %v565 = vld [vmem:[%s250 + $0x7e0] sm:$0xff]
        %v566 = vld [vmem:[%s250 + $0x7e8] sm:$0xff]
        %v567 = vld [vmem:[%s250 + $0x7f0] sm:$0xff]
        %v568 = vld [vmem:[%s250 + $0x7f8] sm:$0xff]
        %569 = vmatprep.subr.mxu0 %v314
        %570 = vmatpush1.msra.mxu0 %v313
        %571 = vmatprep.subr.mxu0 %v318
        %572 = vmatpush1.msra.mxu0 %v317
        %573 = vmatprep.subr.mxu0 %v322
        %574 = vmatpush1.msra.mxu0 %v321
        %575 = vmatprep.subr.mxu0 %v326
        %576 = vmatpush1.msra.mxu0 %v325
        %577 = vmatprep.subr.mxu0 %v330
        %578 = vmatpush1.msra.mxu0 %v329
        %579 = vmatprep.subr.mxu0 %v334
        %580 = vmatpush1.msra.mxu0 %v333
        %581 = vmatprep.subr.mxu0 %v338
        %582 = vmatpush1.msra.mxu0 %v337
        %583 = vmatprep.subr.mxu0 %v342
        %584 = vmatpush1.msra.mxu0 %v341
        %585 = vmatprep.subr.mxu0 %v346
        %586 = vmatpush1.msra.mxu0 %v345
        %587 = vmatprep.subr.mxu0 %v350
        %588 = vmatpush1.msra.mxu0 %v349
        %589 = vmatprep.subr.mxu0 %v354
        %590 = vmatpush1.msra.mxu0 %v353
        %591 = vmatprep.subr.mxu0 %v358
        %592 = vmatpush1.msra.mxu0 %v357
        %593 = vmatprep.subr.mxu0 %v362
        %594 = vmatpush1.msra.mxu0 %v361
        %595 = vmatprep.subr.mxu0 %v366
        %596 = vmatpush1.msra.mxu0 %v365
        %597 = vmatprep.subr.mxu0 %v370
        %598 = vmatpush1.msra.mxu0 %v369
        %599 = vmatprep.subr.mxu0 %v374
        %600 = vmatpush1.msra.mxu0 %v373
        %601 = vmatprep.subr.mxu0 %v378
        %602 = vmatpush1.msra.mxu0 %v377
        %603 = vmatprep.subr.mxu0 %v382
        %604 = vmatpush1.msra.mxu0 %v381
        %605 = vmatprep.subr.mxu0 %v386
        %606 = vmatpush1.msra.mxu0 %v385
        %607 = vmatprep.subr.mxu0 %v390
        %608 = vmatpush1.msra.mxu0 %v389
        %609 = vmatprep.subr.mxu0 %v394
        %610 = vmatpush1.msra.mxu0 %v393
        %611 = vmatprep.subr.mxu0 %v398
        %612 = vmatpush1.msra.mxu0 %v397
        %613 = vmatprep.subr.mxu0 %v402
        %614 = vmatpush1.msra.mxu0 %v401
        %615 = vmatprep.subr.mxu0 %v406
        %616 = vmatpush1.msra.mxu0 %v405
        %617 = vmatprep.subr.mxu0 %v410
        %618 = vmatpush1.msra.mxu0 %v409
        %619 = vmatprep.subr.mxu0 %v414
        %620 = vmatpush1.msra.mxu0 %v413
        %621 = vmatprep.subr.mxu0 %v418
        %622 = vmatpush1.msra.mxu0 %v417
        %623 = vmatprep.subr.mxu0 %v422
        %624 = vmatpush1.msra.mxu0 %v421
        %625 = vmatprep.subr.mxu0 %v426
        %626 = vmatpush1.msra.mxu0 %v425
        %627 = vmatprep.subr.mxu0 %v430
        %628 = vmatpush1.msra.mxu0 %v429
        %629 = vmatprep.subr.mxu0 %v434
        %630 = vmatpush1.msra.mxu0 %v433
        %631 = vmatprep.subr.mxu0 %v438
        %632 = vmatpush1.msra.mxu0 %v437
        %633 = vmatprep.mubr.f32.mxu0 %v310
        %634 = vmatmul.mubr.f32.gmra.mrb[0].mxu0 %v309
        %v635 = vpop.f32.mrb[0].mxu0
        %v636 = vadd.f32 0.0, %v635
        %v637 = vpop.f32.mrb[0].mxu0
        %v638 = vadd.f32 0.0, %v637
        %639 = vdwg.mxu0
        %640 = vmatprep.subr.mxu0 %v442
        %641 = vmatpush1.msra.mxu0 %v441
        %642 = vmatprep.subr.mxu0 %v446
        %643 = vmatpush1.msra.mxu0 %v445
        %644 = vmatprep.subr.mxu0 %v450
        %645 = vmatpush1.msra.mxu0 %v449
        %646 = vmatprep.subr.mxu0 %v454
        %647 = vmatpush1.msra.mxu0 %v453
        %648 = vmatprep.subr.mxu0 %v458
        %649 = vmatpush1.msra.mxu0 %v457
        %650 = vmatprep.subr.mxu0 %v462
        %651 = vmatpush1.msra.mxu0 %v461
        %652 = vmatprep.subr.mxu0 %v466
        %653 = vmatpush1.msra.mxu0 %v465
        %654 = vmatprep.subr.mxu0 %v470
        %655 = vmatpush1.msra.mxu0 %v469
        %656 = vmatprep.subr.mxu0 %v474
        %657 = vmatpush1.msra.mxu0 %v473
        %658 = vmatprep.subr.mxu0 %v478
        %659 = vmatpush1.msra.mxu0 %v477
        %660 = vmatprep.subr.mxu0 %v482
        %661 = vmatpush1.msra.mxu0 %v481
        %662 = vmatprep.subr.mxu0 %v486
        %663 = vmatpush1.msra.mxu0 %v485
        %664 = vmatprep.subr.mxu0 %v490
        %665 = vmatpush1.msra.mxu0 %v489
        %666 = vmatprep.subr.mxu0 %v494
        %667 = vmatpush1.msra.mxu0 %v493
        %668 = vmatprep.subr.mxu0 %v498
        %669 = vmatpush1.msra.mxu0 %v497
        %670 = vmatprep.subr.mxu0 %v502
        %671 = vmatpush1.msra.mxu0 %v501
        %672 = vmatprep.subr.mxu0 %v506
        %673 = vmatpush1.msra.mxu0 %v505
        %674 = vmatprep.subr.mxu0 %v510
        %675 = vmatpush1.msra.mxu0 %v509
        %676 = vmatprep.subr.mxu0 %v514
        %677 = vmatpush1.msra.mxu0 %v513
        %678 = vmatprep.subr.mxu0 %v518
        %679 = vmatpush1.msra.mxu0 %v517
        %680 = vmatprep.subr.mxu0 %v522
        %681 = vmatpush1.msra.mxu0 %v521
        %682 = vmatprep.subr.mxu0 %v526
        %683 = vmatpush1.msra.mxu0 %v525
        %684 = vmatprep.subr.mxu0 %v530
        %685 = vmatpush1.msra.mxu0 %v529
        %686 = vmatprep.subr.mxu0 %v534
        %687 = vmatpush1.msra.mxu0 %v533
        %688 = vmatprep.subr.mxu0 %v538
        %689 = vmatpush1.msra.mxu0 %v537
        %690 = vmatprep.subr.mxu0 %v542
        %691 = vmatpush1.msra.mxu0 %v541
        %692 = vmatprep.subr.mxu0 %v546
        %693 = vmatpush1.msra.mxu0 %v545
        %694 = vmatprep.subr.mxu0 %v550
        %695 = vmatpush1.msra.mxu0 %v549
        %696 = vmatprep.subr.mxu0 %v554
        %697 = vmatpush1.msra.mxu0 %v553
        %698 = vmatprep.subr.mxu0 %v558
        %699 = vmatpush1.msra.mxu0 %v557
        %700 = vmatprep.subr.mxu0 %v562
        %701 = vmatpush1.msra.mxu0 %v561
        %702 = vmatprep.subr.mxu0 %v566
        %703 = vmatpush1.msra.mxu0 %v565
        %704 = vmatprep.mubr.f32.mxu0 %v312
        %705 = vmatmul.mubr.f32.gmra.mrb[0].mxu0 %v311
        %v706 = vpop.f32.mrb[0].mxu0
        %v707 = vadd.f32 %v636, %v706
        %v708 = vpop.f32.mrb[0].mxu0
        %v709 = vadd.f32 %v638, %v708
        %710 = vdwg.mxu0
        %711 = vmatprep.subr.mxu0 %v316
        %712 = vmatpush1.msra.mxu0 %v315
        %713 = vmatprep.subr.mxu0 %v320
        %714 = vmatpush1.msra.mxu0 %v319
        %715 = vmatprep.subr.mxu0 %v324
        %716 = vmatpush1.msra.mxu0 %v323
        %717 = vmatprep.subr.mxu0 %v328
        %718 = vmatpush1.msra.mxu0 %v327
        %719 = vmatprep.subr.mxu0 %v332
        %720 = vmatpush1.msra.mxu0 %v331
        %721 = vmatprep.subr.mxu0 %v336
        %722 = vmatpush1.msra.mxu0 %v335
        %723 = vmatprep.subr.mxu0 %v340
        %724 = vmatpush1.msra.mxu0 %v339
        %725 = vmatprep.subr.mxu0 %v344
        %726 = vmatpush1.msra.mxu0 %v343
        %727 = vmatprep.subr.mxu0 %v348
        %728 = vmatpush1.msra.mxu0 %v347
        %729 = vmatprep.subr.mxu0 %v352
        %730 = vmatpush1.msra.mxu0 %v351
        %731 = vmatprep.subr.mxu0 %v356
        %732 = vmatpush1.msra.mxu0 %v355
        %733 = vmatprep.subr.mxu0 %v360
        %734 = vmatpush1.msra.mxu0 %v359
        %735 = vmatprep.subr.mxu0 %v364
        %736 = vmatpush1.msra.mxu0 %v363
        %737 = vmatprep.subr.mxu0 %v368
        %738 = vmatpush1.msra.mxu0 %v367
        %739 = vmatprep.subr.mxu0 %v372
        %740 = vmatpush1.msra.mxu0 %v371
        %741 = vmatprep.subr.mxu0 %v376
        %742 = vmatpush1.msra.mxu0 %v375
        %743 = vmatprep.subr.mxu0 %v380
        %744 = vmatpush1.msra.mxu0 %v379
        %745 = vmatprep.subr.mxu0 %v384
        %746 = vmatpush1.msra.mxu0 %v383
        %747 = vmatprep.subr.mxu0 %v388
        %748 = vmatpush1.msra.mxu0 %v387
        %749 = vmatprep.subr.mxu0 %v392
        %750 = vmatpush1.msra.mxu0 %v391
        %751 = vmatprep.subr.mxu0 %v396
        %752 = vmatpush1.msra.mxu0 %v395
        %753 = vmatprep.subr.mxu0 %v400
        %754 = vmatpush1.msra.mxu0 %v399
        %755 = vmatprep.subr.mxu0 %v404
        %756 = vmatpush1.msra.mxu0 %v403
        %757 = vmatprep.subr.mxu0 %v408
        %758 = vmatpush1.msra.mxu0 %v407
        %759 = vmatprep.subr.mxu0 %v412
        %760 = vmatpush1.msra.mxu0 %v411
        %761 = vmatprep.subr.mxu0 %v416
        %762 = vmatpush1.msra.mxu0 %v415
        %763 = vmatprep.subr.mxu0 %v420
        %764 = vmatpush1.msra.mxu0 %v419
        %765 = vmatprep.subr.mxu0 %v424
        %766 = vmatpush1.msra.mxu0 %v423
        %767 = vmatprep.subr.mxu0 %v428
        %768 = vmatpush1.msra.mxu0 %v427
        %769 = vmatprep.subr.mxu0 %v432
        %770 = vmatpush1.msra.mxu0 %v431
        %771 = vmatprep.subr.mxu0 %v436
        %772 = vmatpush1.msra.mxu0 %v435
        %773 = vmatprep.subr.mxu0 %v440
        %774 = vmatpush1.msra.mxu0 %v439
        %775 = vmatprep.mubr.f32.mxu0 %v310
        %776 = vmatmul.mubr.f32.gmra.mrb[0].mxu0 %v309
        %v777 = vpop.f32.mrb[0].mxu0
        %v778 = vadd.f32 0.0, %v777
        %v779 = vpop.f32.mrb[0].mxu0
        %v780 = vadd.f32 0.0, %v779
        %781 = vdwg.mxu0
        %782 = vmatprep.subr.mxu0 %v444
        %783 = vmatpush1.msra.mxu0 %v443
        %784 = vmatprep.subr.mxu0 %v448
        %785 = vmatpush1.msra.mxu0 %v447
        %786 = vmatprep.subr.mxu0 %v452
        %787 = vmatpush1.msra.mxu0 %v451
        %788 = vmatprep.subr.mxu0 %v456
        %789 = vmatpush1.msra.mxu0 %v455
        %790 = vmatprep.subr.mxu0 %v460
        %791 = vmatpush1.msra.mxu0 %v459
        %792 = vmatprep.subr.mxu0 %v464
        %793 = vmatpush1.msra.mxu0 %v463
        %794 = vmatprep.subr.mxu0 %v468
        %795 = vmatpush1.msra.mxu0 %v467
        %796 = vmatprep.subr.mxu0 %v472
        %797 = vmatpush1.msra.mxu0 %v471
        %798 = vmatprep.subr.mxu0 %v476
        %799 = vmatpush1.msra.mxu0 %v475
        %800 = vmatprep.subr.mxu0 %v480
        %801 = vmatpush1.msra.mxu0 %v479
        %802 = vmatprep.subr.mxu0 %v484
        %803 = vmatpush1.msra.mxu0 %v483
        %804 = vmatprep.subr.mxu0 %v488
        %805 = vmatpush1.msra.mxu0 %v487
        %806 = vmatprep.subr.mxu0 %v492
        %807 = vmatpush1.msra.mxu0 %v491
        %808 = vmatprep.subr.mxu0 %v496
        %809 = vmatpush1.msra.mxu0 %v495
        %810 = vmatprep.subr.mxu0 %v500
        %811 = vmatpush1.msra.mxu0 %v499
        %812 = vmatprep.subr.mxu0 %v504
        %813 = vmatpush1.msra.mxu0 %v503
        %814 = vmatprep.subr.mxu0 %v508
        %815 = vmatpush1.msra.mxu0 %v507
        %816 = vmatprep.subr.mxu0 %v512
        %817 = vmatpush1.msra.mxu0 %v511
        %818 = vmatprep.subr.mxu0 %v516
        %819 = vmatpush1.msra.mxu0 %v515
        %820 = vmatprep.subr.mxu0 %v520
        %821 = vmatpush1.msra.mxu0 %v519
        %822 = vmatprep.subr.mxu0 %v524
        %823 = vmatpush1.msra.mxu0 %v523
        %824 = vmatprep.subr.mxu0 %v528
        %825 = vmatpush1.msra.mxu0 %v527
        %826 = vmatprep.subr.mxu0 %v532
        %827 = vmatpush1.msra.mxu0 %v531
        %828 = vmatprep.subr.mxu0 %v536
        %829 = vmatpush1.msra.mxu0 %v535
        %830 = vmatprep.subr.mxu0 %v540
        %831 = vmatpush1.msra.mxu0 %v539
        %832 = vmatprep.subr.mxu0 %v544
        %833 = vmatpush1.msra.mxu0 %v543
        %834 = vmatprep.subr.mxu0 %v548
        %835 = vmatpush1.msra.mxu0 %v547
        %836 = vmatprep.subr.mxu0 %v552
        %837 = vmatpush1.msra.mxu0 %v551
        %838 = vmatprep.subr.mxu0 %v556
        %839 = vmatpush1.msra.mxu0 %v555
        %840 = vmatprep.subr.mxu0 %v560
        %841 = vmatpush1.msra.mxu0 %v559
        %842 = vmatprep.subr.mxu0 %v564
        %843 = vmatpush1.msra.mxu0 %v563
        %844 = vmatprep.subr.mxu0 %v568
        %845 = vmatpush1.msra.mxu0 %v567
        %846 = vmatprep.mubr.f32.mxu0 %v312
        %847 = vmatmul.mubr.f32.gmra.mrb[0].mxu0 %v311
        %v848 = vpop.f32.mrb[0].mxu0
        %v849 = vadd.f32 %v778, %v848
        %v850 = vpop.f32.mrb[0].mxu0
        %v851 = vadd.f32 %v780, %v850
        %852 = vdwg.mxu0
        %v853 = vadd.f32 %v305, %v707
        %v854 = vadd.f32 %v306, %v709
        %v855 = vadd.f32 %v307, %v849
        %v856 = vadd.f32 %v308, %v851
        %857 = vst [vmem:[#allocation2] sm:$0xff] %v853
        %858 = vst [vmem:[#allocation2 + $0x8] sm:$0xff] %v854
        %859 = vst [vmem:[#allocation2 + $0x10] sm:$0xff] %v855
        %860 = vst [vmem:[#allocation2 + $0x18] sm:$0xff] %v856
        %p861 = scmp.eq.s32.totalorder %s30, 1
        // Predicated region
        $region49: #{_lambda_.3} parent=31 // pred_check
          %p862 = pneg %p861
        $region50: #{_lambda_.3} parent=31 // pred_check_branch
          %864 = sbr.rel (%p862) target = $region52
        $region51: #{_lambda_.3} parent=31 // pred_region
          %v865 = vld [vmem:[#allocation2] sm:$0xff]
          %v866 = vld [vmem:[#allocation2 + $0x8] sm:$0xff]
          %v867 = vld [vmem:[#allocation2 + $0x10] sm:$0xff]
          %v868 = vld [vmem:[#allocation2 + $0x18] sm:$0xff]
          %v869 = vld [vmem:[%s259] sm:$0xf]
          %v871 = vlaneseq
          %v872 = vshrl.u32 %v871, 7
          %v873 = vsub.s32 0, %v872
          %v874 = vrot.slane %v869, %v873
          %v875 = vlaneseq
          %v876 = vshrl.u32 %v875, 7
          %v877 = vsub.s32 1, %v876
          %v878 = vrot.slane %v869, %v877
          %v879 = vlaneseq
          %v880 = vshrl.u32 %v879, 7
          %v881 = vsub.s32 2, %v880
          %v882 = vrot.slane %v869, %v881
          %v883 = vlaneseq
          %v884 = vshrl.u32 %v883, 7
          %v885 = vsub.s32 3, %v884
          %v886 = vrot.slane %v869, %v885
          %v891 = vadd.f32 %v865, %v874
          %v892 = vadd.f32 %v866, %v878
          %v893 = vadd.f32 %v867, %v882
          %v894 = vadd.f32 %v868, %v886
          %v895 = vmax.f32 %v891, 0.0
          %v896 = vmax.f32 %v892, 0.0
          %v897 = vmax.f32 %v893, 0.0
          %v898 = vmax.f32 %v894, 0.0
          %899 = vst [vmem:[%s291] sm:$0xff] %v895
          %900 = vst [vmem:[%s291 + $0x8] sm:$0xff] %v896
          %901 = vst [vmem:[%s291 + $0x10] sm:$0xff] %v897
          %902 = vst [vmem:[%s291 + $0x18] sm:$0xff] %v898
        $region52: #{_lambda_.3} parent=31 // pred_fallthru
          _
        %s903 = sand.u32 %s134, 1
        %s904 = scalar_lea.sflag [#allocation5], %s903
        %s905 = sand.u32 %s134, 1
        %s906 = smul.addr %s905, 32
        %s907 = scalar_lea.vmem [#allocation9], %s906
        // Predicated region
        $region53: #{_lambda_.3} parent=31 // pred_check
          %p908 = pneg %p144
        $region54: #{_lambda_.3} parent=31 // pred_check_branch
          %910 = sbr.rel (%p908) target = $region56
        $region55: #{_lambda_.3} parent=31 // pred_region
          %s911 = smul.u32 4, %s29
          %s913 = ssub.s32 512, 512
          %914 = vsyncadd %s904, %s913
          %s915 = smul.addr %s28, 8
          %s916 = sadd.s32 %s911, %s915
          %s917 = smul.addr %s916, 128
          %s918 = scalar_lea.hbm %s3, %s917
          %s920 = sshll.u32 %s907, 4
          %s921 = int_to_ptr.vmem [resolvable:$true] %s920
          %923 = dma.vmem_to_hbm [thread:$0]  %s921, 512, %s918, %s904
        $region56: #{_lambda_.3} parent=31 // pred_fallthru
          _
      $region32: #{_lambda_.3} parent=5 // pred_fallthru
        _
      %p924 = scmp.le.s32.totalorder 2, %s18
      // Predicated region
      $region57: #{_lambda_.3} parent=5 // pred_check
        %p925 = pneg %p924
      $region58: #{_lambda_.3} parent=5 // pred_check_branch
        %927 = sbr.rel (%p925) target = $region60
      $region59: #{_lambda_.3} parent=5 // pred_region
        %s928 = ssub.s32 %s18, 2
        // Predicated region
        $region61: #{_lambda_.3} parent=59 // pred_check
          %p929 = pneg %p150
        $region62: #{_lambda_.3} parent=59 // pred_check_branch
          %931 = sbr.rel (%p929) target = $region64
        $region63: #{_lambda_.3} parent=59 // pred_region
          %s932 = sand.u32 %s135, 1
          %s933 = scalar_lea.sflag [#allocation5], %s932
          %s934 = sand.u32 %s135, 1
          %s935 = smul.addr %s934, 32
          %s936 = scalar_lea.vmem [#allocation9], %s935
          %937 = dma.done %s933, 512
        $region64: #{_lambda_.3} parent=59 // pred_fallthru
          _
      $region60: #{_lambda_.3} parent=5 // pred_fallthru
        _
    $region6: #{_lambda_.3} parent=1 // loop_footer
      %s22 = sadd.s32 1, %s18
    $region7: #{_lambda_.3} parent=1 // loop_footer_branch
      %17 = sbr.rel target = $region3
    $region8: #{_lambda_.3} parent=1 // loop_exit
      _
    %938 = vsyncpa [#allocation4], 1
    %s939 = scalar_lea.sflag [#allocation4], 1
    %940 = vsyncpa %s939, 1
    %941 = vsyncpa [#allocation7], 1
    %s942 = scalar_lea.sflag [#allocation7], 1
    %943 = vsyncpa %s942, 1
    %944 = vsyncpa [#allocation5], 1
    %s945 = scalar_lea.sflag [#allocation5], 1
    %946 = vsyncpa %s945, 1

// kernel: _lambda_.5
$region0: #{_lambda_.5}
  #allocation0 [shape = 'u32[]', space=smem, size = 0x4, offset = 0x4, fixed_abs, tag = 'smem constant byte address 0x4 - core index']
  #allocation1 [shape = 'u32[144,128]{1,0:T(1,128)}', space=vmem, size = 0x12000, scoped, tag = 'internal scratch']
  #allocation2 [shape = 'f32[8,512]{1,0:T(8,128)}', space=vmem, size = 0x4000, scoped, tag = 'scratch operand']
  %s0 = inlined_call_operand.hbm [shape: f32[8,512], index: 0, kind: input, shape index: {}]
  %s1 = inlined_call_operand.hbm [shape: f32[512,4096], index: 1, kind: input, shape index: {}]
  %s2 = inlined_call_operand.hbm [shape: f32[1,4096], index: 2, kind: input, shape index: {}]
  %s3 = inlined_call_operand.hbm [shape: f32[8,4096], index: 3, kind: output, shape index: {}]
  %s4 = sld [smem:[#allocation0]]
  $region65: #{_lambda_.5} parent=0
    _
  %s6 = ssub.s32 1, %s4
  %s7 = scalar_select 0, %s6, %s4
  $region1: #{_lambda_.5} parent=0
    #allocation3 [shape = 'u8[16384]{0}', space=vmem, size = 0x4000, scoped, tag = 'input window, operand 0, single buffered']
    #allocation4 [shape = 's32[2]{0}', space=sflag, size = 0x8, scoped, tag = 'scoped memory for _lambda_.5']
    #allocation5 [shape = 's32[2]{0}', space=sflag, size = 0x8, scoped, tag = 'scoped memory for _lambda_.5']
    #allocation6 [shape = 'u8[2097152]{0}', space=vmem, size = 0x200000, scoped, tag = 'input window, operand 1']
    #allocation7 [shape = 's32[2]{0}', space=sflag, size = 0x8, scoped, tag = 'scoped memory for _lambda_.5']
    #allocation8 [shape = 'u8[4096]{0}', space=vmem, size = 0x1000, scoped, tag = 'input window, operand 2']
    #allocation9 [shape = 'u8[32768]{0}', space=vmem, size = 0x8000, scoped, tag = 'output window, operand 0']
    %8 = vsyncpa [#allocation4], 0
    %9 = vsyncpa [#allocation7], 0
    %s10 = scalar_lea.sflag [#allocation7], 1
    %11 = vsyncpa %s10, 0
    %12 = vsyncpa [#allocation5], 0
    %s13 = scalar_lea.sflag [#allocation5], 1
    %14 = vsyncpa %s13, 0
    loop: start=0, step=1, limit=10
    $region2: #{_lambda_.5} parent=1 // loop_pre_header
      _
    $region3: #{_lambda_.5} parent=1 // loop_header
      %s16 = sphi 0, %s20
      %p17 = scmp.ge.s32.totalorder %s16, 10
      %s23 = sphi 0, %s42
      %s24 = sphi 0, %s38
      %s25 = sphi 0, %s34
      %s26 = sphi 0, %s23
      %s27 = sphi 0, %s24
      %s28 = sphi 0, %s25
      %s29 = sphi 0, %s26
      %s30 = sphi 0, %s27
      %s31 = sphi 0, %s28
      %s47 = sphi 0, %s49
      %s50 = sphi 0, %s47
      %s51 = sphi 0, %s50
      %s67 = sphi 0, %s51
      %s75 = sphi 0, %s77
      %s78 = sphi 0, %s75
      %s79 = sphi 0, %s78
      %s95 = sphi 0, %s79
      %s101 = sphi 0, %s103
      %s104 = sphi 0, %s101
      %s105 = sphi 0, %s104
      %s121 = sphi 0, %s105
      %s129 = sphi 0, %s131
      %s132 = sphi 0, %s129
      %s133 = sphi 0, %s132
      %s149 = sphi 0, %s133
    $region4: #{_lambda_.5} parent=1 // loop_header_branch
      %19 = sbr.rel (%p17) target = $region8
    $region5: #{_lambda_.5} parent=1 // loop_body
      %s21 = ssub.s32 %s16, 1
      %s22 = ssub.s32 %s16, 2
      %s32 = sadd.s32 1, %s25
      %p33 = scmp.ge.s32.totalorder %s32, 1
      %s34 = scalar_select %p33, 0, %s32
      %s35 = sadd.s32 1, %s24
      %s36 = scalar_select %p33, %s35, %s24
      %p37 = scmp.ge.s32.totalorder %s36, 8
      %s38 = scalar_select %p37, 0, %s36
      %s39 = sadd.s32 1, %s23
      %s40 = scalar_select %p37, %s39, %s23
      %p41 = scmp.ge.s32.totalorder %s40, 1
      %s42 = scalar_select %p41, 0, %s40
      %s43 = ssub.s32 %s23, %s42
      %s44 = ssub.s32 %s25, %s34
      %s45 = sor.u32 %s43, %s44
      %p46 = scmp.eq.s32.totalorder %s45, 0
      %s48 = sadd.s32 %s47, 1
      %s49 = scalar_select %p46, %s47, %s48
      %p52 = pneg %p46
      %p53 = scmp.eq.s32.totalorder %s16, 7
      %p54 = por %p52, %p53
      %p55 = scmp.ne.s32.totalorder %s47, %s50
      %p56 = scmp.eq.s32.totalorder %s16, 0
      %p57 = por %p55, %p56
      %p58 = scmp.ne.s32.totalorder %s47, %s50
      %p59 = scmp.eq.s32.totalorder %s21, 7
      %p60 = por %p58, %p59
      %p61 = scmp.ne.s32.totalorder %s50, %s51
      %p62 = scmp.eq.s32.totalorder %s21, 0
      %p63 = por %p61, %p62
      %p64 = scmp.ne.s32.totalorder %s50, %s51
      %p65 = scmp.eq.s32.totalorder %s22, 7
      %p66 = por %p64, %p65
      %p68 = scmp.ne.s32.totalorder %s51, %s67
      %p69 = scmp.eq.s32.totalorder %s22, 0
      %p70 = por %p68, %p69
      %s71 = ssub.s32 %s25, %s34
      %s72 = ssub.s32 %s24, %s38
      %s73 = sor.u32 %s71, %s72
      %p74 = scmp.eq.s32.totalorder %s73, 0
      %s76 = sadd.s32 %s75, 1
      %s77 = scalar_select %p74, %s75, %s76
      %p80 = pneg %p74
      %p81 = scmp.eq.s32.totalorder %s16, 7
      %p82 = por %p80, %p81
      %p83 = scmp.ne.s32.totalorder %s75, %s78
      %p84 = scmp.eq.s32.totalorder %s16, 0
      %p85 = por %p83, %p84
      %p86 = scmp.ne.s32.totalorder %s75, %s78
      %p87 = scmp.eq.s32.totalorder %s21, 7
      %p88 = por %p86, %p87
      %p89 = scmp.ne.s32.totalorder %s78, %s79
      %p90 = scmp.eq.s32.totalorder %s21, 0
      %p91 = por %p89, %p90
      %p92 = scmp.ne.s32.totalorder %s78, %s79
      %p93 = scmp.eq.s32.totalorder %s22, 7
      %p94 = por %p92, %p93
      %p96 = scmp.ne.s32.totalorder %s79, %s95
      %p97 = scmp.eq.s32.totalorder %s22, 0
      %p98 = por %p96, %p97
      %s99 = ssub.s32 %s24, %s38
      %p100 = scmp.eq.s32.totalorder %s99, 0
      %s102 = sadd.s32 %s101, 1
      %s103 = scalar_select %p100, %s101, %s102
      %p106 = pneg %p100
      %p107 = scmp.eq.s32.totalorder %s16, 7
      %p108 = por %p106, %p107
      %p109 = scmp.ne.s32.totalorder %s101, %s104
      %p110 = scmp.eq.s32.totalorder %s16, 0
      %p111 = por %p109, %p110
      %p112 = scmp.ne.s32.totalorder %s101, %s104
      %p113 = scmp.eq.s32.totalorder %s21, 7
      %p114 = por %p112, %p113
      %p115 = scmp.ne.s32.totalorder %s104, %s105
      %p116 = scmp.eq.s32.totalorder %s21, 0
      %p117 = por %p115, %p116
      %p118 = scmp.ne.s32.totalorder %s104, %s105
      %p119 = scmp.eq.s32.totalorder %s22, 7
      %p120 = por %p118, %p119
      %p122 = scmp.ne.s32.totalorder %s105, %s121
      %p123 = scmp.eq.s32.totalorder %s22, 0
      %p124 = por %p122, %p123
      %s125 = ssub.s32 %s23, %s42
      %s126 = ssub.s32 %s24, %s38
      %s127 = sor.u32 %s125, %s126
      %p128 = scmp.eq.s32.totalorder %s127, 0
      %s130 = sadd.s32 %s129, 1
      %s131 = scalar_select %p128, %s129, %s130
      %p134 = pneg %p128
      %p135 = scmp.eq.s32.totalorder %s16, 7
      %p136 = por %p134, %p135
      %p137 = scmp.ne.s32.totalorder %s129, %s132
      %p138 = scmp.eq.s32.totalorder %s16, 0
      %p139 = por %p137, %p138
      %p140 = scmp.ne.s32.totalorder %s129, %s132
      %p141 = scmp.eq.s32.totalorder %s21, 7
      %p142 = por %p140, %p141
      %p143 = scmp.ne.s32.totalorder %s132, %s133
      %p144 = scmp.eq.s32.totalorder %s21, 0
      %p145 = por %p143, %p144
      %p146 = scmp.ne.s32.totalorder %s132, %s133
      %p147 = scmp.eq.s32.totalorder %s22, 7
      %p148 = por %p146, %p147
      %p150 = scmp.ne.s32.totalorder %s133, %s149
      %p151 = scmp.eq.s32.totalorder %s22, 0
      %p152 = por %p150, %p151
      %p153 = scmp.le.s32.totalorder 1, %s16
      %p154 = scmp.lt.s32.totalorder %s16, 9
      %p155 = pnand %p153, %p154
      %p156 = pneg %p155
      // Predicated region
      $region9: #{_lambda_.5} parent=5 // pred_check
        _
      $region10: #{_lambda_.5} parent=5 // pred_check_branch
        %158 = sbr.rel (%p155) target = $region12
      $region11: #{_lambda_.5} parent=5 // pred_region
        %s159 = ssub.s32 %s16, 1
        // Predicated region
        $region13: #{_lambda_.5} parent=11 // pred_check
          %p160 = pneg %p63
        $region14: #{_lambda_.5} parent=11 // pred_check_branch
          %162 = sbr.rel (%p160) target = $region16
        $region15: #{_lambda_.5} parent=11 // pred_region
          %s163 = smul.u32 4, %s28
          %s165 = ssub.s32 512, 512
          %166 = vsyncadd [#allocation4], %s165
          %s167 = smul.addr %s26, 4
          %s168 = sadd.s32 %s163, %s167
          %s169 = smul.addr %s168, 128
          %s170 = scalar_lea.hbm %s0, %s169
          %s172 = sshll.u32 [#allocation3], 4
          %s173 = int_to_ptr.vmem [resolvable:$true] %s172
          %175 = dma.hbm_to_vmem [thread:$0]  %s170, 512, %s173, [#allocation4]
        $region16: #{_lambda_.5} parent=11 // pred_fallthru
          _
      $region12: #{_lambda_.5} parent=5 // pred_fallthru
        _
      %p176 = scmp.lt.s32.totalorder %s16, 8
      // Predicated region
      $region17: #{_lambda_.5} parent=5 // pred_check
        %p177 = pneg %p176
      $region18: #{_lambda_.5} parent=5 // pred_check_branch
        %179 = sbr.rel (%p177) target = $region20
      $region19: #{_lambda_.5} parent=5 // pred_region
        // Predicated region
        $region21: #{_lambda_.5} parent=19 // pred_check
          %p180 = pneg %p85
        $region22: #{_lambda_.5} parent=19 // pred_check_branch
          %182 = sbr.rel (%p180) target = $region24
        $region23: #{_lambda_.5} parent=19 // pred_region
          %s183 = sand.u32 %s16, 1
          %s184 = scalar_lea.sflag [#allocation7], %s183
          %s185 = sand.u32 %s75, 1
          %s186 = smul.addr %s185, 2048
          %s187 = scalar_lea.vmem [#allocation6], %s186
          %s188 = smul.u32 64, %s25
          %s189 = smul.u32 4, %s24
          %s191 = ssub.s32 32768, 32768
          %192 = vsyncadd %s184, %s191
          %s193 = smul.addr %s188, 32
          %s194 = sadd.s32 %s189, %s193
          %s195 = smul.addr %s194, 128
          %s196 = scalar_lea.hbm %s1, %s195
          %s197 = sshll.u32 %s187, 4
          %s198 = int_to_ptr.vmem [resolvable:$true] %s197
          %203 = dma.hbm_to_vmem [thread:$0]  %s196, 32768, %s198, %s184, 4096, 512, 32
        $region24: #{_lambda_.5} parent=19 // pred_fallthru
          _
        // Predicated region
        $region25: #{_lambda_.5} parent=19 // pred_check
          %p204 = pneg %p111
        $region26: #{_lambda_.5} parent=19 // pred_check_branch
          %206 = sbr.rel (%p204) target = $region28
        $region27: #{_lambda_.5} parent=19 // pred_region
          %s207 = sand.u32 %s16, 1
          %s208 = scalar_lea.sflag [#allocation7], %s207
          %s209 = sand.u32 %s101, 1
          %s210 = smul.addr %s209, 4
          %s211 = scalar_lea.vmem [#allocation8], %s210
          %s212 = smul.u32 4, %s24
          %s214 = ssub.s32 64, 64
          %215 = vsyncadd %s208, %s214
          %s216 = smul.addr %s212, 16
          %s217 = scalar_lea.hbm %s2, %s216
          %s219 = sshll.u32 %s211, 4
          %s220 = int_to_ptr.vmem [resolvable:$true] %s219
          %222 = dma.hbm_to_vmem [thread:$0]  %s217, 64, %s220, %s208
        $region28: #{_lambda_.5} parent=19 // pred_fallthru
          _
      $region20: #{_lambda_.5} parent=5 // pred_fallthru
        _
      %p223 = scmp.le.s32.totalorder 1, %s16
      %p224 = scmp.lt.s32.totalorder %s16, 9
      %p225 = pnand %p223, %p224
      %p226 = pneg %p225
      // Predicated region
      $region29: #{_lambda_.5} parent=5 // pred_check
        _
      $region30: #{_lambda_.5} parent=5 // pred_check_branch
        %228 = sbr.rel (%p225) target = $region32
      $region31: #{_lambda_.5} parent=5 // pred_region
        %s229 = ssub.s32 %s16, 1
        // Predicated region
        $region33: #{_lambda_.5} parent=31 // pred_check
          %p230 = pneg %p63
        $region34: #{_lambda_.5} parent=31 // pred_check_branch
          %232 = sbr.rel (%p230) target = $region36
        $region35: #{_lambda_.5} parent=31 // pred_region
          %233 = dma.done [#allocation4], 512
        $region36: #{_lambda_.5} parent=31 // pred_fallthru
          _
        %s234 = sand.u32 %s21, 1
        %s235 = scalar_lea.sflag [#allocation7], %s234
        %s236 = sand.u32 %s78, 1
        %s237 = smul.addr %s236, 2048
        %s238 = scalar_lea.vmem [#allocation6], %s237
        // Predicated region
        $region37: #{_lambda_.5} parent=31 // pred_check
          %p239 = pneg %p91
        $region38: #{_lambda_.5} parent=31 // pred_check_branch
          %241 = sbr.rel (%p239) target = $region40
        $region39: #{_lambda_.5} parent=31 // pred_region
          %242 = dma.done %s235, 32768
        $region40: #{_lambda_.5} parent=31 // pred_fallthru
          _
        %s243 = sand.u32 %s21, 1
        %s244 = scalar_lea.sflag [#allocation7], %s243
        %s245 = sand.u32 %s104, 1
        %s246 = smul.addr %s245, 4
        %s247 = scalar_lea.vmem [#allocation8], %s246
        // Predicated region
        $region41: #{_lambda_.5} parent=31 // pred_check
          %p248 = pneg %p117
        $region42: #{_lambda_.5} parent=31 // pred_check_branch
          %250 = sbr.rel (%p248) target = $region44
        $region43: #{_lambda_.5} parent=31 // pred_region
          %251 = dma.done %s244, 64
        $region44: #{_lambda_.5} parent=31 // pred_fallthru
          _
        %p252 = pneg %p63
        %p253 = pneg %p60
        %s254 = sand.u32 %s21, 1
        %s255 = scalar_lea.sflag [#allocation7], %s254
        %s256 = sand.u32 %s78, 1
        %s257 = smul.addr %s256, 2048
        %s258 = scalar_lea.vmem [#allocation6], %s257
        %p259 = pneg %p91
        %p260 = pneg %p88
        %s261 = sand.u32 %s21, 1
        %s262 = scalar_lea.sflag [#allocation7], %s261
        %s263 = sand.u32 %s104, 1
        %s264 = smul.addr %s263, 4
        %s265 = scalar_lea.vmem [#allocation8], %s264
        %p266 = pneg %p117
        %p267 = pneg %p114
        %p268 = pneg %p145
        %p269 = pneg %p142
        %s270 = sand.u32 %s132, 1
        %s271 = scalar_lea.sflag [#allocation5], %s270
        %s272 = sand.u32 %s132, 1
        %s273 = smul.addr %s272, 32
        %s274 = scalar_lea.vmem [#allocation9], %s273
        %s275 = smul.u32 4, %s28
        %s276 = smul.u32 64, %s28
        %s277 = smul.u32 4, %s27
        %s278 = smul.u32 4, %s27
        %s279 = smul.u32 4, %s27
        %p280 = scmp.eq.s32.totalorder %s28, 0
        // Predicated region
        $region45: #{_lambda_.5} parent=31 // pred_check
          %p281 = pneg %p280
        $region46: #{_lambda_.5} parent=31 // pred_check_branch
          %283 = sbr.rel (%p281) target = $region48
        $region47: #{_lambda_.5} parent=31 // pred_region
          %284 = vst [vmem:[#allocation2] sm:$0xff] 0.0
          %285 = vst [vmem:[#allocation2 + $0x8] sm:$0xff] 0.0
          %286 = vst [vmem:[#allocation2 + $0x10] sm:$0xff] 0.0
          %287 = vst [vmem:[#allocation2 + $0x18] sm:$0xff] 0.0
        $region48: #{_lambda_.5} parent=31 // pred_fallthru
          _
        %v288 = vld [vmem:[#allocation2] sm:$0xff]
        %v289 = vld [vmem:[#allocation2 + $0x8] sm:$0xff]
        %v290 = vld [vmem:[#allocation2 + $0x10] sm:$0xff]
        %v291 = vld [vmem:[#allocation2 + $0x18] sm:$0xff]
        %v292 = vld [vmem:[#allocation3] sm:$0xff]
        %v293 = vld [vmem:[#allocation3 + $0x8] sm:$0xff]
        %v294 = vld [vmem:[#allocation3 + $0x10] sm:$0xff]
        %v295 = vld [vmem:[#allocation3 + $0x18] sm:$0xff]
        %v296 = vld [vmem:[%s238] sm:$0xff]
        %v297 = vld [vmem:[%s238 + $0x8] sm:$0xff]
        %v298 = vld [vmem:[%s238 + $0x10] sm:$0xff]
        %v299 = vld [vmem:[%s238 + $0x18] sm:$0xff]
        %v300 = vld [vmem:[%s238 + $0x20] sm:$0xff]
        %v301 = vld [vmem:[%s238 + $0x28] sm:$0xff]
        %v302 = vld [vmem:[%s238 + $0x30] sm:$0xff]
        %v303 = vld [vmem:[%s238 + $0x38] sm:$0xff]
        %v304 = vld [vmem:[%s238 + $0x40] sm:$0xff]
        %v305 = vld [vmem:[%s238 + $0x48] sm:$0xff]
        %v306 = vld [vmem:[%s238 + $0x50] sm:$0xff]
        %v307 = vld [vmem:[%s238 + $0x58] sm:$0xff]
        %v308 = vld [vmem:[%s238 + $0x60] sm:$0xff]
        %v309 = vld [vmem:[%s238 + $0x68] sm:$0xff]
        %v310 = vld [vmem:[%s238 + $0x70] sm:$0xff]
        %v311 = vld [vmem:[%s238 + $0x78] sm:$0xff]
        %v312 = vld [vmem:[%s238 + $0x80] sm:$0xff]
        %v313 = vld [vmem:[%s238 + $0x88] sm:$0xff]
        %v314 = vld [vmem:[%s238 + $0x90] sm:$0xff]
        %v315 = vld [vmem:[%s238 + $0x98] sm:$0xff]
        %v316 = vld [vmem:[%s238 + $0xa0] sm:$0xff]
        %v317 = vld [vmem:[%s238 + $0xa8] sm:$0xff]
        %v318 = vld [vmem:[%s238 + $0xb0] sm:$0xff]
        %v319 = vld [vmem:[%s238 + $0xb8] sm:$0xff]
        %v320 = vld [vmem:[%s238 + $0xc0] sm:$0xff]
        %v321 = vld [vmem:[%s238 + $0xc8] sm:$0xff]
        %v322 = vld [vmem:[%s238 + $0xd0] sm:$0xff]
        %v323 = vld [vmem:[%s238 + $0xd8] sm:$0xff]
        %v324 = vld [vmem:[%s238 + $0xe0] sm:$0xff]
        %v325 = vld [vmem:[%s238 + $0xe8] sm:$0xff]
        %v326 = vld [vmem:[%s238 + $0xf0] sm:$0xff]
        %v327 = vld [vmem:[%s238 + $0xf8] sm:$0xff]
        %v328 = vld [vmem:[%s238 + $0x100] sm:$0xff]
        %v329 = vld [vmem:[%s238 + $0x108] sm:$0xff]
        %v330 = vld [vmem:[%s238 + $0x110] sm:$0xff]
        %v331 = vld [vmem:[%s238 + $0x118] sm:$0xff]
        %v332 = vld [vmem:[%s238 + $0x120] sm:$0xff]
        %v333 = vld [vmem:[%s238 + $0x128] sm:$0xff]
        %v334 = vld [vmem:[%s238 + $0x130] sm:$0xff]
        %v335 = vld [vmem:[%s238 + $0x138] sm:$0xff]
        %v336 = vld [vmem:[%s238 + $0x140] sm:$0xff]
        %v337 = vld [vmem:[%s238 + $0x148] sm:$0xff]
        %v338 = vld [vmem:[%s238 + $0x150] sm:$0xff]
        %v339 = vld [vmem:[%s238 + $0x158] sm:$0xff]
        %v340 = vld [vmem:[%s238 + $0x160] sm:$0xff]
        %v341 = vld [vmem:[%s238 + $0x168] sm:$0xff]
        %v342 = vld [vmem:[%s238 + $0x170] sm:$0xff]
        %v343 = vld [vmem:[%s238 + $0x178] sm:$0xff]
        %v344 = vld [vmem:[%s238 + $0x180] sm:$0xff]
        %v345 = vld [vmem:[%s238 + $0x188] sm:$0xff]
        %v346 = vld [vmem:[%s238 + $0x190] sm:$0xff]
        %v347 = vld [vmem:[%s238 + $0x198] sm:$0xff]
        %v348 = vld [vmem:[%s238 + $0x1a0] sm:$0xff]
        %v349 = vld [vmem:[%s238 + $0x1a8] sm:$0xff]
        %v350 = vld [vmem:[%s238 + $0x1b0] sm:$0xff]
        %v351 = vld [vmem:[%s238 + $0x1b8] sm:$0xff]
        %v352 = vld [vmem:[%s238 + $0x1c0] sm:$0xff]
        %v353 = vld [vmem:[%s238 + $0x1c8] sm:$0xff]
        %v354 = vld [vmem:[%s238 + $0x1d0] sm:$0xff]
        %v355 = vld [vmem:[%s238 + $0x1d8] sm:$0xff]
        %v356 = vld [vmem:[%s238 + $0x1e0] sm:$0xff]
        %v357 = vld [vmem:[%s238 + $0x1e8] sm:$0xff]
        %v358 = vld [vmem:[%s238 + $0x1f0] sm:$0xff]
        %v359 = vld [vmem:[%s238 + $0x1f8] sm:$0xff]
        %v360 = vld [vmem:[%s238 + $0x200] sm:$0xff]
        %v361 = vld [vmem:[%s238 + $0x208] sm:$0xff]
        %v362 = vld [vmem:[%s238 + $0x210] sm:$0xff]
        %v363 = vld [vmem:[%s238 + $0x218] sm:$0xff]
        %v364 = vld [vmem:[%s238 + $0x220] sm:$0xff]
        %v365 = vld [vmem:[%s238 + $0x228] sm:$0xff]
        %v366 = vld [vmem:[%s238 + $0x230] sm:$0xff]
        %v367 = vld [vmem:[%s238 + $0x238] sm:$0xff]
        %v368 = vld [vmem:[%s238 + $0x240] sm:$0xff]
        %v369 = vld [vmem:[%s238 + $0x248] sm:$0xff]
        %v370 = vld [vmem:[%s238 + $0x250] sm:$0xff]
        %v371 = vld [vmem:[%s238 + $0x258] sm:$0xff]
        %v372 = vld [vmem:[%s238 + $0x260] sm:$0xff]
        %v373 = vld [vmem:[%s238 + $0x268] sm:$0xff]
        %v374 = vld [vmem:[%s238 + $0x270] sm:$0xff]
        %v375 = vld [vmem:[%s238 + $0x278] sm:$0xff]
        %v376 = vld [vmem:[%s238 + $0x280] sm:$0xff]
        %v377 = vld [vmem:[%s238 + $0x288] sm:$0xff]
        %v378 = vld [vmem:[%s238 + $0x290] sm:$0xff]
        %v379 = vld [vmem:[%s238 + $0x298] sm:$0xff]
        %v380 = vld [vmem:[%s238 + $0x2a0] sm:$0xff]
        %v381 = vld [vmem:[%s238 + $0x2a8] sm:$0xff]
        %v382 = vld [vmem:[%s238 + $0x2b0] sm:$0xff]
        %v383 = vld [vmem:[%s238 + $0x2b8] sm:$0xff]
        %v384 = vld [vmem:[%s238 + $0x2c0] sm:$0xff]
        %v385 = vld [vmem:[%s238 + $0x2c8] sm:$0xff]
        %v386 = vld [vmem:[%s238 + $0x2d0] sm:$0xff]
        %v387 = vld [vmem:[%s238 + $0x2d8] sm:$0xff]
        %v388 = vld [vmem:[%s238 + $0x2e0] sm:$0xff]
        %v389 = vld [vmem:[%s238 + $0x2e8] sm:$0xff]
        %v390 = vld [vmem:[%s238 + $0x2f0] sm:$0xff]
        %v391 = vld [vmem:[%s238 + $0x2f8] sm:$0xff]
        %v392 = vld [vmem:[%s238 + $0x300] sm:$0xff]
        %v393 = vld [vmem:[%s238 + $0x308] sm:$0xff]
        %v394 = vld [vmem:[%s238 + $0x310] sm:$0xff]
        %v395 = vld [vmem:[%s238 + $0x318] sm:$0xff]
        %v396 = vld [vmem:[%s238 + $0x320] sm:$0xff]
        %v397 = vld [vmem:[%s238 + $0x328] sm:$0xff]
        %v398 = vld [vmem:[%s238 + $0x330] sm:$0xff]
        %v399 = vld [vmem:[%s238 + $0x338] sm:$0xff]
        %v400 = vld [vmem:[%s238 + $0x340] sm:$0xff]
        %v401 = vld [vmem:[%s238 + $0x348] sm:$0xff]
        %v402 = vld [vmem:[%s238 + $0x350] sm:$0xff]
        %v403 = vld [vmem:[%s238 + $0x358] sm:$0xff]
        %v404 = vld [vmem:[%s238 + $0x360] sm:$0xff]
        %v405 = vld [vmem:[%s238 + $0x368] sm:$0xff]
        %v406 = vld [vmem:[%s238 + $0x370] sm:$0xff]
        %v407 = vld [vmem:[%s238 + $0x378] sm:$0xff]
        %v408 = vld [vmem:[%s238 + $0x380] sm:$0xff]
        %v409 = vld [vmem:[%s238 + $0x388] sm:$0xff]
        %v410 = vld [vmem:[%s238 + $0x390] sm:$0xff]
        %v411 = vld [vmem:[%s238 + $0x398] sm:$0xff]
        %v412 = vld [vmem:[%s238 + $0x3a0] sm:$0xff]
        %v413 = vld [vmem:[%s238 + $0x3a8] sm:$0xff]
        %v414 = vld [vmem:[%s238 + $0x3b0] sm:$0xff]
        %v415 = vld [vmem:[%s238 + $0x3b8] sm:$0xff]
        %v416 = vld [vmem:[%s238 + $0x3c0] sm:$0xff]
        %v417 = vld [vmem:[%s238 + $0x3c8] sm:$0xff]
        %v418 = vld [vmem:[%s238 + $0x3d0] sm:$0xff]
        %v419 = vld [vmem:[%s238 + $0x3d8] sm:$0xff]
        %v420 = vld [vmem:[%s238 + $0x3e0] sm:$0xff]
        %v421 = vld [vmem:[%s238 + $0x3e8] sm:$0xff]
        %v422 = vld [vmem:[%s238 + $0x3f0] sm:$0xff]
        %v423 = vld [vmem:[%s238 + $0x3f8] sm:$0xff]
        %v424 = vld [vmem:[%s238 + $0x400] sm:$0xff]
        %v425 = vld [vmem:[%s238 + $0x408] sm:$0xff]
        %v426 = vld [vmem:[%s238 + $0x410] sm:$0xff]
        %v427 = vld [vmem:[%s238 + $0x418] sm:$0xff]
        %v428 = vld [vmem:[%s238 + $0x420] sm:$0xff]
        %v429 = vld [vmem:[%s238 + $0x428] sm:$0xff]
        %v430 = vld [vmem:[%s238 + $0x430] sm:$0xff]
        %v431 = vld [vmem:[%s238 + $0x438] sm:$0xff]
        %v432 = vld [vmem:[%s238 + $0x440] sm:$0xff]
        %v433 = vld [vmem:[%s238 + $0x448] sm:$0xff]
        %v434 = vld [vmem:[%s238 + $0x450] sm:$0xff]
        %v435 = vld [vmem:[%s238 + $0x458] sm:$0xff]
        %v436 = vld [vmem:[%s238 + $0x460] sm:$0xff]
        %v437 = vld [vmem:[%s238 + $0x468] sm:$0xff]
        %v438 = vld [vmem:[%s238 + $0x470] sm:$0xff]
        %v439 = vld [vmem:[%s238 + $0x478] sm:$0xff]
        %v440 = vld [vmem:[%s238 + $0x480] sm:$0xff]
        %v441 = vld [vmem:[%s238 + $0x488] sm:$0xff]
        %v442 = vld [vmem:[%s238 + $0x490] sm:$0xff]
        %v443 = vld [vmem:[%s238 + $0x498] sm:$0xff]
        %v444 = vld [vmem:[%s238 + $0x4a0] sm:$0xff]
        %v445 = vld [vmem:[%s238 + $0x4a8] sm:$0xff]
        %v446 = vld [vmem:[%s238 + $0x4b0] sm:$0xff]
        %v447 = vld [vmem:[%s238 + $0x4b8] sm:$0xff]
        %v448 = vld [vmem:[%s238 + $0x4c0] sm:$0xff]
        %v449 = vld [vmem:[%s238 + $0x4c8] sm:$0xff]
        %v450 = vld [vmem:[%s238 + $0x4d0] sm:$0xff]
        %v451 = vld [vmem:[%s238 + $0x4d8] sm:$0xff]
        %v452 = vld [vmem:[%s238 + $0x4e0] sm:$0xff]
        %v453 = vld [vmem:[%s238 + $0x4e8] sm:$0xff]
        %v454 = vld [vmem:[%s238 + $0x4f0] sm:$0xff]
        %v455 = vld [vmem:[%s238 + $0x4f8] sm:$0xff]
        %v456 = vld [vmem:[%s238 + $0x500] sm:$0xff]
        %v457 = vld [vmem:[%s238 + $0x508] sm:$0xff]
        %v458 = vld [vmem:[%s238 + $0x510] sm:$0xff]
        %v459 = vld [vmem:[%s238 + $0x518] sm:$0xff]
        %v460 = vld [vmem:[%s238 + $0x520] sm:$0xff]
        %v461 = vld [vmem:[%s238 + $0x528] sm:$0xff]
        %v462 = vld [vmem:[%s238 + $0x530] sm:$0xff]
        %v463 = vld [vmem:[%s238 + $0x538] sm:$0xff]
        %v464 = vld [vmem:[%s238 + $0x540] sm:$0xff]
        %v465 = vld [vmem:[%s238 + $0x548] sm:$0xff]
        %v466 = vld [vmem:[%s238 + $0x550] sm:$0xff]
        %v467 = vld [vmem:[%s238 + $0x558] sm:$0xff]
        %v468 = vld [vmem:[%s238 + $0x560] sm:$0xff]
        %v469 = vld [vmem:[%s238 + $0x568] sm:$0xff]
        %v470 = vld [vmem:[%s238 + $0x570] sm:$0xff]
        %v471 = vld [vmem:[%s238 + $0x578] sm:$0xff]
        %v472 = vld [vmem:[%s238 + $0x580] sm:$0xff]
        %v473 = vld [vmem:[%s238 + $0x588] sm:$0xff]
        %v474 = vld [vmem:[%s238 + $0x590] sm:$0xff]
        %v475 = vld [vmem:[%s238 + $0x598] sm:$0xff]
        %v476 = vld [vmem:[%s238 + $0x5a0] sm:$0xff]
        %v477 = vld [vmem:[%s238 + $0x5a8] sm:$0xff]
        %v478 = vld [vmem:[%s238 + $0x5b0] sm:$0xff]
        %v479 = vld [vmem:[%s238 + $0x5b8] sm:$0xff]
        %v480 = vld [vmem:[%s238 + $0x5c0] sm:$0xff]
        %v481 = vld [vmem:[%s238 + $0x5c8] sm:$0xff]
        %v482 = vld [vmem:[%s238 + $0x5d0] sm:$0xff]
        %v483 = vld [vmem:[%s238 + $0x5d8] sm:$0xff]
        %v484 = vld [vmem:[%s238 + $0x5e0] sm:$0xff]
        %v485 = vld [vmem:[%s238 + $0x5e8] sm:$0xff]
        %v486 = vld [vmem:[%s238 + $0x5f0] sm:$0xff]
        %v487 = vld [vmem:[%s238 + $0x5f8] sm:$0xff]
        %v488 = vld [vmem:[%s238 + $0x600] sm:$0xff]
        %v489 = vld [vmem:[%s238 + $0x608] sm:$0xff]
        %v490 = vld [vmem:[%s238 + $0x610] sm:$0xff]
        %v491 = vld [vmem:[%s238 + $0x618] sm:$0xff]
        %v492 = vld [vmem:[%s238 + $0x620] sm:$0xff]
        %v493 = vld [vmem:[%s238 + $0x628] sm:$0xff]
        %v494 = vld [vmem:[%s238 + $0x630] sm:$0xff]
        %v495 = vld [vmem:[%s238 + $0x638] sm:$0xff]
        %v496 = vld [vmem:[%s238 + $0x640] sm:$0xff]
        %v497 = vld [vmem:[%s238 + $0x648] sm:$0xff]
        %v498 = vld [vmem:[%s238 + $0x650] sm:$0xff]
        %v499 = vld [vmem:[%s238 + $0x658] sm:$0xff]
        %v500 = vld [vmem:[%s238 + $0x660] sm:$0xff]
        %v501 = vld [vmem:[%s238 + $0x668] sm:$0xff]
        %v502 = vld [vmem:[%s238 + $0x670] sm:$0xff]
        %v503 = vld [vmem:[%s238 + $0x678] sm:$0xff]
        %v504 = vld [vmem:[%s238 + $0x680] sm:$0xff]
        %v505 = vld [vmem:[%s238 + $0x688] sm:$0xff]
        %v506 = vld [vmem:[%s238 + $0x690] sm:$0xff]
        %v507 = vld [vmem:[%s238 + $0x698] sm:$0xff]
        %v508 = vld [vmem:[%s238 + $0x6a0] sm:$0xff]
        %v509 = vld [vmem:[%s238 + $0x6a8] sm:$0xff]
        %v510 = vld [vmem:[%s238 + $0x6b0] sm:$0xff]
        %v511 = vld [vmem:[%s238 + $0x6b8] sm:$0xff]
        %v512 = vld [vmem:[%s238 + $0x6c0] sm:$0xff]
        %v513 = vld [vmem:[%s238 + $0x6c8] sm:$0xff]
        %v514 = vld [vmem:[%s238 + $0x6d0] sm:$0xff]
        %v515 = vld [vmem:[%s238 + $0x6d8] sm:$0xff]
        %v516 = vld [vmem:[%s238 + $0x6e0] sm:$0xff]
        %v517 = vld [vmem:[%s238 + $0x6e8] sm:$0xff]
        %v518 = vld [vmem:[%s238 + $0x6f0] sm:$0xff]
        %v519 = vld [vmem:[%s238 + $0x6f8] sm:$0xff]
        %v520 = vld [vmem:[%s238 + $0x700] sm:$0xff]
        %v521 = vld [vmem:[%s238 + $0x708] sm:$0xff]
        %v522 = vld [vmem:[%s238 + $0x710] sm:$0xff]
        %v523 = vld [vmem:[%s238 + $0x718] sm:$0xff]
        %v524 = vld [vmem:[%s238 + $0x720] sm:$0xff]
        %v525 = vld [vmem:[%s238 + $0x728] sm:$0xff]
        %v526 = vld [vmem:[%s238 + $0x730] sm:$0xff]
        %v527 = vld [vmem:[%s238 + $0x738] sm:$0xff]
        %v528 = vld [vmem:[%s238 + $0x740] sm:$0xff]
        %v529 = vld [vmem:[%s238 + $0x748] sm:$0xff]
        %v530 = vld [vmem:[%s238 + $0x750] sm:$0xff]
        %v531 = vld [vmem:[%s238 + $0x758] sm:$0xff]
        %v532 = vld [vmem:[%s238 + $0x760] sm:$0xff]
        %v533 = vld [vmem:[%s238 + $0x768] sm:$0xff]
        %v534 = vld [vmem:[%s238 + $0x770] sm:$0xff]
        %v535 = vld [vmem:[%s238 + $0x778] sm:$0xff]
        %v536 = vld [vmem:[%s238 + $0x780] sm:$0xff]
        %v537 = vld [vmem:[%s238 + $0x788] sm:$0xff]
        %v538 = vld [vmem:[%s238 + $0x790] sm:$0xff]
        %v539 = vld [vmem:[%s238 + $0x798] sm:$0xff]
        %v540 = vld [vmem:[%s238 + $0x7a0] sm:$0xff]
        %v541 = vld [vmem:[%s238 + $0x7a8] sm:$0xff]
        %v542 = vld [vmem:[%s238 + $0x7b0] sm:$0xff]
        %v543 = vld [vmem:[%s238 + $0x7b8] sm:$0xff]
        %v544 = vld [vmem:[%s238 + $0x7c0] sm:$0xff]
        %v545 = vld [vmem:[%s238 + $0x7c8] sm:$0xff]
        %v546 = vld [vmem:[%s238 + $0x7d0] sm:$0xff]
        %v547 = vld [vmem:[%s238 + $0x7d8] sm:$0xff]
        %v548 = vld [vmem:[%s238 + $0x7e0] sm:$0xff]
        %v549 = vld [vmem:[%s238 + $0x7e8] sm:$0xff]
        %v550 = vld [vmem:[%s238 + $0x7f0] sm:$0xff]
        %v551 = vld [vmem:[%s238 + $0x7f8] sm:$0xff]
        %552 = vmatprep.subr.mxu0 %v297
        %553 = vmatpush1.msra.mxu0 %v296
        %554 = vmatprep.subr.mxu0 %v301
        %555 = vmatpush1.msra.mxu0 %v300
        %556 = vmatprep.subr.mxu0 %v305
        %557 = vmatpush1.msra.mxu0 %v304
        %558 = vmatprep.subr.mxu0 %v309
        %559 = vmatpush1.msra.mxu0 %v308
        %560 = vmatprep.subr.mxu0 %v313
        %561 = vmatpush1.msra.mxu0 %v312
        %562 = vmatprep.subr.mxu0 %v317
        %563 = vmatpush1.msra.mxu0 %v316
        %564 = vmatprep.subr.mxu0 %v321
        %565 = vmatpush1.msra.mxu0 %v320
        %566 = vmatprep.subr.mxu0 %v325
        %567 = vmatpush1.msra.mxu0 %v324
        %568 = vmatprep.subr.mxu0 %v329
        %569 = vmatpush1.msra.mxu0 %v328
        %570 = vmatprep.subr.mxu0 %v333
        %571 = vmatpush1.msra.mxu0 %v332
        %572 = vmatprep.subr.mxu0 %v337
        %573 = vmatpush1.msra.mxu0 %v336
        %574 = vmatprep.subr.mxu0 %v341
        %575 = vmatpush1.msra.mxu0 %v340
        %576 = vmatprep.subr.mxu0 %v345
        %577 = vmatpush1.msra.mxu0 %v344
        %578 = vmatprep.subr.mxu0 %v349
        %579 = vmatpush1.msra.mxu0 %v348
        %580 = vmatprep.subr.mxu0 %v353
        %581 = vmatpush1.msra.mxu0 %v352
        %582 = vmatprep.subr.mxu0 %v357
        %583 = vmatpush1.msra.mxu0 %v356
        %584 = vmatprep.subr.mxu0 %v361
        %585 = vmatpush1.msra.mxu0 %v360
        %586 = vmatprep.subr.mxu0 %v365
        %587 = vmatpush1.msra.mxu0 %v364
        %588 = vmatprep.subr.mxu0 %v369
        %589 = vmatpush1.msra.mxu0 %v368
        %590 = vmatprep.subr.mxu0 %v373
        %591 = vmatpush1.msra.mxu0 %v372
        %592 = vmatprep.subr.mxu0 %v377
        %593 = vmatpush1.msra.mxu0 %v376
        %594 = vmatprep.subr.mxu0 %v381
        %595 = vmatpush1.msra.mxu0 %v380
        %596 = vmatprep.subr.mxu0 %v385
        %597 = vmatpush1.msra.mxu0 %v384
        %598 = vmatprep.subr.mxu0 %v389
        %599 = vmatpush1.msra.mxu0 %v388
        %600 = vmatprep.subr.mxu0 %v393
        %601 = vmatpush1.msra.mxu0 %v392
        %602 = vmatprep.subr.mxu0 %v397
        %603 = vmatpush1.msra.mxu0 %v396
        %604 = vmatprep.subr.mxu0 %v401
        %605 = vmatpush1.msra.mxu0 %v400
        %606 = vmatprep.subr.mxu0 %v405
        %607 = vmatpush1.msra.mxu0 %v404
        %608 = vmatprep.subr.mxu0 %v409
        %609 = vmatpush1.msra.mxu0 %v408
        %610 = vmatprep.subr.mxu0 %v413
        %611 = vmatpush1.msra.mxu0 %v412
        %612 = vmatprep.subr.mxu0 %v417
        %613 = vmatpush1.msra.mxu0 %v416
        %614 = vmatprep.subr.mxu0 %v421
        %615 = vmatpush1.msra.mxu0 %v420
        %616 = vmatprep.mubr.f32.mxu0 %v293
        %617 = vmatmul.mubr.f32.gmra.mrb[0].mxu0 %v292
        %v618 = vpop.f32.mrb[0].mxu0
        %v619 = vadd.f32 0.0, %v618
        %v620 = vpop.f32.mrb[0].mxu0
        %v621 = vadd.f32 0.0, %v620
        %622 = vdwg.mxu0
        %623 = vmatprep.subr.mxu0 %v425
        %624 = vmatpush1.msra.mxu0 %v424
        %625 = vmatprep.subr.mxu0 %v429
        %626 = vmatpush1.msra.mxu0 %v428
        %627 = vmatprep.subr.mxu0 %v433
        %628 = vmatpush1.msra.mxu0 %v432
        %629 = vmatprep.subr.mxu0 %v437
        %630 = vmatpush1.msra.mxu0 %v436
        %631 = vmatprep.subr.mxu0 %v441
        %632 = vmatpush1.msra.mxu0 %v440
        %633 = vmatprep.subr.mxu0 %v445
        %634 = vmatpush1.msra.mxu0 %v444
        %635 = vmatprep.subr.mxu0 %v449
        %636 = vmatpush1.msra.mxu0 %v448
        %637 = vmatprep.subr.mxu0 %v453
        %638 = vmatpush1.msra.mxu0 %v452
        %639 = vmatprep.subr.mxu0 %v457
        %640 = vmatpush1.msra.mxu0 %v456
        %641 = vmatprep.subr.mxu0 %v461
        %642 = vmatpush1.msra.mxu0 %v460
        %643 = vmatprep.subr.mxu0 %v465
        %644 = vmatpush1.msra.mxu0 %v464
        %645 = vmatprep.subr.mxu0 %v469
        %646 = vmatpush1.msra.mxu0 %v468
        %647 = vmatprep.subr.mxu0 %v473
        %648 = vmatpush1.msra.mxu0 %v472
        %649 = vmatprep.subr.mxu0 %v477
        %650 = vmatpush1.msra.mxu0 %v476
        %651 = vmatprep.subr.mxu0 %v481
        %652 = vmatpush1.msra.mxu0 %v480
        %653 = vmatprep.subr.mxu0 %v485
        %654 = vmatpush1.msra.mxu0 %v484
        %655 = vmatprep.subr.mxu0 %v489
        %656 = vmatpush1.msra.mxu0 %v488
        %657 = vmatprep.subr.mxu0 %v493
        %658 = vmatpush1.msra.mxu0 %v492
        %659 = vmatprep.subr.mxu0 %v497
        %660 = vmatpush1.msra.mxu0 %v496
        %661 = vmatprep.subr.mxu0 %v501
        %662 = vmatpush1.msra.mxu0 %v500
        %663 = vmatprep.subr.mxu0 %v505
        %664 = vmatpush1.msra.mxu0 %v504
        %665 = vmatprep.subr.mxu0 %v509
        %666 = vmatpush1.msra.mxu0 %v508
        %667 = vmatprep.subr.mxu0 %v513
        %668 = vmatpush1.msra.mxu0 %v512
        %669 = vmatprep.subr.mxu0 %v517
        %670 = vmatpush1.msra.mxu0 %v516
        %671 = vmatprep.subr.mxu0 %v521
        %672 = vmatpush1.msra.mxu0 %v520
        %673 = vmatprep.subr.mxu0 %v525
        %674 = vmatpush1.msra.mxu0 %v524
        %675 = vmatprep.subr.mxu0 %v529
        %676 = vmatpush1.msra.mxu0 %v528
        %677 = vmatprep.subr.mxu0 %v533
        %678 = vmatpush1.msra.mxu0 %v532
        %679 = vmatprep.subr.mxu0 %v537
        %680 = vmatpush1.msra.mxu0 %v536
        %681 = vmatprep.subr.mxu0 %v541
        %682 = vmatpush1.msra.mxu0 %v540
        %683 = vmatprep.subr.mxu0 %v545
        %684 = vmatpush1.msra.mxu0 %v544
        %685 = vmatprep.subr.mxu0 %v549
        %686 = vmatpush1.msra.mxu0 %v548
        %687 = vmatprep.mubr.f32.mxu0 %v295
        %688 = vmatmul.mubr.f32.gmra.mrb[0].mxu0 %v294
        %v689 = vpop.f32.mrb[0].mxu0
        %v690 = vadd.f32 %v619, %v689
        %v691 = vpop.f32.mrb[0].mxu0
        %v692 = vadd.f32 %v621, %v691
        %693 = vdwg.mxu0
        %694 = vmatprep.subr.mxu0 %v299
        %695 = vmatpush1.msra.mxu0 %v298
        %696 = vmatprep.subr.mxu0 %v303
        %697 = vmatpush1.msra.mxu0 %v302
        %698 = vmatprep.subr.mxu0 %v307
        %699 = vmatpush1.msra.mxu0 %v306
        %700 = vmatprep.subr.mxu0 %v311
        %701 = vmatpush1.msra.mxu0 %v310
        %702 = vmatprep.subr.mxu0 %v315
        %703 = vmatpush1.msra.mxu0 %v314
        %704 = vmatprep.subr.mxu0 %v319
        %705 = vmatpush1.msra.mxu0 %v318
        %706 = vmatprep.subr.mxu0 %v323
        %707 = vmatpush1.msra.mxu0 %v322
        %708 = vmatprep.subr.mxu0 %v327
        %709 = vmatpush1.msra.mxu0 %v326
        %710 = vmatprep.subr.mxu0 %v331
        %711 = vmatpush1.msra.mxu0 %v330
        %712 = vmatprep.subr.mxu0 %v335
        %713 = vmatpush1.msra.mxu0 %v334
        %714 = vmatprep.subr.mxu0 %v339
        %715 = vmatpush1.msra.mxu0 %v338
        %716 = vmatprep.subr.mxu0 %v343
        %717 = vmatpush1.msra.mxu0 %v342
        %718 = vmatprep.subr.mxu0 %v347
        %719 = vmatpush1.msra.mxu0 %v346
        %720 = vmatprep.subr.mxu0 %v351
        %721 = vmatpush1.msra.mxu0 %v350
        %722 = vmatprep.subr.mxu0 %v355
        %723 = vmatpush1.msra.mxu0 %v354
        %724 = vmatprep.subr.mxu0 %v359
        %725 = vmatpush1.msra.mxu0 %v358
        %726 = vmatprep.subr.mxu0 %v363
        %727 = vmatpush1.msra.mxu0 %v362
        %728 = vmatprep.subr.mxu0 %v367
        %729 = vmatpush1.msra.mxu0 %v366
        %730 = vmatprep.subr.mxu0 %v371
        %731 = vmatpush1.msra.mxu0 %v370
        %732 = vmatprep.subr.mxu0 %v375
        %733 = vmatpush1.msra.mxu0 %v374
        %734 = vmatprep.subr.mxu0 %v379
        %735 = vmatpush1.msra.mxu0 %v378
        %736 = vmatprep.subr.mxu0 %v383
        %737 = vmatpush1.msra.mxu0 %v382
        %738 = vmatprep.subr.mxu0 %v387
        %739 = vmatpush1.msra.mxu0 %v386
        %740 = vmatprep.subr.mxu0 %v391
        %741 = vmatpush1.msra.mxu0 %v390
        %742 = vmatprep.subr.mxu0 %v395
        %743 = vmatpush1.msra.mxu0 %v394
        %744 = vmatprep.subr.mxu0 %v399
        %745 = vmatpush1.msra.mxu0 %v398
        %746 = vmatprep.subr.mxu0 %v403
        %747 = vmatpush1.msra.mxu0 %v402
        %748 = vmatprep.subr.mxu0 %v407
        %749 = vmatpush1.msra.mxu0 %v406
        %750 = vmatprep.subr.mxu0 %v411
        %751 = vmatpush1.msra.mxu0 %v410
        %752 = vmatprep.subr.mxu0 %v415
        %753 = vmatpush1.msra.mxu0 %v414
        %754 = vmatprep.subr.mxu0 %v419
        %755 = vmatpush1.msra.mxu0 %v418
        %756 = vmatprep.subr.mxu0 %v423
        %757 = vmatpush1.msra.mxu0 %v422
        %758 = vmatprep.mubr.f32.mxu0 %v293
        %759 = vmatmul.mubr.f32.gmra.mrb[0].mxu0 %v292
        %v760 = vpop.f32.mrb[0].mxu0
        %v761 = vadd.f32 0.0, %v760
        %v762 = vpop.f32.mrb[0].mxu0
        %v763 = vadd.f32 0.0, %v762
        %764 = vdwg.mxu0
        %765 = vmatprep.subr.mxu0 %v427
        %766 = vmatpush1.msra.mxu0 %v426
        %767 = vmatprep.subr.mxu0 %v431
        %768 = vmatpush1.msra.mxu0 %v430
        %769 = vmatprep.subr.mxu0 %v435
        %770 = vmatpush1.msra.mxu0 %v434
        %771 = vmatprep.subr.mxu0 %v439
        %772 = vmatpush1.msra.mxu0 %v438
        %773 = vmatprep.subr.mxu0 %v443
        %774 = vmatpush1.msra.mxu0 %v442
        %775 = vmatprep.subr.mxu0 %v447
        %776 = vmatpush1.msra.mxu0 %v446
        %777 = vmatprep.subr.mxu0 %v451
        %778 = vmatpush1.msra.mxu0 %v450
        %779 = vmatprep.subr.mxu0 %v455
        %780 = vmatpush1.msra.mxu0 %v454
        %781 = vmatprep.subr.mxu0 %v459
        %782 = vmatpush1.msra.mxu0 %v458
        %783 = vmatprep.subr.mxu0 %v463
        %784 = vmatpush1.msra.mxu0 %v462
        %785 = vmatprep.subr.mxu0 %v467
        %786 = vmatpush1.msra.mxu0 %v466
        %787 = vmatprep.subr.mxu0 %v471
        %788 = vmatpush1.msra.mxu0 %v470
        %789 = vmatprep.subr.mxu0 %v475
        %790 = vmatpush1.msra.mxu0 %v474
        %791 = vmatprep.subr.mxu0 %v479
        %792 = vmatpush1.msra.mxu0 %v478
        %793 = vmatprep.subr.mxu0 %v483
        %794 = vmatpush1.msra.mxu0 %v482
        %795 = vmatprep.subr.mxu0 %v487
        %796 = vmatpush1.msra.mxu0 %v486
        %797 = vmatprep.subr.mxu0 %v491
        %798 = vmatpush1.msra.mxu0 %v490
        %799 = vmatprep.subr.mxu0 %v495
        %800 = vmatpush1.msra.mxu0 %v494
        %801 = vmatprep.subr.mxu0 %v499
        %802 = vmatpush1.msra.mxu0 %v498
        %803 = vmatprep.subr.mxu0 %v503
        %804 = vmatpush1.msra.mxu0 %v502
        %805 = vmatprep.subr.mxu0 %v507
        %806 = vmatpush1.msra.mxu0 %v506
        %807 = vmatprep.subr.mxu0 %v511
        %808 = vmatpush1.msra.mxu0 %v510
        %809 = vmatprep.subr.mxu0 %v515
        %810 = vmatpush1.msra.mxu0 %v514
        %811 = vmatprep.subr.mxu0 %v519
        %812 = vmatpush1.msra.mxu0 %v518
        %813 = vmatprep.subr.mxu0 %v523
        %814 = vmatpush1.msra.mxu0 %v522
        %815 = vmatprep.subr.mxu0 %v527
        %816 = vmatpush1.msra.mxu0 %v526
        %817 = vmatprep.subr.mxu0 %v531
        %818 = vmatpush1.msra.mxu0 %v530
        %819 = vmatprep.subr.mxu0 %v535
        %820 = vmatpush1.msra.mxu0 %v534
        %821 = vmatprep.subr.mxu0 %v539
        %822 = vmatpush1.msra.mxu0 %v538
        %823 = vmatprep.subr.mxu0 %v543
        %824 = vmatpush1.msra.mxu0 %v542
        %825 = vmatprep.subr.mxu0 %v547
        %826 = vmatpush1.msra.mxu0 %v546
        %827 = vmatprep.subr.mxu0 %v551
        %828 = vmatpush1.msra.mxu0 %v550
        %829 = vmatprep.mubr.f32.mxu0 %v295
        %830 = vmatmul.mubr.f32.gmra.mrb[0].mxu0 %v294
        %v831 = vpop.f32.mrb[0].mxu0
        %v832 = vadd.f32 %v761, %v831
        %v833 = vpop.f32.mrb[0].mxu0
        %v834 = vadd.f32 %v763, %v833
        %835 = vdwg.mxu0
        %v836 = vadd.f32 %v288, %v690
        %v837 = vadd.f32 %v289, %v692
        %v838 = vadd.f32 %v290, %v832
        %v839 = vadd.f32 %v291, %v834
        %840 = vst [vmem:[#allocation2] sm:$0xff] %v836
        %841 = vst [vmem:[#allocation2 + $0x8] sm:$0xff] %v837
        %842 = vst [vmem:[#allocation2 + $0x10] sm:$0xff] %v838
        %843 = vst [vmem:[#allocation2 + $0x18] sm:$0xff] %v839
        // Predicated region
        $region49: #{_lambda_.5} parent=31 // pred_check
          %p844 = pneg %p280
        $region50: #{_lambda_.5} parent=31 // pred_check_branch
          %846 = sbr.rel (%p844) target = $region52
        $region51: #{_lambda_.5} parent=31 // pred_region
          %v847 = vld [vmem:[#allocation2] sm:$0xff]
          %v848 = vld [vmem:[#allocation2 + $0x8] sm:$0xff]
          %v849 = vld [vmem:[#allocation2 + $0x10] sm:$0xff]
          %v850 = vld [vmem:[#allocation2 + $0x18] sm:$0xff]
          %v851 = vld [vmem:[%s247] sm:$0xf]
          %v853 = vlaneseq
          %v854 = vshrl.u32 %v853, 7
          %v855 = vsub.s32 0, %v854
          %v856 = vrot.slane %v851, %v855
          %v857 = vlaneseq
          %v858 = vshrl.u32 %v857, 7
          %v859 = vsub.s32 1, %v858
          %v860 = vrot.slane %v851, %v859
          %v861 = vlaneseq
          %v862 = vshrl.u32 %v861, 7
          %v863 = vsub.s32 2, %v862
          %v864 = vrot.slane %v851, %v863
          %v865 = vlaneseq
          %v866 = vshrl.u32 %v865, 7
          %v867 = vsub.s32 3, %v866
          %v868 = vrot.slane %v851, %v867
          %v873 = vadd.f32 %v847, %v856
          %v874 = vadd.f32 %v848, %v860
          %v875 = vadd.f32 %v849, %v864
          %v876 = vadd.f32 %v850, %v868
          %v877 = vmax.f32 %v873, 0.0
          %v878 = vmax.f32 %v874, 0.0
          %v879 = vmax.f32 %v875, 0.0
          %v880 = vmax.f32 %v876, 0.0
          %881 = vst [vmem:[%s274] sm:$0xff] %v877
          %882 = vst [vmem:[%s274 + $0x8] sm:$0xff] %v878
          %883 = vst [vmem:[%s274 + $0x10] sm:$0xff] %v879
          %884 = vst [vmem:[%s274 + $0x18] sm:$0xff] %v880
        $region52: #{_lambda_.5} parent=31 // pred_fallthru
          _
        %s885 = sand.u32 %s132, 1
        %s886 = scalar_lea.sflag [#allocation5], %s885
        %s887 = sand.u32 %s132, 1
        %s888 = smul.addr %s887, 32
        %s889 = scalar_lea.vmem [#allocation9], %s888
        // Predicated region
        $region53: #{_lambda_.5} parent=31 // pred_check
          %p890 = pneg %p142
        $region54: #{_lambda_.5} parent=31 // pred_check_branch
          %892 = sbr.rel (%p890) target = $region56
        $region55: #{_lambda_.5} parent=31 // pred_region
          %s893 = smul.u32 4, %s27
          %s895 = ssub.s32 512, 512
          %896 = vsyncadd %s886, %s895
          %s897 = smul.addr %s26, 32
          %s898 = sadd.s32 %s893, %s897
          %s899 = smul.addr %s898, 128
          %s900 = scalar_lea.hbm %s3, %s899
          %s902 = sshll.u32 %s889, 4
          %s903 = int_to_ptr.vmem [resolvable:$true] %s902
          %905 = dma.vmem_to_hbm [thread:$0]  %s903, 512, %s900, %s886
        $region56: #{_lambda_.5} parent=31 // pred_fallthru
          _
      $region32: #{_lambda_.5} parent=5 // pred_fallthru
        _
      %p906 = scmp.le.s32.totalorder 2, %s16
      // Predicated region
      $region57: #{_lambda_.5} parent=5 // pred_check
        %p907 = pneg %p906
      $region58: #{_lambda_.5} parent=5 // pred_check_branch
        %909 = sbr.rel (%p907) target = $region60
      $region59: #{_lambda_.5} parent=5 // pred_region
        %s910 = ssub.s32 %s16, 2
        // Predicated region
        $region61: #{_lambda_.5} parent=59 // pred_check
          %p911 = pneg %p148
        $region62: #{_lambda_.5} parent=59 // pred_check_branch
          %913 = sbr.rel (%p911) target = $region64
        $region63: #{_lambda_.5} parent=59 // pred_region
          %s914 = sand.u32 %s133, 1
          %s915 = scalar_lea.sflag [#allocation5], %s914
          %s916 = sand.u32 %s133, 1
          %s917 = smul.addr %s916, 32
          %s918 = scalar_lea.vmem [#allocation9], %s917
          %919 = dma.done %s915, 512
        $region64: #{_lambda_.5} parent=59 // pred_fallthru
          _
      $region60: #{_lambda_.5} parent=5 // pred_fallthru
        _
    $region6: #{_lambda_.5} parent=1 // loop_footer
      %s20 = sadd.s32 1, %s16
    $region7: #{_lambda_.5} parent=1 // loop_footer_branch
      %15 = sbr.rel target = $region3
    $region8: #{_lambda_.5} parent=1 // loop_exit
      _
    %920 = vsyncpa [#allocation4], 1
    %s921 = scalar_lea.sflag [#allocation4], 1
    %922 = vsyncpa %s921, 1
    %923 = vsyncpa [#allocation7], 1
    %s924 = scalar_lea.sflag [#allocation7], 1
    %925 = vsyncpa %s924, 1
    %926 = vsyncpa [#allocation5], 1
    %s927 = scalar_lea.sflag [#allocation5], 1
    %928 = vsyncpa %s927, 1

// kernel: _lambda_.4
$region0: #{_lambda_.4}
  #allocation0 [shape = 'u32[]', space=smem, size = 0x4, offset = 0x4, fixed_abs, tag = 'smem constant byte address 0x4 - core index']
  #allocation1 [shape = 'u32[144,128]{1,0:T(1,128)}', space=vmem, size = 0x12000, scoped, tag = 'internal scratch']
  #allocation2 [shape = 'f32[8,512]{1,0:T(8,128)}', space=vmem, size = 0x4000, scoped, tag = 'scratch operand']
  %s0 = inlined_call_operand.hbm [shape: f32[8,1024], index: 0, kind: input, shape index: {}]
  %s1 = inlined_call_operand.hbm [shape: f32[1024,512], index: 1, kind: input, shape index: {}]
  %s2 = inlined_call_operand.hbm [shape: f32[1,512], index: 2, kind: input, shape index: {}]
  %s3 = inlined_call_operand.hbm [shape: f32[8,512], index: 3, kind: output, shape index: {}]
  %s4 = sld [smem:[#allocation0]]
  $region65: #{_lambda_.4} parent=0
    _
  %s6 = ssub.s32 1, %s4
  %s7 = scalar_select 0, %s6, %s4
  $region1: #{_lambda_.4} parent=0
    #allocation3 [shape = 'u8[32768]{0}', space=vmem, size = 0x8000, scoped, tag = 'input window, operand 0']
    #allocation4 [shape = 's32[2]{0}', space=sflag, size = 0x8, scoped, tag = 'scoped memory for _lambda_.4']
    #allocation5 [shape = 's32[2]{0}', space=sflag, size = 0x8, scoped, tag = 'scoped memory for _lambda_.4']
    #allocation6 [shape = 'u8[2097152]{0}', space=vmem, size = 0x200000, scoped, tag = 'input window, operand 1']
    #allocation7 [shape = 's32[2]{0}', space=sflag, size = 0x8, scoped, tag = 'scoped memory for _lambda_.4']
    #allocation8 [shape = 'u8[2048]{0}', space=vmem, size = 0x800, scoped, tag = 'input window, operand 2, single buffered']
    #allocation9 [shape = 'u8[16384]{0}', space=vmem, size = 0x4000, scoped, tag = 'output window, operand 0, single buffered']
    %8 = vsyncpa [#allocation4], 0
    %s9 = scalar_lea.sflag [#allocation4], 1
    %10 = vsyncpa %s9, 0
    %11 = vsyncpa [#allocation7], 0
    %s12 = scalar_lea.sflag [#allocation7], 1
    %13 = vsyncpa %s12, 0
    %14 = vsyncpa [#allocation5], 0
    loop: start=0, step=1, limit=4
    $region2: #{_lambda_.4} parent=1 // loop_pre_header
      _
    $region3: #{_lambda_.4} parent=1 // loop_header
      %s16 = sphi 0, %s20
      %p17 = scmp.ge.s32.totalorder %s16, 4
      %s23 = sphi 0, %s42
      %s24 = sphi 0, %s38
      %s25 = sphi 0, %s34
      %s26 = sphi 0, %s23
      %s27 = sphi 0, %s24
      %s28 = sphi 0, %s25
      %s29 = sphi 0, %s26
      %s30 = sphi 0, %s27
      %s31 = sphi 0, %s28
      %s47 = sphi 0, %s49
      %s50 = sphi 0, %s47
      %s51 = sphi 0, %s50
      %s67 = sphi 0, %s51
      %s75 = sphi 0, %s77
      %s78 = sphi 0, %s75
      %s79 = sphi 0, %s78
      %s95 = sphi 0, %s79
      %s101 = sphi 0, %s103
      %s104 = sphi 0, %s101
      %s105 = sphi 0, %s104
      %s121 = sphi 0, %s105
      %s129 = sphi 0, %s131
      %s132 = sphi 0, %s129
      %s133 = sphi 0, %s132
      %s149 = sphi 0, %s133
    $region4: #{_lambda_.4} parent=1 // loop_header_branch
      %19 = sbr.rel (%p17) target = $region8
    $region5: #{_lambda_.4} parent=1 // loop_body
      %s21 = ssub.s32 %s16, 1
      %s22 = ssub.s32 %s16, 2
      %s32 = sadd.s32 1, %s25
      %p33 = scmp.ge.s32.totalorder %s32, 2
      %s34 = scalar_select %p33, 0, %s32
      %s35 = sadd.s32 1, %s24
      %s36 = scalar_select %p33, %s35, %s24
      %p37 = scmp.ge.s32.totalorder %s36, 1
      %s38 = scalar_select %p37, 0, %s36
      %s39 = sadd.s32 1, %s23
      %s40 = scalar_select %p37, %s39, %s23
      %p41 = scmp.ge.s32.totalorder %s40, 1
      %s42 = scalar_select %p41, 0, %s40
      %s43 = ssub.s32 %s23, %s42
      %s44 = ssub.s32 %s25, %s34
      %s45 = sor.u32 %s43, %s44
      %p46 = scmp.eq.s32.totalorder %s45, 0
      %s48 = sadd.s32 %s47, 1
      %s49 = scalar_select %p46, %s47, %s48
      %p52 = pneg %p46
      %p53 = scmp.eq.s32.totalorder %s16, 1
      %p54 = por %p52, %p53
      %p55 = scmp.ne.s32.totalorder %s47, %s50
      %p56 = scmp.eq.s32.totalorder %s16, 0
      %p57 = por %p55, %p56
      %p58 = scmp.ne.s32.totalorder %s47, %s50
      %p59 = scmp.eq.s32.totalorder %s21, 1
      %p60 = por %p58, %p59
      %p61 = scmp.ne.s32.totalorder %s50, %s51
      %p62 = scmp.eq.s32.totalorder %s21, 0
      %p63 = por %p61, %p62
      %p64 = scmp.ne.s32.totalorder %s50, %s51
      %p65 = scmp.eq.s32.totalorder %s22, 1
      %p66 = por %p64, %p65
      %p68 = scmp.ne.s32.totalorder %s51, %s67
      %p69 = scmp.eq.s32.totalorder %s22, 0
      %p70 = por %p68, %p69
      %s71 = ssub.s32 %s25, %s34
      %s72 = ssub.s32 %s24, %s38
      %s73 = sor.u32 %s71, %s72
      %p74 = scmp.eq.s32.totalorder %s73, 0
      %s76 = sadd.s32 %s75, 1
      %s77 = scalar_select %p74, %s75, %s76
      %p80 = pneg %p74
      %p81 = scmp.eq.s32.totalorder %s16, 1
      %p82 = por %p80, %p81
      %p83 = scmp.ne.s32.totalorder %s75, %s78
      %p84 = scmp.eq.s32.totalorder %s16, 0
      %p85 = por %p83, %p84
      %p86 = scmp.ne.s32.totalorder %s75, %s78
      %p87 = scmp.eq.s32.totalorder %s21, 1
      %p88 = por %p86, %p87
      %p89 = scmp.ne.s32.totalorder %s78, %s79
      %p90 = scmp.eq.s32.totalorder %s21, 0
      %p91 = por %p89, %p90
      %p92 = scmp.ne.s32.totalorder %s78, %s79
      %p93 = scmp.eq.s32.totalorder %s22, 1
      %p94 = por %p92, %p93
      %p96 = scmp.ne.s32.totalorder %s79, %s95
      %p97 = scmp.eq.s32.totalorder %s22, 0
      %p98 = por %p96, %p97
      %s99 = ssub.s32 %s24, %s38
      %p100 = scmp.eq.s32.totalorder %s99, 0
      %s102 = sadd.s32 %s101, 1
      %s103 = scalar_select %p100, %s101, %s102
      %p106 = pneg %p100
      %p107 = scmp.eq.s32.totalorder %s16, 1
      %p108 = por %p106, %p107
      %p109 = scmp.ne.s32.totalorder %s101, %s104
      %p110 = scmp.eq.s32.totalorder %s16, 0
      %p111 = por %p109, %p110
      %p112 = scmp.ne.s32.totalorder %s101, %s104
      %p113 = scmp.eq.s32.totalorder %s21, 1
      %p114 = por %p112, %p113
      %p115 = scmp.ne.s32.totalorder %s104, %s105
      %p116 = scmp.eq.s32.totalorder %s21, 0
      %p117 = por %p115, %p116
      %p118 = scmp.ne.s32.totalorder %s104, %s105
      %p119 = scmp.eq.s32.totalorder %s22, 1
      %p120 = por %p118, %p119
      %p122 = scmp.ne.s32.totalorder %s105, %s121
      %p123 = scmp.eq.s32.totalorder %s22, 0
      %p124 = por %p122, %p123
      %s125 = ssub.s32 %s23, %s42
      %s126 = ssub.s32 %s24, %s38
      %s127 = sor.u32 %s125, %s126
      %p128 = scmp.eq.s32.totalorder %s127, 0
      %s130 = sadd.s32 %s129, 1
      %s131 = scalar_select %p128, %s129, %s130
      %p134 = pneg %p128
      %p135 = scmp.eq.s32.totalorder %s16, 1
      %p136 = por %p134, %p135
      %p137 = scmp.ne.s32.totalorder %s129, %s132
      %p138 = scmp.eq.s32.totalorder %s16, 0
      %p139 = por %p137, %p138
      %p140 = scmp.ne.s32.totalorder %s129, %s132
      %p141 = scmp.eq.s32.totalorder %s21, 1
      %p142 = por %p140, %p141
      %p143 = scmp.ne.s32.totalorder %s132, %s133
      %p144 = scmp.eq.s32.totalorder %s21, 0
      %p145 = por %p143, %p144
      %p146 = scmp.ne.s32.totalorder %s132, %s133
      %p147 = scmp.eq.s32.totalorder %s22, 1
      %p148 = por %p146, %p147
      %p150 = scmp.ne.s32.totalorder %s133, %s149
      %p151 = scmp.eq.s32.totalorder %s22, 0
      %p152 = por %p150, %p151
      %p153 = scmp.le.s32.totalorder 1, %s16
      %p154 = scmp.lt.s32.totalorder %s16, 3
      %p155 = pnand %p153, %p154
      %p156 = pneg %p155
      // Predicated region
      $region9: #{_lambda_.4} parent=5 // pred_check
        _
      $region10: #{_lambda_.4} parent=5 // pred_check_branch
        %158 = sbr.rel (%p155) target = $region12
      $region11: #{_lambda_.4} parent=5 // pred_region
        %s159 = ssub.s32 %s16, 1
        // Predicated region
        $region13: #{_lambda_.4} parent=11 // pred_check
          %p160 = pneg %p117
        $region14: #{_lambda_.4} parent=11 // pred_check_branch
          %162 = sbr.rel (%p160) target = $region16
        $region15: #{_lambda_.4} parent=11 // pred_region
          %s163 = smul.u32 4, %s27
          %s165 = ssub.s32 64, 64
          %166 = vsyncadd [#allocation7], %s165
          %s167 = smul.addr %s163, 16
          %s168 = scalar_lea.hbm %s2, %s167
          %s170 = sshll.u32 [#allocation8], 4
          %s171 = int_to_ptr.vmem [resolvable:$true] %s170
          %173 = dma.hbm_to_vmem [thread:$0]  %s168, 64, %s171, [#allocation7]
        $region16: #{_lambda_.4} parent=11 // pred_fallthru
          _
      $region12: #{_lambda_.4} parent=5 // pred_fallthru
        _
      %p174 = scmp.lt.s32.totalorder %s16, 2
      // Predicated region
      $region17: #{_lambda_.4} parent=5 // pred_check
        %p175 = pneg %p174
      $region18: #{_lambda_.4} parent=5 // pred_check_branch
        %177 = sbr.rel (%p175) target = $region20
      $region19: #{_lambda_.4} parent=5 // pred_region
        // Predicated region
        $region21: #{_lambda_.4} parent=19 // pred_check
          %p178 = pneg %p57
        $region22: #{_lambda_.4} parent=19 // pred_check_branch
          %180 = sbr.rel (%p178) target = $region24
        $region23: #{_lambda_.4} parent=19 // pred_region
          %s181 = sand.u32 %s47, 1
          %s182 = scalar_lea.sflag [#allocation4], %s181
          %s183 = sand.u32 %s47, 1
          %s184 = smul.addr %s183, 32
          %s185 = scalar_lea.vmem [#allocation3], %s184
          %s186 = smul.u32 4, %s25
          %s188 = ssub.s32 512, 512
          %189 = vsyncadd %s182, %s188
          %s190 = smul.addr %s23, 8
          %s191 = sadd.s32 %s186, %s190
          %s192 = smul.addr %s191, 128
          %s193 = scalar_lea.hbm %s0, %s192
          %s195 = sshll.u32 %s185, 4
          %s196 = int_to_ptr.vmem [resolvable:$true] %s195
          %198 = dma.hbm_to_vmem [thread:$0]  %s193, 512, %s196, %s182
        $region24: #{_lambda_.4} parent=19 // pred_fallthru
          _
        // Predicated region
        $region25: #{_lambda_.4} parent=19 // pred_check
          %p199 = pneg %p85
        $region26: #{_lambda_.4} parent=19 // pred_check_branch
          %201 = sbr.rel (%p199) target = $region28
        $region27: #{_lambda_.4} parent=19 // pred_region
          %s202 = sand.u32 %s16, 1
          %s203 = scalar_lea.sflag [#allocation7], %s202
          %s204 = sand.u32 %s75, 1
          %s205 = smul.addr %s204, 2048
          %s206 = scalar_lea.vmem [#allocation6], %s205
          %s207 = smul.u32 64, %s25
          %s208 = smul.u32 4, %s24
          %s210 = ssub.s32 32768, 32768
          %211 = vsyncadd %s203, %s210
          %s212 = smul.addr %s207, 4
          %s213 = sadd.s32 %s208, %s212
          %s214 = smul.addr %s213, 128
          %s215 = scalar_lea.hbm %s1, %s214
          %s216 = sshll.u32 %s206, 4
          %s217 = int_to_ptr.vmem [resolvable:$true] %s216
          %222 = dma.hbm_to_vmem [thread:$0]  %s215, 32768, %s217, %s203, 512, 512, 32
        $region28: #{_lambda_.4} parent=19 // pred_fallthru
          _
      $region20: #{_lambda_.4} parent=5 // pred_fallthru
        _
      %p223 = scmp.le.s32.totalorder 1, %s16
      %p224 = scmp.lt.s32.totalorder %s16, 3
      %p225 = pnand %p223, %p224
      %p226 = pneg %p225
      // Predicated region
      $region29: #{_lambda_.4} parent=5 // pred_check
        _
      $region30: #{_lambda_.4} parent=5 // pred_check_branch
        %228 = sbr.rel (%p225) target = $region32
      $region31: #{_lambda_.4} parent=5 // pred_region
        %s229 = ssub.s32 %s16, 1
        %s230 = sand.u32 %s50, 1
        %s231 = scalar_lea.sflag [#allocation4], %s230
        %s232 = sand.u32 %s50, 1
        %s233 = smul.addr %s232, 32
        %s234 = scalar_lea.vmem [#allocation3], %s233
        // Predicated region
        $region33: #{_lambda_.4} parent=31 // pred_check
          %p235 = pneg %p63
        $region34: #{_lambda_.4} parent=31 // pred_check_branch
          %237 = sbr.rel (%p235) target = $region36
        $region35: #{_lambda_.4} parent=31 // pred_region
          %238 = dma.done %s231, 512
        $region36: #{_lambda_.4} parent=31 // pred_fallthru
          _
        %s239 = sand.u32 %s21, 1
        %s240 = scalar_lea.sflag [#allocation7], %s239
        %s241 = sand.u32 %s78, 1
        %s242 = smul.addr %s241, 2048
        %s243 = scalar_lea.vmem [#allocation6], %s242
        // Predicated region
        $region37: #{_lambda_.4} parent=31 // pred_check
          %p244 = pneg %p91
        $region38: #{_lambda_.4} parent=31 // pred_check_branch
          %246 = sbr.rel (%p244) target = $region40
        $region39: #{_lambda_.4} parent=31 // pred_region
          %247 = dma.done %s240, 32768
        $region40: #{_lambda_.4} parent=31 // pred_fallthru
          _
        // Predicated region
        $region41: #{_lambda_.4} parent=31 // pred_check
          %p248 = pneg %p117
        $region42: #{_lambda_.4} parent=31 // pred_check_branch
          %250 = sbr.rel (%p248) target = $region44
        $region43: #{_lambda_.4} parent=31 // pred_region
          %251 = dma.done [#allocation7], 64
        $region44: #{_lambda_.4} parent=31 // pred_fallthru
          _
        %s252 = sand.u32 %s50, 1
        %s253 = scalar_lea.sflag [#allocation4], %s252
        %s254 = sand.u32 %s50, 1
        %s255 = smul.addr %s254, 32
        %s256 = scalar_lea.vmem [#allocation3], %s255
        %p257 = pneg %p63
        %p258 = pneg %p60
        %s259 = sand.u32 %s21, 1
        %s260 = scalar_lea.sflag [#allocation7], %s259
        %s261 = sand.u32 %s78, 1
        %s262 = smul.addr %s261, 2048
        %s263 = scalar_lea.vmem [#allocation6], %s262
        %p264 = pneg %p91
        %p265 = pneg %p88
        %p266 = pneg %p117
        %p267 = pneg %p114
        %p268 = pneg %p145
        %p269 = pneg %p142
        %s270 = smul.u32 4, %s28
        %s271 = smul.u32 64, %s28
        %s272 = smul.u32 4, %s27
        %s273 = smul.u32 4, %s27
        %s274 = smul.u32 4, %s27
        %p275 = scmp.eq.s32.totalorder %s28, 0
        // Predicated region
        $region45: #{_lambda_.4} parent=31 // pred_check
          %p276 = pneg %p275
        $region46: #{_lambda_.4} parent=31 // pred_check_branch
          %278 = sbr.rel (%p276) target = $region48
        $region47: #{_lambda_.4} parent=31 // pred_region
          %279 = vst [vmem:[#allocation2] sm:$0xff] 0.0
          %280 = vst [vmem:[#allocation2 + $0x8] sm:$0xff] 0.0
          %281 = vst [vmem:[#allocation2 + $0x10] sm:$0xff] 0.0
          %282 = vst [vmem:[#allocation2 + $0x18] sm:$0xff] 0.0
        $region48: #{_lambda_.4} parent=31 // pred_fallthru
          _
        %v283 = vld [vmem:[#allocation2] sm:$0xff]
        %v284 = vld [vmem:[#allocation2 + $0x8] sm:$0xff]
        %v285 = vld [vmem:[#allocation2 + $0x10] sm:$0xff]
        %v286 = vld [vmem:[#allocation2 + $0x18] sm:$0xff]
        %v287 = vld [vmem:[%s234] sm:$0xff]
        %v288 = vld [vmem:[%s234 + $0x8] sm:$0xff]
        %v289 = vld [vmem:[%s234 + $0x10] sm:$0xff]
        %v290 = vld [vmem:[%s234 + $0x18] sm:$0xff]
        %v291 = vld [vmem:[%s243] sm:$0xff]
        %v292 = vld [vmem:[%s243 + $0x8] sm:$0xff]
        %v293 = vld [vmem:[%s243 + $0x10] sm:$0xff]
        %v294 = vld [vmem:[%s243 + $0x18] sm:$0xff]
        %v295 = vld [vmem:[%s243 + $0x20] sm:$0xff]
        %v296 = vld [vmem:[%s243 + $0x28] sm:$0xff]
        %v297 = vld [vmem:[%s243 + $0x30] sm:$0xff]
        %v298 = vld [vmem:[%s243 + $0x38] sm:$0xff]
        %v299 = vld [vmem:[%s243 + $0x40] sm:$0xff]
        %v300 = vld [vmem:[%s243 + $0x48] sm:$0xff]
        %v301 = vld [vmem:[%s243 + $0x50] sm:$0xff]
        %v302 = vld [vmem:[%s243 + $0x58] sm:$0xff]
        %v303 = vld [vmem:[%s243 + $0x60] sm:$0xff]
        %v304 = vld [vmem:[%s243 + $0x68] sm:$0xff]
        %v305 = vld [vmem:[%s243 + $0x70] sm:$0xff]
        %v306 = vld [vmem:[%s243 + $0x78] sm:$0xff]
        %v307 = vld [vmem:[%s243 + $0x80] sm:$0xff]
        %v308 = vld [vmem:[%s243 + $0x88] sm:$0xff]
        %v309 = vld [vmem:[%s243 + $0x90] sm:$0xff]
        %v310 = vld [vmem:[%s243 + $0x98] sm:$0xff]
        %v311 = vld [vmem:[%s243 + $0xa0] sm:$0xff]
        %v312 = vld [vmem:[%s243 + $0xa8] sm:$0xff]
        %v313 = vld [vmem:[%s243 + $0xb0] sm:$0xff]
        %v314 = vld [vmem:[%s243 + $0xb8] sm:$0xff]
        %v315 = vld [vmem:[%s243 + $0xc0] sm:$0xff]
        %v316 = vld [vmem:[%s243 + $0xc8] sm:$0xff]
        %v317 = vld [vmem:[%s243 + $0xd0] sm:$0xff]
        %v318 = vld [vmem:[%s243 + $0xd8] sm:$0xff]
        %v319 = vld [vmem:[%s243 + $0xe0] sm:$0xff]
        %v320 = vld [vmem:[%s243 + $0xe8] sm:$0xff]
        %v321 = vld [vmem:[%s243 + $0xf0] sm:$0xff]
        %v322 = vld [vmem:[%s243 + $0xf8] sm:$0xff]
        %v323 = vld [vmem:[%s243 + $0x100] sm:$0xff]
        %v324 = vld [vmem:[%s243 + $0x108] sm:$0xff]
        %v325 = vld [vmem:[%s243 + $0x110] sm:$0xff]
        %v326 = vld [vmem:[%s243 + $0x118] sm:$0xff]
        %v327 = vld [vmem:[%s243 + $0x120] sm:$0xff]
        %v328 = vld [vmem:[%s243 + $0x128] sm:$0xff]
        %v329 = vld [vmem:[%s243 + $0x130] sm:$0xff]
        %v330 = vld [vmem:[%s243 + $0x138] sm:$0xff]
        %v331 = vld [vmem:[%s243 + $0x140] sm:$0xff]
        %v332 = vld [vmem:[%s243 + $0x148] sm:$0xff]
        %v333 = vld [vmem:[%s243 + $0x150] sm:$0xff]
        %v334 = vld [vmem:[%s243 + $0x158] sm:$0xff]
        %v335 = vld [vmem:[%s243 + $0x160] sm:$0xff]
        %v336 = vld [vmem:[%s243 + $0x168] sm:$0xff]
        %v337 = vld [vmem:[%s243 + $0x170] sm:$0xff]
        %v338 = vld [vmem:[%s243 + $0x178] sm:$0xff]
        %v339 = vld [vmem:[%s243 + $0x180] sm:$0xff]
        %v340 = vld [vmem:[%s243 + $0x188] sm:$0xff]
        %v341 = vld [vmem:[%s243 + $0x190] sm:$0xff]
        %v342 = vld [vmem:[%s243 + $0x198] sm:$0xff]
        %v343 = vld [vmem:[%s243 + $0x1a0] sm:$0xff]
        %v344 = vld [vmem:[%s243 + $0x1a8] sm:$0xff]
        %v345 = vld [vmem:[%s243 + $0x1b0] sm:$0xff]
        %v346 = vld [vmem:[%s243 + $0x1b8] sm:$0xff]
        %v347 = vld [vmem:[%s243 + $0x1c0] sm:$0xff]
        %v348 = vld [vmem:[%s243 + $0x1c8] sm:$0xff]
        %v349 = vld [vmem:[%s243 + $0x1d0] sm:$0xff]
        %v350 = vld [vmem:[%s243 + $0x1d8] sm:$0xff]
        %v351 = vld [vmem:[%s243 + $0x1e0] sm:$0xff]
        %v352 = vld [vmem:[%s243 + $0x1e8] sm:$0xff]
        %v353 = vld [vmem:[%s243 + $0x1f0] sm:$0xff]
        %v354 = vld [vmem:[%s243 + $0x1f8] sm:$0xff]
        %v355 = vld [vmem:[%s243 + $0x200] sm:$0xff]
        %v356 = vld [vmem:[%s243 + $0x208] sm:$0xff]
        %v357 = vld [vmem:[%s243 + $0x210] sm:$0xff]
        %v358 = vld [vmem:[%s243 + $0x218] sm:$0xff]
        %v359 = vld [vmem:[%s243 + $0x220] sm:$0xff]
        %v360 = vld [vmem:[%s243 + $0x228] sm:$0xff]
        %v361 = vld [vmem:[%s243 + $0x230] sm:$0xff]
        %v362 = vld [vmem:[%s243 + $0x238] sm:$0xff]
        %v363 = vld [vmem:[%s243 + $0x240] sm:$0xff]
        %v364 = vld [vmem:[%s243 + $0x248] sm:$0xff]
        %v365 = vld [vmem:[%s243 + $0x250] sm:$0xff]
        %v366 = vld [vmem:[%s243 + $0x258] sm:$0xff]
        %v367 = vld [vmem:[%s243 + $0x260] sm:$0xff]
        %v368 = vld [vmem:[%s243 + $0x268] sm:$0xff]
        %v369 = vld [vmem:[%s243 + $0x270] sm:$0xff]
        %v370 = vld [vmem:[%s243 + $0x278] sm:$0xff]
        %v371 = vld [vmem:[%s243 + $0x280] sm:$0xff]
        %v372 = vld [vmem:[%s243 + $0x288] sm:$0xff]
        %v373 = vld [vmem:[%s243 + $0x290] sm:$0xff]
        %v374 = vld [vmem:[%s243 + $0x298] sm:$0xff]
        %v375 = vld [vmem:[%s243 + $0x2a0] sm:$0xff]
        %v376 = vld [vmem:[%s243 + $0x2a8] sm:$0xff]
        %v377 = vld [vmem:[%s243 + $0x2b0] sm:$0xff]
        %v378 = vld [vmem:[%s243 + $0x2b8] sm:$0xff]
        %v379 = vld [vmem:[%s243 + $0x2c0] sm:$0xff]
        %v380 = vld [vmem:[%s243 + $0x2c8] sm:$0xff]
        %v381 = vld [vmem:[%s243 + $0x2d0] sm:$0xff]
        %v382 = vld [vmem:[%s243 + $0x2d8] sm:$0xff]
        %v383 = vld [vmem:[%s243 + $0x2e0] sm:$0xff]
        %v384 = vld [vmem:[%s243 + $0x2e8] sm:$0xff]
        %v385 = vld [vmem:[%s243 + $0x2f0] sm:$0xff]
        %v386 = vld [vmem:[%s243 + $0x2f8] sm:$0xff]
        %v387 = vld [vmem:[%s243 + $0x300] sm:$0xff]
        %v388 = vld [vmem:[%s243 + $0x308] sm:$0xff]
        %v389 = vld [vmem:[%s243 + $0x310] sm:$0xff]
        %v390 = vld [vmem:[%s243 + $0x318] sm:$0xff]
        %v391 = vld [vmem:[%s243 + $0x320] sm:$0xff]
        %v392 = vld [vmem:[%s243 + $0x328] sm:$0xff]
        %v393 = vld [vmem:[%s243 + $0x330] sm:$0xff]
        %v394 = vld [vmem:[%s243 + $0x338] sm:$0xff]
        %v395 = vld [vmem:[%s243 + $0x340] sm:$0xff]
        %v396 = vld [vmem:[%s243 + $0x348] sm:$0xff]
        %v397 = vld [vmem:[%s243 + $0x350] sm:$0xff]
        %v398 = vld [vmem:[%s243 + $0x358] sm:$0xff]
        %v399 = vld [vmem:[%s243 + $0x360] sm:$0xff]
        %v400 = vld [vmem:[%s243 + $0x368] sm:$0xff]
        %v401 = vld [vmem:[%s243 + $0x370] sm:$0xff]
        %v402 = vld [vmem:[%s243 + $0x378] sm:$0xff]
        %v403 = vld [vmem:[%s243 + $0x380] sm:$0xff]
        %v404 = vld [vmem:[%s243 + $0x388] sm:$0xff]
        %v405 = vld [vmem:[%s243 + $0x390] sm:$0xff]
        %v406 = vld [vmem:[%s243 + $0x398] sm:$0xff]
        %v407 = vld [vmem:[%s243 + $0x3a0] sm:$0xff]
        %v408 = vld [vmem:[%s243 + $0x3a8] sm:$0xff]
        %v409 = vld [vmem:[%s243 + $0x3b0] sm:$0xff]
        %v410 = vld [vmem:[%s243 + $0x3b8] sm:$0xff]
        %v411 = vld [vmem:[%s243 + $0x3c0] sm:$0xff]
        %v412 = vld [vmem:[%s243 + $0x3c8] sm:$0xff]
        %v413 = vld [vmem:[%s243 + $0x3d0] sm:$0xff]
        %v414 = vld [vmem:[%s243 + $0x3d8] sm:$0xff]
        %v415 = vld [vmem:[%s243 + $0x3e0] sm:$0xff]
        %v416 = vld [vmem:[%s243 + $0x3e8] sm:$0xff]
        %v417 = vld [vmem:[%s243 + $0x3f0] sm:$0xff]
        %v418 = vld [vmem:[%s243 + $0x3f8] sm:$0xff]
        %v419 = vld [vmem:[%s243 + $0x400] sm:$0xff]
        %v420 = vld [vmem:[%s243 + $0x408] sm:$0xff]
        %v421 = vld [vmem:[%s243 + $0x410] sm:$0xff]
        %v422 = vld [vmem:[%s243 + $0x418] sm:$0xff]
        %v423 = vld [vmem:[%s243 + $0x420] sm:$0xff]
        %v424 = vld [vmem:[%s243 + $0x428] sm:$0xff]
        %v425 = vld [vmem:[%s243 + $0x430] sm:$0xff]
        %v426 = vld [vmem:[%s243 + $0x438] sm:$0xff]
        %v427 = vld [vmem:[%s243 + $0x440] sm:$0xff]
        %v428 = vld [vmem:[%s243 + $0x448] sm:$0xff]
        %v429 = vld [vmem:[%s243 + $0x450] sm:$0xff]
        %v430 = vld [vmem:[%s243 + $0x458] sm:$0xff]
        %v431 = vld [vmem:[%s243 + $0x460] sm:$0xff]
        %v432 = vld [vmem:[%s243 + $0x468] sm:$0xff]
        %v433 = vld [vmem:[%s243 + $0x470] sm:$0xff]
        %v434 = vld [vmem:[%s243 + $0x478] sm:$0xff]
        %v435 = vld [vmem:[%s243 + $0x480] sm:$0xff]
        %v436 = vld [vmem:[%s243 + $0x488] sm:$0xff]
        %v437 = vld [vmem:[%s243 + $0x490] sm:$0xff]
        %v438 = vld [vmem:[%s243 + $0x498] sm:$0xff]
        %v439 = vld [vmem:[%s243 + $0x4a0] sm:$0xff]
        %v440 = vld [vmem:[%s243 + $0x4a8] sm:$0xff]
        %v441 = vld [vmem:[%s243 + $0x4b0] sm:$0xff]
        %v442 = vld [vmem:[%s243 + $0x4b8] sm:$0xff]
        %v443 = vld [vmem:[%s243 + $0x4c0] sm:$0xff]
        %v444 = vld [vmem:[%s243 + $0x4c8] sm:$0xff]
        %v445 = vld [vmem:[%s243 + $0x4d0] sm:$0xff]
        %v446 = vld [vmem:[%s243 + $0x4d8] sm:$0xff]
        %v447 = vld [vmem:[%s243 + $0x4e0] sm:$0xff]
        %v448 = vld [vmem:[%s243 + $0x4e8] sm:$0xff]
        %v449 = vld [vmem:[%s243 + $0x4f0] sm:$0xff]
        %v450 = vld [vmem:[%s243 + $0x4f8] sm:$0xff]
        %v451 = vld [vmem:[%s243 + $0x500] sm:$0xff]
        %v452 = vld [vmem:[%s243 + $0x508] sm:$0xff]
        %v453 = vld [vmem:[%s243 + $0x510] sm:$0xff]
        %v454 = vld [vmem:[%s243 + $0x518] sm:$0xff]
        %v455 = vld [vmem:[%s243 + $0x520] sm:$0xff]
        %v456 = vld [vmem:[%s243 + $0x528] sm:$0xff]
        %v457 = vld [vmem:[%s243 + $0x530] sm:$0xff]
        %v458 = vld [vmem:[%s243 + $0x538] sm:$0xff]
        %v459 = vld [vmem:[%s243 + $0x540] sm:$0xff]
        %v460 = vld [vmem:[%s243 + $0x548] sm:$0xff]
        %v461 = vld [vmem:[%s243 + $0x550] sm:$0xff]
        %v462 = vld [vmem:[%s243 + $0x558] sm:$0xff]
        %v463 = vld [vmem:[%s243 + $0x560] sm:$0xff]
        %v464 = vld [vmem:[%s243 + $0x568] sm:$0xff]
        %v465 = vld [vmem:[%s243 + $0x570] sm:$0xff]
        %v466 = vld [vmem:[%s243 + $0x578] sm:$0xff]
        %v467 = vld [vmem:[%s243 + $0x580] sm:$0xff]
        %v468 = vld [vmem:[%s243 + $0x588] sm:$0xff]
        %v469 = vld [vmem:[%s243 + $0x590] sm:$0xff]
        %v470 = vld [vmem:[%s243 + $0x598] sm:$0xff]
        %v471 = vld [vmem:[%s243 + $0x5a0] sm:$0xff]
        %v472 = vld [vmem:[%s243 + $0x5a8] sm:$0xff]
        %v473 = vld [vmem:[%s243 + $0x5b0] sm:$0xff]
        %v474 = vld [vmem:[%s243 + $0x5b8] sm:$0xff]
        %v475 = vld [vmem:[%s243 + $0x5c0] sm:$0xff]
        %v476 = vld [vmem:[%s243 + $0x5c8] sm:$0xff]
        %v477 = vld [vmem:[%s243 + $0x5d0] sm:$0xff]
        %v478 = vld [vmem:[%s243 + $0x5d8] sm:$0xff]
        %v479 = vld [vmem:[%s243 + $0x5e0] sm:$0xff]
        %v480 = vld [vmem:[%s243 + $0x5e8] sm:$0xff]
        %v481 = vld [vmem:[%s243 + $0x5f0] sm:$0xff]
        %v482 = vld [vmem:[%s243 + $0x5f8] sm:$0xff]
        %v483 = vld [vmem:[%s243 + $0x600] sm:$0xff]
        %v484 = vld [vmem:[%s243 + $0x608] sm:$0xff]
        %v485 = vld [vmem:[%s243 + $0x610] sm:$0xff]
        %v486 = vld [vmem:[%s243 + $0x618] sm:$0xff]
        %v487 = vld [vmem:[%s243 + $0x620] sm:$0xff]
        %v488 = vld [vmem:[%s243 + $0x628] sm:$0xff]
        %v489 = vld [vmem:[%s243 + $0x630] sm:$0xff]
        %v490 = vld [vmem:[%s243 + $0x638] sm:$0xff]
        %v491 = vld [vmem:[%s243 + $0x640] sm:$0xff]
        %v492 = vld [vmem:[%s243 + $0x648] sm:$0xff]
        %v493 = vld [vmem:[%s243 + $0x650] sm:$0xff]
        %v494 = vld [vmem:[%s243 + $0x658] sm:$0xff]
        %v495 = vld [vmem:[%s243 + $0x660] sm:$0xff]
        %v496 = vld [vmem:[%s243 + $0x668] sm:$0xff]
        %v497 = vld [vmem:[%s243 + $0x670] sm:$0xff]
        %v498 = vld [vmem:[%s243 + $0x678] sm:$0xff]
        %v499 = vld [vmem:[%s243 + $0x680] sm:$0xff]
        %v500 = vld [vmem:[%s243 + $0x688] sm:$0xff]
        %v501 = vld [vmem:[%s243 + $0x690] sm:$0xff]
        %v502 = vld [vmem:[%s243 + $0x698] sm:$0xff]
        %v503 = vld [vmem:[%s243 + $0x6a0] sm:$0xff]
        %v504 = vld [vmem:[%s243 + $0x6a8] sm:$0xff]
        %v505 = vld [vmem:[%s243 + $0x6b0] sm:$0xff]
        %v506 = vld [vmem:[%s243 + $0x6b8] sm:$0xff]
        %v507 = vld [vmem:[%s243 + $0x6c0] sm:$0xff]
        %v508 = vld [vmem:[%s243 + $0x6c8] sm:$0xff]
        %v509 = vld [vmem:[%s243 + $0x6d0] sm:$0xff]
        %v510 = vld [vmem:[%s243 + $0x6d8] sm:$0xff]
        %v511 = vld [vmem:[%s243 + $0x6e0] sm:$0xff]
        %v512 = vld [vmem:[%s243 + $0x6e8] sm:$0xff]
        %v513 = vld [vmem:[%s243 + $0x6f0] sm:$0xff]
        %v514 = vld [vmem:[%s243 + $0x6f8] sm:$0xff]
        %v515 = vld [vmem:[%s243 + $0x700] sm:$0xff]
        %v516 = vld [vmem:[%s243 + $0x708] sm:$0xff]
        %v517 = vld [vmem:[%s243 + $0x710] sm:$0xff]
        %v518 = vld [vmem:[%s243 + $0x718] sm:$0xff]
        %v519 = vld [vmem:[%s243 + $0x720] sm:$0xff]
        %v520 = vld [vmem:[%s243 + $0x728] sm:$0xff]
        %v521 = vld [vmem:[%s243 + $0x730] sm:$0xff]
        %v522 = vld [vmem:[%s243 + $0x738] sm:$0xff]
        %v523 = vld [vmem:[%s243 + $0x740] sm:$0xff]
        %v524 = vld [vmem:[%s243 + $0x748] sm:$0xff]
        %v525 = vld [vmem:[%s243 + $0x750] sm:$0xff]
        %v526 = vld [vmem:[%s243 + $0x758] sm:$0xff]
        %v527 = vld [vmem:[%s243 + $0x760] sm:$0xff]
        %v528 = vld [vmem:[%s243 + $0x768] sm:$0xff]
        %v529 = vld [vmem:[%s243 + $0x770] sm:$0xff]
        %v530 = vld [vmem:[%s243 + $0x778] sm:$0xff]
        %v531 = vld [vmem:[%s243 + $0x780] sm:$0xff]
        %v532 = vld [vmem:[%s243 + $0x788] sm:$0xff]
        %v533 = vld [vmem:[%s243 + $0x790] sm:$0xff]
        %v534 = vld [vmem:[%s243 + $0x798] sm:$0xff]
        %v535 = vld [vmem:[%s243 + $0x7a0] sm:$0xff]
        %v536 = vld [vmem:[%s243 + $0x7a8] sm:$0xff]
        %v537 = vld [vmem:[%s243 + $0x7b0] sm:$0xff]
        %v538 = vld [vmem:[%s243 + $0x7b8] sm:$0xff]
        %v539 = vld [vmem:[%s243 + $0x7c0] sm:$0xff]
        %v540 = vld [vmem:[%s243 + $0x7c8] sm:$0xff]
        %v541 = vld [vmem:[%s243 + $0x7d0] sm:$0xff]
        %v542 = vld [vmem:[%s243 + $0x7d8] sm:$0xff]
        %v543 = vld [vmem:[%s243 + $0x7e0] sm:$0xff]
        %v544 = vld [vmem:[%s243 + $0x7e8] sm:$0xff]
        %v545 = vld [vmem:[%s243 + $0x7f0] sm:$0xff]
        %v546 = vld [vmem:[%s243 + $0x7f8] sm:$0xff]
        %547 = vmatprep.subr.mxu0 %v292
        %548 = vmatpush1.msra.mxu0 %v291
        %549 = vmatprep.subr.mxu0 %v296
        %550 = vmatpush1.msra.mxu0 %v295
        %551 = vmatprep.subr.mxu0 %v300
        %552 = vmatpush1.msra.mxu0 %v299
        %553 = vmatprep.subr.mxu0 %v304
        %554 = vmatpush1.msra.mxu0 %v303
        %555 = vmatprep.subr.mxu0 %v308
        %556 = vmatpush1.msra.mxu0 %v307
        %557 = vmatprep.subr.mxu0 %v312
        %558 = vmatpush1.msra.mxu0 %v311
        %559 = vmatprep.subr.mxu0 %v316
        %560 = vmatpush1.msra.mxu0 %v315
        %561 = vmatprep.subr.mxu0 %v320
        %562 = vmatpush1.msra.mxu0 %v319
        %563 = vmatprep.subr.mxu0 %v324
        %564 = vmatpush1.msra.mxu0 %v323
        %565 = vmatprep.subr.mxu0 %v328
        %566 = vmatpush1.msra.mxu0 %v327
        %567 = vmatprep.subr.mxu0 %v332
        %568 = vmatpush1.msra.mxu0 %v331
        %569 = vmatprep.subr.mxu0 %v336
        %570 = vmatpush1.msra.mxu0 %v335
        %571 = vmatprep.subr.mxu0 %v340
        %572 = vmatpush1.msra.mxu0 %v339
        %573 = vmatprep.subr.mxu0 %v344
        %574 = vmatpush1.msra.mxu0 %v343
        %575 = vmatprep.subr.mxu0 %v348
        %576 = vmatpush1.msra.mxu0 %v347
        %577 = vmatprep.subr.mxu0 %v352
        %578 = vmatpush1.msra.mxu0 %v351
        %579 = vmatprep.subr.mxu0 %v356
        %580 = vmatpush1.msra.mxu0 %v355
        %581 = vmatprep.subr.mxu0 %v360
        %582 = vmatpush1.msra.mxu0 %v359
        %583 = vmatprep.subr.mxu0 %v364
        %584 = vmatpush1.msra.mxu0 %v363
        %585 = vmatprep.subr.mxu0 %v368
        %586 = vmatpush1.msra.mxu0 %v367
        %587 = vmatprep.subr.mxu0 %v372
        %588 = vmatpush1.msra.mxu0 %v371
        %589 = vmatprep.subr.mxu0 %v376
        %590 = vmatpush1.msra.mxu0 %v375
        %591 = vmatprep.subr.mxu0 %v380
        %592 = vmatpush1.msra.mxu0 %v379
        %593 = vmatprep.subr.mxu0 %v384
        %594 = vmatpush1.msra.mxu0 %v383
        %595 = vmatprep.subr.mxu0 %v388
        %596 = vmatpush1.msra.mxu0 %v387
        %597 = vmatprep.subr.mxu0 %v392
        %598 = vmatpush1.msra.mxu0 %v391
        %599 = vmatprep.subr.mxu0 %v396
        %600 = vmatpush1.msra.mxu0 %v395
        %601 = vmatprep.subr.mxu0 %v400
        %602 = vmatpush1.msra.mxu0 %v399
        %603 = vmatprep.subr.mxu0 %v404
        %604 = vmatpush1.msra.mxu0 %v403
        %605 = vmatprep.subr.mxu0 %v408
        %606 = vmatpush1.msra.mxu0 %v407
        %607 = vmatprep.subr.mxu0 %v412
        %608 = vmatpush1.msra.mxu0 %v411
        %609 = vmatprep.subr.mxu0 %v416
        %610 = vmatpush1.msra.mxu0 %v415
        %611 = vmatprep.mubr.f32.mxu0 %v288
        %612 = vmatmul.mubr.f32.gmra.mrb[0].mxu0 %v287
        %v613 = vpop.f32.mrb[0].mxu0
        %v614 = vadd.f32 0.0, %v613
        %v615 = vpop.f32.mrb[0].mxu0
        %v616 = vadd.f32 0.0, %v615
        %617 = vdwg.mxu0
        %618 = vmatprep.subr.mxu0 %v420
        %619 = vmatpush1.msra.mxu0 %v419
        %620 = vmatprep.subr.mxu0 %v424
        %621 = vmatpush1.msra.mxu0 %v423
        %622 = vmatprep.subr.mxu0 %v428
        %623 = vmatpush1.msra.mxu0 %v427
        %624 = vmatprep.subr.mxu0 %v432
        %625 = vmatpush1.msra.mxu0 %v431
        %626 = vmatprep.subr.mxu0 %v436
        %627 = vmatpush1.msra.mxu0 %v435
        %628 = vmatprep.subr.mxu0 %v440
        %629 = vmatpush1.msra.mxu0 %v439
        %630 = vmatprep.subr.mxu0 %v444
        %631 = vmatpush1.msra.mxu0 %v443
        %632 = vmatprep.subr.mxu0 %v448
        %633 = vmatpush1.msra.mxu0 %v447
        %634 = vmatprep.subr.mxu0 %v452
        %635 = vmatpush1.msra.mxu0 %v451
        %636 = vmatprep.subr.mxu0 %v456
        %637 = vmatpush1.msra.mxu0 %v455
        %638 = vmatprep.subr.mxu0 %v460
        %639 = vmatpush1.msra.mxu0 %v459
        %640 = vmatprep.subr.mxu0 %v464
        %641 = vmatpush1.msra.mxu0 %v463
        %642 = vmatprep.subr.mxu0 %v468
        %643 = vmatpush1.msra.mxu0 %v467
        %644 = vmatprep.subr.mxu0 %v472
        %645 = vmatpush1.msra.mxu0 %v471
        %646 = vmatprep.subr.mxu0 %v476
        %647 = vmatpush1.msra.mxu0 %v475
        %648 = vmatprep.subr.mxu0 %v480
        %649 = vmatpush1.msra.mxu0 %v479
        %650 = vmatprep.subr.mxu0 %v484
        %651 = vmatpush1.msra.mxu0 %v483
        %652 = vmatprep.subr.mxu0 %v488
        %653 = vmatpush1.msra.mxu0 %v487
        %654 = vmatprep.subr.mxu0 %v492
        %655 = vmatpush1.msra.mxu0 %v491
        %656 = vmatprep.subr.mxu0 %v496
        %657 = vmatpush1.msra.mxu0 %v495
        %658 = vmatprep.subr.mxu0 %v500
        %659 = vmatpush1.msra.mxu0 %v499
        %660 = vmatprep.subr.mxu0 %v504
        %661 = vmatpush1.msra.mxu0 %v503
        %662 = vmatprep.subr.mxu0 %v508
        %663 = vmatpush1.msra.mxu0 %v507
        %664 = vmatprep.subr.mxu0 %v512
        %665 = vmatpush1.msra.mxu0 %v511
        %666 = vmatprep.subr.mxu0 %v516
        %667 = vmatpush1.msra.mxu0 %v515
        %668 = vmatprep.subr.mxu0 %v520
        %669 = vmatpush1.msra.mxu0 %v519
        %670 = vmatprep.subr.mxu0 %v524
        %671 = vmatpush1.msra.mxu0 %v523
        %672 = vmatprep.subr.mxu0 %v528
        %673 = vmatpush1.msra.mxu0 %v527
        %674 = vmatprep.subr.mxu0 %v532
        %675 = vmatpush1.msra.mxu0 %v531
        %676 = vmatprep.subr.mxu0 %v536
        %677 = vmatpush1.msra.mxu0 %v535
        %678 = vmatprep.subr.mxu0 %v540
        %679 = vmatpush1.msra.mxu0 %v539
        %680 = vmatprep.subr.mxu0 %v544
        %681 = vmatpush1.msra.mxu0 %v543
        %682 = vmatprep.mubr.f32.mxu0 %v290
        %683 = vmatmul.mubr.f32.gmra.mrb[0].mxu0 %v289
        %v684 = vpop.f32.mrb[0].mxu0
        %v685 = vadd.f32 %v614, %v684
        %v686 = vpop.f32.mrb[0].mxu0
        %v687 = vadd.f32 %v616, %v686
        %688 = vdwg.mxu0
        %689 = vmatprep.subr.mxu0 %v294
        %690 = vmatpush1.msra.mxu0 %v293
        %691 = vmatprep.subr.mxu0 %v298
        %692 = vmatpush1.msra.mxu0 %v297
        %693 = vmatprep.subr.mxu0 %v302
        %694 = vmatpush1.msra.mxu0 %v301
        %695 = vmatprep.subr.mxu0 %v306
        %696 = vmatpush1.msra.mxu0 %v305
        %697 = vmatprep.subr.mxu0 %v310
        %698 = vmatpush1.msra.mxu0 %v309
        %699 = vmatprep.subr.mxu0 %v314
        %700 = vmatpush1.msra.mxu0 %v313
        %701 = vmatprep.subr.mxu0 %v318
        %702 = vmatpush1.msra.mxu0 %v317
        %703 = vmatprep.subr.mxu0 %v322
        %704 = vmatpush1.msra.mxu0 %v321
        %705 = vmatprep.subr.mxu0 %v326
        %706 = vmatpush1.msra.mxu0 %v325
        %707 = vmatprep.subr.mxu0 %v330
        %708 = vmatpush1.msra.mxu0 %v329
        %709 = vmatprep.subr.mxu0 %v334
        %710 = vmatpush1.msra.mxu0 %v333
        %711 = vmatprep.subr.mxu0 %v338
        %712 = vmatpush1.msra.mxu0 %v337
        %713 = vmatprep.subr.mxu0 %v342
        %714 = vmatpush1.msra.mxu0 %v341
        %715 = vmatprep.subr.mxu0 %v346
        %716 = vmatpush1.msra.mxu0 %v345
        %717 = vmatprep.subr.mxu0 %v350
        %718 = vmatpush1.msra.mxu0 %v349
        %719 = vmatprep.subr.mxu0 %v354
        %720 = vmatpush1.msra.mxu0 %v353
        %721 = vmatprep.subr.mxu0 %v358
        %722 = vmatpush1.msra.mxu0 %v357
        %723 = vmatprep.subr.mxu0 %v362
        %724 = vmatpush1.msra.mxu0 %v361
        %725 = vmatprep.subr.mxu0 %v366
        %726 = vmatpush1.msra.mxu0 %v365
        %727 = vmatprep.subr.mxu0 %v370
        %728 = vmatpush1.msra.mxu0 %v369
        %729 = vmatprep.subr.mxu0 %v374
        %730 = vmatpush1.msra.mxu0 %v373
        %731 = vmatprep.subr.mxu0 %v378
        %732 = vmatpush1.msra.mxu0 %v377
        %733 = vmatprep.subr.mxu0 %v382
        %734 = vmatpush1.msra.mxu0 %v381
        %735 = vmatprep.subr.mxu0 %v386
        %736 = vmatpush1.msra.mxu0 %v385
        %737 = vmatprep.subr.mxu0 %v390
        %738 = vmatpush1.msra.mxu0 %v389
        %739 = vmatprep.subr.mxu0 %v394
        %740 = vmatpush1.msra.mxu0 %v393
        %741 = vmatprep.subr.mxu0 %v398
        %742 = vmatpush1.msra.mxu0 %v397
        %743 = vmatprep.subr.mxu0 %v402
        %744 = vmatpush1.msra.mxu0 %v401
        %745 = vmatprep.subr.mxu0 %v406
        %746 = vmatpush1.msra.mxu0 %v405
        %747 = vmatprep.subr.mxu0 %v410
        %748 = vmatpush1.msra.mxu0 %v409
        %749 = vmatprep.subr.mxu0 %v414
        %750 = vmatpush1.msra.mxu0 %v413
        %751 = vmatprep.subr.mxu0 %v418
        %752 = vmatpush1.msra.mxu0 %v417
        %753 = vmatprep.mubr.f32.mxu0 %v288
        %754 = vmatmul.mubr.f32.gmra.mrb[0].mxu0 %v287
        %v755 = vpop.f32.mrb[0].mxu0
        %v756 = vadd.f32 0.0, %v755
        %v757 = vpop.f32.mrb[0].mxu0
        %v758 = vadd.f32 0.0, %v757
        %759 = vdwg.mxu0
        %760 = vmatprep.subr.mxu0 %v422
        %761 = vmatpush1.msra.mxu0 %v421
        %762 = vmatprep.subr.mxu0 %v426
        %763 = vmatpush1.msra.mxu0 %v425
        %764 = vmatprep.subr.mxu0 %v430
        %765 = vmatpush1.msra.mxu0 %v429
        %766 = vmatprep.subr.mxu0 %v434
        %767 = vmatpush1.msra.mxu0 %v433
        %768 = vmatprep.subr.mxu0 %v438
        %769 = vmatpush1.msra.mxu0 %v437
        %770 = vmatprep.subr.mxu0 %v442
        %771 = vmatpush1.msra.mxu0 %v441
        %772 = vmatprep.subr.mxu0 %v446
        %773 = vmatpush1.msra.mxu0 %v445
        %774 = vmatprep.subr.mxu0 %v450
        %775 = vmatpush1.msra.mxu0 %v449
        %776 = vmatprep.subr.mxu0 %v454
        %777 = vmatpush1.msra.mxu0 %v453
        %778 = vmatprep.subr.mxu0 %v458
        %779 = vmatpush1.msra.mxu0 %v457
        %780 = vmatprep.subr.mxu0 %v462
        %781 = vmatpush1.msra.mxu0 %v461
        %782 = vmatprep.subr.mxu0 %v466
        %783 = vmatpush1.msra.mxu0 %v465
        %784 = vmatprep.subr.mxu0 %v470
        %785 = vmatpush1.msra.mxu0 %v469
        %786 = vmatprep.subr.mxu0 %v474
        %787 = vmatpush1.msra.mxu0 %v473
        %788 = vmatprep.subr.mxu0 %v478
        %789 = vmatpush1.msra.mxu0 %v477
        %790 = vmatprep.subr.mxu0 %v482
        %791 = vmatpush1.msra.mxu0 %v481
        %792 = vmatprep.subr.mxu0 %v486
        %793 = vmatpush1.msra.mxu0 %v485
        %794 = vmatprep.subr.mxu0 %v490
        %795 = vmatpush1.msra.mxu0 %v489
        %796 = vmatprep.subr.mxu0 %v494
        %797 = vmatpush1.msra.mxu0 %v493
        %798 = vmatprep.subr.mxu0 %v498
        %799 = vmatpush1.msra.mxu0 %v497
        %800 = vmatprep.subr.mxu0 %v502
        %801 = vmatpush1.msra.mxu0 %v501
        %802 = vmatprep.subr.mxu0 %v506
        %803 = vmatpush1.msra.mxu0 %v505
        %804 = vmatprep.subr.mxu0 %v510
        %805 = vmatpush1.msra.mxu0 %v509
        %806 = vmatprep.subr.mxu0 %v514
        %807 = vmatpush1.msra.mxu0 %v513
        %808 = vmatprep.subr.mxu0 %v518
        %809 = vmatpush1.msra.mxu0 %v517
        %810 = vmatprep.subr.mxu0 %v522
        %811 = vmatpush1.msra.mxu0 %v521
        %812 = vmatprep.subr.mxu0 %v526
        %813 = vmatpush1.msra.mxu0 %v525
        %814 = vmatprep.subr.mxu0 %v530
        %815 = vmatpush1.msra.mxu0 %v529
        %816 = vmatprep.subr.mxu0 %v534
        %817 = vmatpush1.msra.mxu0 %v533
        %818 = vmatprep.subr.mxu0 %v538
        %819 = vmatpush1.msra.mxu0 %v537
        %820 = vmatprep.subr.mxu0 %v542
        %821 = vmatpush1.msra.mxu0 %v541
        %822 = vmatprep.subr.mxu0 %v546
        %823 = vmatpush1.msra.mxu0 %v545
        %824 = vmatprep.mubr.f32.mxu0 %v290
        %825 = vmatmul.mubr.f32.gmra.mrb[0].mxu0 %v289
        %v826 = vpop.f32.mrb[0].mxu0
        %v827 = vadd.f32 %v756, %v826
        %v828 = vpop.f32.mrb[0].mxu0
        %v829 = vadd.f32 %v758, %v828
        %830 = vdwg.mxu0
        %v831 = vadd.f32 %v283, %v685
        %v832 = vadd.f32 %v284, %v687
        %v833 = vadd.f32 %v285, %v827
        %v834 = vadd.f32 %v286, %v829
        %835 = vst [vmem:[#allocation2] sm:$0xff] %v831
        %836 = vst [vmem:[#allocation2 + $0x8] sm:$0xff] %v832
        %837 = vst [vmem:[#allocation2 + $0x10] sm:$0xff] %v833
        %838 = vst [vmem:[#allocation2 + $0x18] sm:$0xff] %v834
        %p839 = scmp.eq.s32.totalorder %s28, 1
        // Predicated region
        $region49: #{_lambda_.4} parent=31 // pred_check
          %p840 = pneg %p839
        $region50: #{_lambda_.4} parent=31 // pred_check_branch
          %842 = sbr.rel (%p840) target = $region52
        $region51: #{_lambda_.4} parent=31 // pred_region
          %v843 = vld [vmem:[#allocation2] sm:$0xff]
          %v844 = vld [vmem:[#allocation2 + $0x8] sm:$0xff]
          %v845 = vld [vmem:[#allocation2 + $0x10] sm:$0xff]
          %v846 = vld [vmem:[#allocation2 + $0x18] sm:$0xff]
          %v847 = vld [vmem:[#allocation8] sm:$0xf]
          %v849 = vlaneseq
          %v850 = vshrl.u32 %v849, 7
          %v851 = vsub.s32 0, %v850
          %v852 = vrot.slane %v847, %v851
          %v853 = vlaneseq
          %v854 = vshrl.u32 %v853, 7
          %v855 = vsub.s32 1, %v854
          %v856 = vrot.slane %v847, %v855
          %v857 = vlaneseq
          %v858 = vshrl.u32 %v857, 7
          %v859 = vsub.s32 2, %v858
          %v860 = vrot.slane %v847, %v859
          %v861 = vlaneseq
          %v862 = vshrl.u32 %v861, 7
          %v863 = vsub.s32 3, %v862
          %v864 = vrot.slane %v847, %v863
          %v869 = vadd.f32 %v843, %v852
          %v870 = vadd.f32 %v844, %v856
          %v871 = vadd.f32 %v845, %v860
          %v872 = vadd.f32 %v846, %v864
          %v873 = vmax.f32 %v869, 0.0
          %v874 = vmax.f32 %v870, 0.0
          %v875 = vmax.f32 %v871, 0.0
          %v876 = vmax.f32 %v872, 0.0
          %877 = vst [vmem:[#allocation9] sm:$0xff] %v873
          %878 = vst [vmem:[#allocation9 + $0x8] sm:$0xff] %v874
          %879 = vst [vmem:[#allocation9 + $0x10] sm:$0xff] %v875
          %880 = vst [vmem:[#allocation9 + $0x18] sm:$0xff] %v876
        $region52: #{_lambda_.4} parent=31 // pred_fallthru
          _
        // Predicated region
        $region53: #{_lambda_.4} parent=31 // pred_check
          %p881 = pneg %p142
        $region54: #{_lambda_.4} parent=31 // pred_check_branch
          %883 = sbr.rel (%p881) target = $region56
        $region55: #{_lambda_.4} parent=31 // pred_region
          %s884 = smul.u32 4, %s27
          %s886 = ssub.s32 512, 512
          %887 = vsyncadd [#allocation5], %s886
          %s888 = smul.addr %s26, 4
          %s889 = sadd.s32 %s884, %s888
          %s890 = smul.addr %s889, 128
          %s891 = scalar_lea.hbm %s3, %s890
          %s893 = sshll.u32 [#allocation9], 4
          %s894 = int_to_ptr.vmem [resolvable:$true] %s893
          %896 = dma.vmem_to_hbm [thread:$0]  %s894, 512, %s891, [#allocation5]
        $region56: #{_lambda_.4} parent=31 // pred_fallthru
          _
        // Predicated region
        $region57: #{_lambda_.4} parent=31 // pred_check
          %p897 = pneg %p142
        $region58: #{_lambda_.4} parent=31 // pred_check_branch
          %899 = sbr.rel (%p897) target = $region60
        $region59: #{_lambda_.4} parent=31 // pred_region
          %900 = dma.done [#allocation5], 512
        $region60: #{_lambda_.4} parent=31 // pred_fallthru
          _
      $region32: #{_lambda_.4} parent=5 // pred_fallthru
        _
      %p901 = scmp.le.s32.totalorder 2, %s16
      // Predicated region
      $region61: #{_lambda_.4} parent=5 // pred_check
        %p902 = pneg %p901
      $region62: #{_lambda_.4} parent=5 // pred_check_branch
        %904 = sbr.rel (%p902) target = $region64
      $region63: #{_lambda_.4} parent=5 // pred_region
        %s905 = ssub.s32 %s16, 2
      $region64: #{_lambda_.4} parent=5 // pred_fallthru
        _
    $region6: #{_lambda_.4} parent=1 // loop_footer
      %s20 = sadd.s32 1, %s16
    $region7: #{_lambda_.4} parent=1 // loop_footer_branch
      %15 = sbr.rel target = $region3
    $region8: #{_lambda_.4} parent=1 // loop_exit
      _
    %906 = vsyncpa [#allocation4], 1
    %s907 = scalar_lea.sflag [#allocation4], 1
    %908 = vsyncpa %s907, 1
    %909 = vsyncpa [#allocation7], 1
    %s910 = scalar_lea.sflag [#allocation7], 1
    %911 = vsyncpa %s910, 1
    %912 = vsyncpa [#allocation5], 1
    %s913 = scalar_lea.sflag [#allocation5], 1
    %914 = vsyncpa %s913, 1

</llo_original>
